<compile_context>
chip_gen: v7x
topology: tpu7x:2x2x1
jax: 0.10.0
libtpu: 0.0.40
codegen_flags: <defaults>
</compile_context>

<pallas_src>
import functools

import jax
import jax.numpy as jnp
from jax.experimental import pallas as pl
from jax.experimental.pallas import tpu as pltpu


# ---------------------------------------------------------------------------
# Helpers
# ---------------------------------------------------------------------------
def _full_spec(shape):
  nd = len(shape)
  # index_map receives (grid idx, *scalar-prefetch refs).
  return pl.BlockSpec(shape, lambda i, es, ed: (0,) * nd)


def _round_up(x, m):
  return ((x + m - 1) // m) * m


# ---------------------------------------------------------------------------
# Fused mega-kernel: full TGN timestep forward
# ---------------------------------------------------------------------------
def tgn_megakernel(esrc_ref, edst_ref,                       # scalar prefetch (SMEM)
                   x_ref, a_ref, hc0_ref,
                   w_ref, b_ref, gnw_ref, gnb_ref, gnm_ref,
                   wattn_ref, battn_ref,
                   hc_out_ref, score_ref,
                   zin_sc, csc_ref, psc_ref, gcs_ref, gps_ref,
                   *, num_layers, n_real, n_edges, hidden):
  f32 = jnp.float32
  bf16 = jnp.bfloat16
  H = hidden
  KX = 2 * H
  Npad = hc0_ref.shape[0]

  # Column-validity mask rows (1, Npad): padded rows are excluded from the
  # GraphNorm statistics via a mask-row matmul on the MXU (XLU stays free).
  col_ids = jax.lax.broadcasted_iota(jnp.int32, (1, Npad), 1)
  mrow = [(col_ids < n_real[0]).astype(f32), (col_ids < n_real[1]).astype(f32)]
  inv_n = [1.0 / max(n_real[0], 1), 1.0 / max(n_real[1], 1)]   # guard n==0

  h = [hc0_ref[:, 0:H], hc0_ref[:, H:2 * H]]                   # (Npad, H) f32
  c = [hc0_ref[:, 2 * H:3 * H], hc0_ref[:, 3 * H:4 * H]]

  # Stage layer-0 input features into the persistent fused-gate input scratch.
  zin_sc[0, :, 0:KX] = x_ref[0]
  zin_sc[1, :, 0:KX] = x_ref[1]

  for l in range(num_layers):                    # static unroll, num_layers small
    hb = [h[0].astype(bf16), h[1].astype(bf16)]  # bf16 MXU operands
    if l > 0:
      # Next-layer input features == previous layer's normalized h.  Only lanes
      # [0:H) need refreshing: weight rows [H:KX) are zero for l>0, so the
      # stale layer-0 feature lanes there contribute nothing.
      zin_sc[0, :, 0:H] = hb[0]
      zin_sc[1, :, 0:H] = hb[1]
    new_h, new_c = [], []
    for t in range(2):                           # 0 = customer, 1 = product
      # SAGE mean aggregation of the *other* node type's hidden states.
      agg = jnp.dot(a_ref[t], hb[1 - t], preferred_element_type=f32)   # (Npad, H)
      zin_sc[t, :, KX:KX + H] = agg.astype(bf16)
      zin_sc[t, :, KX + H:4 * H] = hb[t]
      # Fused gate matmul: [x | agg | h_dst] @ [Wx; Wl; Wr]  (128-deep bf16 MXU).
      z = jnp.dot(zin_sc[t], w_ref[l, t], preferred_element_type=f32) + b_ref[l, t]
      # Lane-dense activations: ONE sigmoid pass over all 128 lanes instead of
      # three 32-lane-sparse passes on the single EUP slot.
      # TODO(synk): fully lane-dense variant would keep gates 128-wide and use
      # pltpu.roll to align the 32-lane groups for the c/h update.
      s_all = jax.nn.sigmoid(z)
      i_g = s_all[:, 0:H]
      f_g = s_all[:, H:2 * H]
      o_g = s_all[:, 3 * H:4 * H]
      g_g = jnp.tanh(z[:, 2 * H:3 * H])
      c_new = f_g * c[t] + i_g * g_g
      h_new = o_g * jnp.tanh(c_new)
      # GraphNorm with masked statistics as mask-row matmuls on the MXU.
      mean = jnp.dot(mrow[t], h_new, preferred_element_type=f32) * inv_n[t]
      cen = h_new - mean * gnm_ref[l, t]
      var = jnp.dot(mrow[t], cen * cen, preferred_element_type=f32) * inv_n[t]
      h_norm = gnw_ref[l, t] * cen * jax.lax.rsqrt(var + 1e-5) + gnb_ref[l, t]
      new_h.append(h_norm)
      new_c.append(c_new)
    h, c = new_h, new_c

  # Seq-len-1 MultiheadAttention == fused linear (W_attn/b_attn precomputed).
  cust = h[0]
  attn = (jnp.dot(cust.astype(bf16), wattn_ref[...], preferred_element_type=f32)
          + battn_ref[...])
  cust_out = cust + attn
  prod_out = h[1]

  # Packed lane-dense output slab, written directly into lane slices.
  hc_out_ref[:, 0:H] = cust_out
  hc_out_ref[:, H:2 * H] = prod_out
  hc_out_ref[:, 2 * H:3 * H] = c[0]
  hc_out_ref[:, 3 * H:4 * H] = c[1]

  # Edge scores: gather rows with the scalar-prefetched indices (no O(E*N)
  # one-hot matmuls), then reduce on the MXU with a ones column.
  csc_ref[...] = cust_out
  psc_ref[...] = prod_out
  gcs_ref[...] = jnp.zeros_like(gcs_ref)
  gps_ref[...] = jnp.zeros_like(gps_ref)
  for e in range(n_edges):                       # static unroll, E is small here
    ic = esrc_ref[e]
    ip = edst_ref[e]
    gcs_ref[pl.ds(e, 1), :] = csc_ref[pl.ds(ic, 1), :]
    gps_ref[pl.ds(e, 1), :] = psc_ref[pl.ds(ip, 1), :]
  ones_col = jnp.ones((H, 1), f32)
  score_ref[...] = jnp.dot(gcs_ref[...] * gps_ref[...], ones_col,
                           preferred_element_type=f32)


# ---------------------------------------------------------------------------
# Parameter construction (deterministic, synthetic) + setup-time packing
# ---------------------------------------------------------------------------
def init_params(key, hidden=32, num_layers=2,
                country_vocab=8, country_dim=4, desc_vocab=20, desc_dim=16):
  customer_in = 14 + country_dim   # 18
  product_in = 4 + desc_dim        # 20

  def nrm(k, shape, scale=0.1):
    return scale * jax.random.normal(k, shape, dtype=jnp.float32)

  keys = jax.random.split(key, 4 + num_layers)
  params = {
      'country_embed': nrm(keys[0], (country_vocab, country_dim), 1.0),
      'desc_embed': nrm(keys[1], (desc_vocab, desc_dim), 1.0),
      'layers': [],
  }
  for i in range(num_layers):
    in_c = customer_in if i == 0 else hidden
    in_p = product_in if i == 0 else hidden
    lk = jax.random.split(keys[4 + i], 8)
    layer = {}
    for j, (nt, in_dim) in enumerate([('customer', in_c), ('product', in_p)]):
      sk = jax.random.split(lk[j], 4)
      layer[nt] = {
          'wx': nrm(sk[0], (in_dim, 4 * hidden)),   # gate input weights [i|f|c|o]
          'wl': nrm(sk[1], (hidden, 4 * hidden)),   # SAGE lin_l (neighbor) weights
          'wr': nrm(sk[2], (hidden, 4 * hidden)),   # SAGE lin_r (root) weights
          'b':  jnp.zeros((1, 4 * hidden), jnp.float32),
      }
    for nt in ('customer', 'product'):
      layer['gn_' + nt] = {
          'weight': jnp.ones((1, hidden), jnp.float32),
          'bias': jnp.zeros((1, hidden), jnp.float32),
          'mean_scale': jnp.ones((1, hidden), jnp.float32),
      }
    params['layers'].append(layer)

  ak = jax.random.split(keys[2], 4)
  params['attn'] = {
      'wv': nrm(ak[0], (hidden, hidden)),
      'bv': jnp.zeros((1, hidden), jnp.float32),
      'wo': nrm(ak[1], (hidden, hidden)),
      'bo': jnp.zeros((1, hidden), jnp.float32),
  }
  return params


def pack_params(raw, hidden=32):
  """Setup-time packing: stack [Wx; Wl; Wr] into one (4H, 4H) fused bf16 gate
  weight per (layer, node type); fuse the seq-len-1 attention projections."""
  H = hidden
  KX, KTOT = 2 * H, 4 * H
  w_l, b_l, gw_l, gb_l, gm_l = [], [], [], [], []
  for layer in raw['layers']:
    w_t, b_t, gw_t, gb_t, gm_t = [], [], [], [], []
    for nt in ('customer', 'product'):
      p = layer[nt]
      in_dim = p['wx'].shape[0]
      assert in_dim <= KX, "input feature dim must fit the padded x slot"
      W = jnp.zeros((KTOT, 4 * H), jnp.float32)
      W = W.at[:in_dim, :].set(p['wx'])
      W = W.at[KX:KX + H, :].set(p['wl'])
      W = W.at[KX + H:KTOT, :].set(p['wr'])
      w_t.append(W)
      b_t.append(p['b'])
      gn = layer['gn_' + nt]
      gw_t.append(gn['weight']); gb_t.append(gn['bias']); gm_t.append(gn['mean_scale'])
    w_l.append(jnp.stack(w_t)); b_l.append(jnp.stack(b_t))
    gw_l.append(jnp.stack(gw_t)); gb_l.append(jnp.stack(gb_t)); gm_l.append(jnp.stack(gm_t))
  ap = raw['attn']
  return {
      'country_embed': raw['country_embed'],
      'desc_embed': raw['desc_embed'],
      'w': jnp.stack(w_l).astype(jnp.bfloat16),         # (L, 2, 4H, 4H) bf16 MXU operand
      'b': jnp.stack(b_l),                              # (L, 2, 1, 4H) f32
      'gn_w': jnp.stack(gw_l),                          # (L, 2, 1, H) f32
      'gn_b': jnp.stack(gb_l),
      'gn_ms': jnp.stack(gm_l),
      'w_attn': (ap['wv'] @ ap['wo']).astype(jnp.bfloat16),   # exact for seq length 1
      'b_attn': ap['bv'] @ ap['wo'] + ap['bo'],
  }


# ---------------------------------------------------------------------------
# Forward pass (thin JAX glue + one pallas_call)
# ---------------------------------------------------------------------------
def tgn_forward(params, x_dict, edge_index_dict,
                h_dict_prev_ts=None, c_dict_prev_ts=None,
                target_edge_index=None, neg_edge_index_src=None,
                neg_edge_index_dst=None, hc_prev=None, hidden=32):
  f32 = jnp.float32
  bf16 = jnp.bfloat16
  H = hidden
  KX = 2 * H
  num_layers = int(params['w'].shape[0])

  # --- input feature construction (embedding lookup + concat) ---
  cust_feats = x_dict['customer']
  country_ids = cust_feats[:, -1].astype(jnp.int32)
  customer_x = jnp.concatenate(
      [cust_feats[:, :-1], params['country_embed'][country_ids]], axis=1)
  prod_feats = x_dict['product']
  desc_ids = prod_feats[:, -1].astype(jnp.int32)
  product_x = jnp.concatenate(
      [prod_feats[:, :-1], params['desc_embed'][desc_ids]], axis=1)

  Nc, Np = customer_x.shape[0], product_x.shape[0]
  Npad = max(8, _round_up(max(Nc, Np), 8))

  def pad_to(x, rows, cols):
    return jnp.pad(x, ((0, rows - x.shape[0]), (0, cols - x.shape[1])))
  x_pad = jnp.stack([pad_to(customer_x.astype(bf16), Npad, KX),
                     pad_to(product_x.astype(bf16), Npad, KX)])

  # TODO(synk): dense mean adjacency is O(N^2) (bf16 now, but still dense); at
  # production N replace with an edge-list segment-mean / CSR gather and tile
  # the kernel over dst-row blocks (one pallas_call per layer, "parallel" grid
  # axis for v7x's 2nd TensorCore and DMA/compute pipelining).
  def mean_adj(edge_index):
    src, dst = edge_index[0], edge_index[1]
    A = jnp.zeros((Npad, Npad), f32).at[dst, src].add(1.0)
    deg = jnp.sum(A, axis=1, keepdims=True)
    return jnp.where(deg > 0, A / jnp.maximum(deg, 1.0), 0.0).astype(bf16)

  A = jnp.stack([
      mean_adj(edge_index_dict[('product', 'rev_buys', 'customer')]),  # dst=customer
      mean_adj(edge_index_dict[('customer', 'buys', 'product')]),      # dst=product
  ])

  # Previous-timestep state: preferred path is the packed (Npad, 4H) slab from
  # the previous call (no re-scatter); dicts or zeros otherwise.
  if hc_prev is not None:
    assert hc_prev.shape == (Npad, 4 * H)
    hc0 = hc_prev
  else:
    hc0 = jnp.zeros((Npad, 4 * H), f32)
    if h_dict_prev_ts is not None:
      hc0 = hc0.at[:Nc, 0:H].set(h_dict_prev_ts['customer'])
      hc0 = hc0.at[:Np, H:2 * H].set(h_dict_prev_ts['product'])
    if c_dict_prev_ts is not None:
      hc0 = hc0.at[:Nc, 2 * H:3 * H].set(c_dict_prev_ts['customer'])
      hc0 = hc0.at[:Np, 3 * H:4 * H].set(c_dict_prev_ts['product'])

  # Edge scoring indices (pos first, then neg), scalar-prefetched into SMEM.
  # TODO(synk): indices are clamped in-bounds; the PyTorch module instead warns
  # and skips scoring entirely when any index is out of bounds.
  E_tgt = int(target_edge_index.shape[1]) if target_edge_index is not None else 0
  E_neg = (int(neg_edge_index_src.shape[0])
           if (neg_edge_index_src is not None and neg_edge_index_dst is not None)
           else 0)
  E_total = E_tgt + E_neg
  Epad = max(8, _round_up(max(E_total, 1), 8))
  src_parts, dst_parts = [], []
  if E_tgt > 0:
    src_parts.append(target_edge_index[0]); dst_parts.append(target_edge_index[1])
  if E_neg > 0:
    src_parts.append(neg_edge_index_src); dst_parts.append(neg_edge_index_dst)
  if E_total > 0:
    esrc = jnp.clip(jnp.concatenate(src_parts), 0, Npad - 1).astype(jnp.int32)
    edst = jnp.clip(jnp.concatenate(dst_parts), 0, Npad - 1).astype(jnp.int32)
  else:
    esrc = jnp.zeros((1,), jnp.int32)
    edst = jnp.zeros((1,), jnp.int32)

  kernel = functools.partial(tgn_megakernel, num_layers=num_layers,
                             n_real=(Nc, Np), n_edges=E_total, hidden=H)

  inputs = (x_pad, A, hc0, params['w'], params['b'],
            params['gn_w'], params['gn_b'], params['gn_ms'],
            params['w_attn'], params['b_attn'])

  # TODO(synk): grid stays (1,) because multi-layer fusion needs every row of
  # the *other* node type per layer; at production N split per layer and tile
  # over destination rows instead.
  grid_spec = pltpu.PrefetchScalarGridSpec(
      num_scalar_prefetch=2,
      grid=(1,),
      in_specs=[_full_spec(t.shape) for t in inputs],
      out_specs=(_full_spec((Npad, 4 * H)), _full_spec((Epad, 1))),
      scratch_shapes=[
          pltpu.VMEM((2, Npad, 4 * H), bf16),   # fused-gate input staging [x|agg|h]
          pltpu.VMEM((Npad, H), f32),           # customer rows for edge gather
          pltpu.VMEM((Npad, H), f32),           # product rows for edge gather
          pltpu.VMEM((Epad, H), f32),           # gathered customer rows
          pltpu.VMEM((Epad, H), f32),           # gathered product rows
      ])

  hc, score_col = pl.pallas_call(
      kernel,
      grid_spec=grid_spec,
      out_shape=(jax.ShapeDtypeStruct((Npad, 4 * H), f32),
                 jax.ShapeDtypeStruct((Epad, 1), f32)),
      compiler_params=pltpu.CompilerParams(dimension_semantics=("arbitrary",)),
  )(esrc, edst, *inputs)

  out_h = {'customer': hc[:Nc, 0:H], 'product': hc[:Np, H:2 * H]}
  final_c = {'customer': hc[:Nc, 2 * H:3 * H], 'product': hc[:Np, 3 * H:4 * H]}
  pos_score = score_col[:E_tgt, 0] if E_tgt > 0 else None
  neg_score = score_col[E_tgt:E_total, 0] if E_neg > 0 else None
  # Also return the packed state slab so the next timestep can skip the
  # dict re-scatter entirely.
  return out_h, final_c, pos_score, neg_score, hc


# ---------------------------------------------------------------------------
# Example run
# ---------------------------------------------------------------------------
if __name__ == "__main__":
  key = jax.random.PRNGKey(0)
  (k_par, k_cf, k_pf, k_cid, k_did, k_es, k_ed,
   k_pe, k_ns, k_nd) = jax.random.split(key, 10)

  HIDDEN, NUM_LAYERS = 32, 2
  Nc, Np, E, E_tgt, E_neg = 12, 10, 20, 6, 6
  COUNTRY_VOCAB, DESC_VOCAB = 8, 20

  raw_params = init_params(k_par, hidden=HIDDEN, num_layers=NUM_LAYERS,
                           country_vocab=COUNTRY_VOCAB, desc_vocab=DESC_VOCAB)
  params = pack_params(raw_params, hidden=HIDDEN)

  # customer feats: 14 float cols + country id column; product: 4 + desc id
  customer_feats = jnp.concatenate([
      jax.random.normal(k_cf, (Nc, 14), dtype=jnp.float32),
      jax.random.randint(k_cid, (Nc, 1), 0, COUNTRY_VOCAB).astype(jnp.float32)], axis=1)
  product_feats = jnp.concatenate([
      jax.random.normal(k_pf, (Np, 4), dtype=jnp.float32),
      jax.random.randint(k_did, (Np, 1), 0, DESC_VOCAB).astype(jnp.float32)], axis=1)
  x_dict = {'customer': customer_feats, 'product': product_feats}

  e_src = jax.random.randint(k_es, (E,), 0, Nc)
  e_dst = jax.random.randint(k_ed, (E,), 0, Np)
  edge_index_dict = {
      ('customer', 'buys', 'product'): jnp.stack([e_src, e_dst]),
      ('product', 'rev_buys', 'customer'): jnp.stack([e_dst, e_src]),
  }
  target_edge_index = jnp.stack([
      jax.random.randint(k_pe, (E_tgt,), 0, Nc),
      jax.random.randint(jax.random.fold_in(k_pe, 1), (E_tgt,), 0, Np)])
  neg_src = jax.random.randint(k_ns, (E_neg,), 0, Nc)
  neg_dst = jax.random.randint(k_nd, (E_neg,), 0, Np)

  fwd = jax.jit(functools.partial(tgn_forward, hidden=HIDDEN))

  # Timestep 1: no previous state.
  out_h, final_c, pos_score, neg_score, hc_state = fwd(
      params, x_dict, edge_index_dict, None, None,
      target_edge_index, neg_src, neg_dst)
  # Timestep 2: carry the packed state slab straight back (no re-scatter).
  out_h2, final_c2, pos_score2, neg_score2, _ = fwd(
      params, x_dict, edge_index_dict, None, None,
      target_edge_index, neg_src, neg_dst, hc_prev=hc_state)

  jax.block_until_ready((out_h, final_c, pos_score, neg_score,
                         out_h2, final_c2, pos_score2, neg_score2))

  assert out_h['customer'].shape == (Nc, HIDDEN)
  assert out_h['product'].shape == (Np, HIDDEN)
  assert final_c['customer'].shape == (Nc, HIDDEN)
  assert final_c['product'].shape == (Np, HIDDEN)
  assert pos_score.shape == (E_tgt,) and neg_score.shape == (E_neg,)
  assert out_h2['customer'].shape == (Nc, HIDDEN)
  assert pos_score2.shape == (E_tgt,) and neg_score2.shape == (E_neg,)
  assert bool(jnp.all(jnp.isfinite(out_h['customer'])))
  assert bool(jnp.all(jnp.isfinite(out_h2['customer'])))
  assert bool(jnp.all(jnp.isfinite(pos_score)))
  assert bool(jnp.all(jnp.isfinite(neg_score2)))

  # Consistency: in-kernel gathered scores == scores recomputed from returned h.
  ref_pos = jnp.sum(out_h['customer'][target_edge_index[0]]
                    * out_h['product'][target_edge_index[1]], axis=-1)
  ref_neg = jnp.sum(out_h['customer'][neg_src] * out_h['product'][neg_dst], axis=-1)
  assert bool(jnp.allclose(pos_score, ref_pos, atol=1e-3, rtol=1e-3))
  assert bool(jnp.allclose(neg_score, ref_neg, atol=1e-3, rtol=1e-3))

  print("KERNEL_OK")
</pallas_src>

<mosaic_0001>
module attributes {stable_mosaic.version = 11 : i64} {
  func.func @tgn_megakernel(%arg0: i32, %arg1: memref<12xi32, #tpu.memory_space<smem>>, %arg2: memref<12xi32, #tpu.memory_space<smem>>, %arg3: memref<2x16x64xbf16, #tpu.memory_space<vmem>>, %arg4: memref<2x16x16xbf16, #tpu.memory_space<vmem>>, %arg5: memref<16x128xf32, #tpu.memory_space<vmem>>, %arg6: memref<2x2x128x128xbf16, #tpu.memory_space<vmem>>, %arg7: memref<2x2x1x128xf32, #tpu.memory_space<vmem>>, %arg8: memref<2x2x1x32xf32, #tpu.memory_space<vmem>>, %arg9: memref<2x2x1x32xf32, #tpu.memory_space<vmem>>, %arg10: memref<2x2x1x32xf32, #tpu.memory_space<vmem>>, %arg11: memref<32x32xbf16, #tpu.memory_space<vmem>>, %arg12: memref<1x32xf32, #tpu.memory_space<vmem>>, %arg13: memref<16x128xf32, #tpu.memory_space<vmem>>, %arg14: memref<16x1xf32, #tpu.memory_space<vmem>>, %arg15: memref<2x16x128xbf16, #tpu.memory_space<vmem>>, %arg16: memref<16x32xf32, #tpu.memory_space<vmem>>, %arg17: memref<16x32xf32, #tpu.memory_space<vmem>>, %arg18: memref<16x32xf32, #tpu.memory_space<vmem>>, %arg19: memref<16x32xf32, #tpu.memory_space<vmem>>) attributes {dimension_semantics = [#tpu.dimension_semantics<arbitrary>], iteration_bounds = array<i64: 1>, scalar_prefetch = 2 : i64, scratch_operands = 5 : i64, tpu.core_type = #tpu.core_type<tc>, window_params = [{pipeline_mode = #tpu.pipeline_mode<synchronous>, transform_indices = @transform_0, window_bounds = array<i64: 2, 16, 64>}, {pipeline_mode = #tpu.pipeline_mode<synchronous>, transform_indices = @transform_1, window_bounds = array<i64: 2, 16, 16>}, {pipeline_mode = #tpu.pipeline_mode<synchronous>, transform_indices = @transform_2, window_bounds = array<i64: 16, 128>}, {pipeline_mode = #tpu.pipeline_mode<synchronous>, transform_indices = @transform_3, window_bounds = array<i64: 2, 2, 128, 128>}, {pipeline_mode = #tpu.pipeline_mode<synchronous>, transform_indices = @transform_4, window_bounds = array<i64: 2, 2, 1, 128>}, {pipeline_mode = #tpu.pipeline_mode<synchronous>, transform_indices = @transform_5, window_bounds = array<i64: 2, 2, 1, 32>}, {pipeline_mode = #tpu.pipeline_mode<synchronous>, transform_indices = @transform_6, window_bounds = array<i64: 2, 2, 1, 32>}, {pipeline_mode = #tpu.pipeline_mode<synchronous>, transform_indices = @transform_7, window_bounds = array<i64: 2, 2, 1, 32>}, {pipeline_mode = #tpu.pipeline_mode<synchronous>, transform_indices = @transform_8, window_bounds = array<i64: 32, 32>}, {pipeline_mode = #tpu.pipeline_mode<synchronous>, transform_indices = @transform_9, window_bounds = array<i64: 1, 32>}, {pipeline_mode = #tpu.pipeline_mode<synchronous>, transform_indices = @transform_10, window_bounds = array<i64: 16, 128>}, {pipeline_mode = #tpu.pipeline_mode<synchronous>, transform_indices = @transform_11, window_bounds = array<i64: 16, 1>}]} {
    %0 = tpu.iota {dimensions = array<i32: 1>} : vector<1x16xi32>
    %c12_i32 = arith.constant 12 : i32
    %1 = vector.broadcast %c12_i32 : i32 to vector<1x16xi32>
    %2 = arith.cmpi slt, %0, %1 : vector<1x16xi32>
    %3 = arith.extui %2 : vector<1x16xi1> to vector<1x16xi32>
    %4 = arith.sitofp %3 : vector<1x16xi32> to vector<1x16xf32>
    %c10_i32 = arith.constant 10 : i32
    %5 = vector.broadcast %c10_i32 : i32 to vector<1x16xi32>
    %6 = arith.cmpi slt, %0, %5 : vector<1x16xi32>
    %7 = arith.extui %6 : vector<1x16xi1> to vector<1x16xi32>
    %8 = arith.sitofp %7 : vector<1x16xi32> to vector<1x16xf32>
    %c0 = arith.constant 0 : index
    %c0_0 = arith.constant 0 : index
    %9 = vector.load %arg5[%c0, %c0_0] : memref<16x128xf32, #tpu.memory_space<vmem>>, vector<16x32xf32>
    %c0_1 = arith.constant 0 : index
    %c32 = arith.constant 32 : index
    %10 = vector.load %arg5[%c0_1, %c32] : memref<16x128xf32, #tpu.memory_space<vmem>>, vector<16x32xf32>
    %c0_2 = arith.constant 0 : index
    %c64 = arith.constant 64 : index
    %11 = vector.load %arg5[%c0_2, %c64] : memref<16x128xf32, #tpu.memory_space<vmem>>, vector<16x32xf32>
    %c0_3 = arith.constant 0 : index
    %c96 = arith.constant 96 : index
    %12 = vector.load %arg5[%c0_3, %c96] : memref<16x128xf32, #tpu.memory_space<vmem>>, vector<16x32xf32>
    %c0_4 = arith.constant 0 : index
    %c0_5 = arith.constant 0 : index
    %c0_6 = arith.constant 0 : index
    %13 = vector.load %arg3[%c0_4, %c0_5, %c0_6] : memref<2x16x64xbf16, #tpu.memory_space<vmem>>, vector<1x16x64xbf16>
    %14 = vector.shape_cast %13 : vector<1x16x64xbf16> to vector<16x64xbf16>
    %c0_7 = arith.constant 0 : index
    %c0_8 = arith.constant 0 : index
    %c0_9 = arith.constant 0 : index
    %15 = vector.load %arg15[%c0_7, %c0_8, %c0_9] : memref<2x16x128xbf16, #tpu.memory_space<vmem>>, vector<1x16x64xbf16>
    %16 = vector.shape_cast %15 : vector<1x16x64xbf16> to vector<16x64xbf16>
    %17 = vector.shape_cast %14 : vector<16x64xbf16> to vector<1x16x64xbf16>
    tpu.vector_store %arg15[%c0_7, %c0_8, %c0_9], %17 {strides = array<i32>} : memref<2x16x128xbf16, #tpu.memory_space<vmem>>, vector<1x16x64xbf16>,
    %c1 = arith.constant 1 : index
    %c0_10 = arith.constant 0 : index
    %c0_11 = arith.constant 0 : index
    %18 = vector.load %arg3[%c1, %c0_10, %c0_11] : memref<2x16x64xbf16, #tpu.memory_space<vmem>>, vector<1x16x64xbf16>
    %19 = vector.shape_cast %18 : vector<1x16x64xbf16> to vector<16x64xbf16>
    %c1_12 = arith.constant 1 : index
    %c0_13 = arith.constant 0 : index
    %c0_14 = arith.constant 0 : index
    %20 = vector.load %arg15[%c1_12, %c0_13, %c0_14] : memref<2x16x128xbf16, #tpu.memory_space<vmem>>, vector<1x16x64xbf16>
    %21 = vector.shape_cast %20 : vector<1x16x64xbf16> to vector<16x64xbf16>
    %22 = vector.shape_cast %19 : vector<16x64xbf16> to vector<1x16x64xbf16>
    tpu.vector_store %arg15[%c1_12, %c0_13, %c0_14], %22 {strides = array<i32>} : memref<2x16x128xbf16, #tpu.memory_space<vmem>>, vector<1x16x64xbf16>,
    %23 = arith.truncf %9 : vector<16x32xf32> to vector<16x32xbf16>
    %24 = arith.truncf %10 : vector<16x32xf32> to vector<16x32xbf16>
    %c0_15 = arith.constant 0 : index
    %c0_16 = arith.constant 0 : index
    %c0_17 = arith.constant 0 : index
    %25 = vector.load %arg4[%c0_15, %c0_16, %c0_17] : memref<2x16x16xbf16, #tpu.memory_space<vmem>>, vector<1x16x16xbf16>
    %26 = vector.shape_cast %25 : vector<1x16x16xbf16> to vector<16x16xbf16>
    %cst = arith.constant dense<0.000000e+00> : vector<16x32xf32>
    %27 = tpu.matmul %26, %24, %cst {dimension_numbers = #tpu.dot_dimension_numbers<[1], [0], [0], [1], [0, 0, 1, 1], [], []>} : vector<16x16xbf16>, vector<16x32xbf16>, vector<16x32xf32> -> vector<16x32xf32>
    %28 = arith.truncf %27 : vector<16x32xf32> to vector<16x32xbf16>
    %c0_18 = arith.constant 0 : index
    %c0_19 = arith.constant 0 : index
    %c64_20 = arith.constant 64 : index
    %29 = vector.load %arg15[%c0_18, %c0_19, %c64_20] : memref<2x16x128xbf16, #tpu.memory_space<vmem>>, vector<1x16x32xbf16>
    %30 = vector.shape_cast %29 : vector<1x16x32xbf16> to vector<16x32xbf16>
    %31 = vector.shape_cast %28 : vector<16x32xbf16> to vector<1x16x32xbf16>
    tpu.vector_store %arg15[%c0_18, %c0_19, %c64_20], %31 {strides = array<i32>} : memref<2x16x128xbf16, #tpu.memory_space<vmem>>, vector<1x16x32xbf16>,
    %c0_21 = arith.constant 0 : index
    %c0_22 = arith.constant 0 : index
    %c96_23 = arith.constant 96 : index
    %32 = vector.load %arg15[%c0_21, %c0_22, %c96_23] : memref<2x16x128xbf16, #tpu.memory_space<vmem>>, vector<1x16x32xbf16>
    %33 = vector.shape_cast %32 : vector<1x16x32xbf16> to vector<16x32xbf16>
    %34 = vector.shape_cast %23 : vector<16x32xbf16> to vector<1x16x32xbf16>
    tpu.vector_store %arg15[%c0_21, %c0_22, %c96_23], %34 {strides = array<i32>} : memref<2x16x128xbf16, #tpu.memory_space<vmem>>, vector<1x16x32xbf16>,
    %c0_24 = arith.constant 0 : index
    %c0_25 = arith.constant 0 : index
    %c0_26 = arith.constant 0 : index
    %35 = vector.load %arg15[%c0_24, %c0_25, %c0_26] : memref<2x16x128xbf16, #tpu.memory_space<vmem>>, vector<1x16x128xbf16>
    %36 = vector.shape_cast %35 : vector<1x16x128xbf16> to vector<16x128xbf16>
    %c0_27 = arith.constant 0 : index
    %c0_28 = arith.constant 0 : index
    %c0_29 = arith.constant 0 : index
    %c0_30 = arith.constant 0 : index
    %37 = vector.load %arg6[%c0_27, %c0_28, %c0_29, %c0_30] : memref<2x2x128x128xbf16, #tpu.memory_space<vmem>>, vector<1x1x128x128xbf16>
    %38 = vector.shape_cast %37 : vector<1x1x128x128xbf16> to vector<128x128xbf16>
    %cst_31 = arith.constant dense<0.000000e+00> : vector<16x128xf32>
    %39 = tpu.matmul %36, %38, %cst_31 {dimension_numbers = #tpu.dot_dimension_numbers<[1], [0], [0], [1], [0, 0, 1, 1], [], []>} : vector<16x128xbf16>, vector<128x128xbf16>, vector<16x128xf32> -> vector<16x128xf32>
    %c0_32 = arith.constant 0 : index
    %c0_33 = arith.constant 0 : index
    %c0_34 = arith.constant 0 : index
    %c0_35 = arith.constant 0 : index
    %40 = vector.load %arg7[%c0_32, %c0_33, %c0_34, %c0_35] : memref<2x2x1x128xf32, #tpu.memory_space<vmem>>, vector<1x1x1x128xf32>
    %41 = vector.shape_cast %40 : vector<1x1x1x128xf32> to vector<1x128xf32>
    %42 = vector.broadcast %41 : vector<1x128xf32> to vector<16x128xf32>
    %43 = arith.addf %39, %42 : vector<16x128xf32>
    %44 = arith.negf %43 : vector<16x128xf32>
    %45 = math.exp %44 : vector<16x128xf32>
    %cst_36 = arith.constant 1.000000e+00 : f32
    %46 = vector.broadcast %cst_36 : f32 to vector<16x128xf32>
    %47 = arith.addf %46, %45 : vector<16x128xf32>
    %48 = arith.divf %46, %47 : vector<16x128xf32>
    %49 = vector.extract_strided_slice %48 {offsets = [0, 0], sizes = [16, 32], strides = [1, 1]} : vector<16x128xf32> to vector<16x32xf32>
    %50 = vector.extract_strided_slice %48 {offsets = [0, 32], sizes = [16, 32], strides = [1, 1]} : vector<16x128xf32> to vector<16x32xf32>
    %51 = vector.extract_strided_slice %48 {offsets = [0, 96], sizes = [16, 32], strides = [1, 1]} : vector<16x128xf32> to vector<16x32xf32>
    %52 = vector.extract_strided_slice %43 {offsets = [0, 64], sizes = [16, 32], strides = [1, 1]} : vector<16x128xf32> to vector<16x32xf32>
    %53 = math.tanh %52 : vector<16x32xf32>
    %54 = arith.mulf %50, %11 : vector<16x32xf32>
    %55 = arith.mulf %49, %53 : vector<16x32xf32>
    %56 = arith.addf %54, %55 : vector<16x32xf32>
    %57 = math.tanh %56 : vector<16x32xf32>
    %58 = arith.mulf %51, %57 : vector<16x32xf32>
    %cst_37 = arith.constant dense<0.000000e+00> : vector<1x32xf32>
    %59 = tpu.matmul %4, %58, %cst_37 {dimension_numbers = #tpu.dot_dimension_numbers<[1], [0], [0], [1], [0, 0, 1, 1], [], []>} : vector<1x16xf32>, vector<16x32xf32>, vector<1x32xf32> -> vector<1x32xf32>
    %cst_38 = arith.constant 0.0833333358 : f32
    %60 = vector.broadcast %cst_38 : f32 to vector<1x32xf32>
    %61 = arith.mulf %59, %60 : vector<1x32xf32>
    %c0_39 = arith.constant 0 : index
    %c0_40 = arith.constant 0 : index
    %c0_41 = arith.constant 0 : index
    %c0_42 = arith.constant 0 : index
    %62 = vector.load %arg10[%c0_39, %c0_40, %c0_41, %c0_42] : memref<2x2x1x32xf32, #tpu.memory_space<vmem>>, vector<1x1x1x32xf32>
    %63 = vector.shape_cast %62 : vector<1x1x1x32xf32> to vector<1x32xf32>
    %64 = arith.mulf %61, %63 : vector<1x32xf32>
    %65 = vector.broadcast %64 : vector<1x32xf32> to vector<16x32xf32>
    %66 = arith.subf %58, %65 : vector<16x32xf32>
    %67 = arith.mulf %66, %66 : vector<16x32xf32>
    %cst_43 = arith.constant dense<0.000000e+00> : vector<1x32xf32>
    %68 = tpu.matmul %4, %67, %cst_43 {dimension_numbers = #tpu.dot_dimension_numbers<[1], [0], [0], [1], [0, 0, 1, 1], [], []>} : vector<1x16xf32>, vector<16x32xf32>, vector<1x32xf32> -> vector<1x32xf32>
    %cst_44 = arith.constant 0.0833333358 : f32
    %69 = vector.broadcast %cst_44 : f32 to vector<1x32xf32>
    %70 = arith.mulf %68, %69 : vector<1x32xf32>
    %c0_45 = arith.constant 0 : index
    %c0_46 = arith.constant 0 : index
    %c0_47 = arith.constant 0 : index
    %c0_48 = arith.constant 0 : index
    %71 = vector.load %arg8[%c0_45, %c0_46, %c0_47, %c0_48] : memref<2x2x1x32xf32, #tpu.memory_space<vmem>>, vector<1x1x1x32xf32>
    %72 = vector.shape_cast %71 : vector<1x1x1x32xf32> to vector<1x32xf32>
    %73 = vector.broadcast %72 : vector<1x32xf32> to vector<16x32xf32>
    %74 = arith.mulf %73, %66 : vector<16x32xf32>
    %cst_49 = arith.constant 9.99999974E-6 : f32
    %75 = vector.broadcast %cst_49 : f32 to vector<1x32xf32>
    %76 = arith.addf %70, %75 : vector<1x32xf32>
    %77 = math.rsqrt %76 : vector<1x32xf32>
    %78 = vector.broadcast %77 : vector<1x32xf32> to vector<16x32xf32>
    %79 = arith.mulf %74, %78 : vector<16x32xf32>
    %c0_50 = arith.constant 0 : index
    %c0_51 = arith.constant 0 : index
    %c0_52 = arith.constant 0 : index
    %c0_53 = arith.constant 0 : index
    %80 = vector.load %arg9[%c0_50, %c0_51, %c0_52, %c0_53] : memref<2x2x1x32xf32, #tpu.memory_space<vmem>>, vector<1x1x1x32xf32>
    %81 = vector.shape_cast %80 : vector<1x1x1x32xf32> to vector<1x32xf32>
    %82 = vector.broadcast %81 : vector<1x32xf32> to vector<16x32xf32>
    %83 = arith.addf %79, %82 : vector<16x32xf32>
    %c1_54 = arith.constant 1 : index
    %c0_55 = arith.constant 0 : index
    %c0_56 = arith.constant 0 : index
    %84 = vector.load %arg4[%c1_54, %c0_55, %c0_56] : memref<2x16x16xbf16, #tpu.memory_space<vmem>>, vector<1x16x16xbf16>
    %85 = vector.shape_cast %84 : vector<1x16x16xbf16> to vector<16x16xbf16>
    %cst_57 = arith.constant dense<0.000000e+00> : vector<16x32xf32>
    %86 = tpu.matmul %85, %23, %cst_57 {dimension_numbers = #tpu.dot_dimension_numbers<[1], [0], [0], [1], [0, 0, 1, 1], [], []>} : vector<16x16xbf16>, vector<16x32xbf16>, vector<16x32xf32> -> vector<16x32xf32>
    %87 = arith.truncf %86 : vector<16x32xf32> to vector<16x32xbf16>
    %c1_58 = arith.constant 1 : index
    %c0_59 = arith.constant 0 : index
    %c64_60 = arith.constant 64 : index
    %88 = vector.load %arg15[%c1_58, %c0_59, %c64_60] : memref<2x16x128xbf16, #tpu.memory_space<vmem>>, vector<1x16x32xbf16>
    %89 = vector.shape_cast %88 : vector<1x16x32xbf16> to vector<16x32xbf16>
    %90 = vector.shape_cast %87 : vector<16x32xbf16> to vector<1x16x32xbf16>
    tpu.vector_store %arg15[%c1_58, %c0_59, %c64_60], %90 {strides = array<i32>} : memref<2x16x128xbf16, #tpu.memory_space<vmem>>, vector<1x16x32xbf16>,
    %c1_61 = arith.constant 1 : index
    %c0_62 = arith.constant 0 : index
    %c96_63 = arith.constant 96 : index
    %91 = vector.load %arg15[%c1_61, %c0_62, %c96_63] : memref<2x16x128xbf16, #tpu.memory_space<vmem>>, vector<1x16x32xbf16>
    %92 = vector.shape_cast %91 : vector<1x16x32xbf16> to vector<16x32xbf16>
    %93 = vector.shape_cast %24 : vector<16x32xbf16> to vector<1x16x32xbf16>
    tpu.vector_store %arg15[%c1_61, %c0_62, %c96_63], %93 {strides = array<i32>} : memref<2x16x128xbf16, #tpu.memory_space<vmem>>, vector<1x16x32xbf16>,
    %c1_64 = arith.constant 1 : index
    %c0_65 = arith.constant 0 : index
    %c0_66 = arith.constant 0 : index
    %94 = vector.load %arg15[%c1_64, %c0_65, %c0_66] : memref<2x16x128xbf16, #tpu.memory_space<vmem>>, vector<1x16x128xbf16>
    %95 = vector.shape_cast %94 : vector<1x16x128xbf16> to vector<16x128xbf16>
    %c0_67 = arith.constant 0 : index
    %c1_68 = arith.constant 1 : index
    %c0_69 = arith.constant 0 : index
    %c0_70 = arith.constant 0 : index
    %96 = vector.load %arg6[%c0_67, %c1_68, %c0_69, %c0_70] : memref<2x2x128x128xbf16, #tpu.memory_space<vmem>>, vector<1x1x128x128xbf16>
    %97 = vector.shape_cast %96 : vector<1x1x128x128xbf16> to vector<128x128xbf16>
    %cst_71 = arith.constant dense<0.000000e+00> : vector<16x128xf32>
    %98 = tpu.matmul %95, %97, %cst_71 {dimension_numbers = #tpu.dot_dimension_numbers<[1], [0], [0], [1], [0, 0, 1, 1], [], []>} : vector<16x128xbf16>, vector<128x128xbf16>, vector<16x128xf32> -> vector<16x128xf32>
    %c0_72 = arith.constant 0 : index
    %c1_73 = arith.constant 1 : index
    %c0_74 = arith.constant 0 : index
    %c0_75 = arith.constant 0 : index
    %99 = vector.load %arg7[%c0_72, %c1_73, %c0_74, %c0_75] : memref<2x2x1x128xf32, #tpu.memory_space<vmem>>, vector<1x1x1x128xf32>
    %100 = vector.shape_cast %99 : vector<1x1x1x128xf32> to vector<1x128xf32>
    %101 = vector.broadcast %100 : vector<1x128xf32> to vector<16x128xf32>
    %102 = arith.addf %98, %101 : vector<16x128xf32>
    %103 = arith.negf %102 : vector<16x128xf32>
    %104 = math.exp %103 : vector<16x128xf32>
    %cst_76 = arith.constant 1.000000e+00 : f32
    %105 = vector.broadcast %cst_76 : f32 to vector<16x128xf32>
    %106 = arith.addf %105, %104 : vector<16x128xf32>
    %107 = arith.divf %105, %106 : vector<16x128xf32>
    %108 = vector.extract_strided_slice %107 {offsets = [0, 0], sizes = [16, 32], strides = [1, 1]} : vector<16x128xf32> to vector<16x32xf32>
    %109 = vector.extract_strided_slice %107 {offsets = [0, 32], sizes = [16, 32], strides = [1, 1]} : vector<16x128xf32> to vector<16x32xf32>
    %110 = vector.extract_strided_slice %107 {offsets = [0, 96], sizes = [16, 32], strides = [1, 1]} : vector<16x128xf32> to vector<16x32xf32>
    %111 = vector.extract_strided_slice %102 {offsets = [0, 64], sizes = [16, 32], strides = [1, 1]} : vector<16x128xf32> to vector<16x32xf32>
    %112 = math.tanh %111 : vector<16x32xf32>
    %113 = arith.mulf %109, %12 : vector<16x32xf32>
    %114 = arith.mulf %108, %112 : vector<16x32xf32>
    %115 = arith.addf %113, %114 : vector<16x32xf32>
    %116 = math.tanh %115 : vector<16x32xf32>
    %117 = arith.mulf %110, %116 : vector<16x32xf32>
    %cst_77 = arith.constant dense<0.000000e+00> : vector<1x32xf32>
    %118 = tpu.matmul %8, %117, %cst_77 {dimension_numbers = #tpu.dot_dimension_numbers<[1], [0], [0], [1], [0, 0, 1, 1], [], []>} : vector<1x16xf32>, vector<16x32xf32>, vector<1x32xf32> -> vector<1x32xf32>
    %cst_78 = arith.constant 1.000000e-01 : f32
    %119 = vector.broadcast %cst_78 : f32 to vector<1x32xf32>
    %120 = arith.mulf %118, %119 : vector<1x32xf32>
    %c0_79 = arith.constant 0 : index
    %c1_80 = arith.constant 1 : index
    %c0_81 = arith.constant 0 : index
    %c0_82 = arith.constant 0 : index
    %121 = vector.load %arg10[%c0_79, %c1_80, %c0_81, %c0_82] : memref<2x2x1x32xf32, #tpu.memory_space<vmem>>, vector<1x1x1x32xf32>
    %122 = vector.shape_cast %121 : vector<1x1x1x32xf32> to vector<1x32xf32>
    %123 = arith.mulf %120, %122 : vector<1x32xf32>
    %124 = vector.broadcast %123 : vector<1x32xf32> to vector<16x32xf32>
    %125 = arith.subf %117, %124 : vector<16x32xf32>
    %126 = arith.mulf %125, %125 : vector<16x32xf32>
    %cst_83 = arith.constant dense<0.000000e+00> : vector<1x32xf32>
    %127 = tpu.matmul %8, %126, %cst_83 {dimension_numbers = #tpu.dot_dimension_numbers<[1], [0], [0], [1], [0, 0, 1, 1], [], []>} : vector<1x16xf32>, vector<16x32xf32>, vector<1x32xf32> -> vector<1x32xf32>
    %cst_84 = arith.constant 1.000000e-01 : f32
    %128 = vector.broadcast %cst_84 : f32 to vector<1x32xf32>
    %129 = arith.mulf %127, %128 : vector<1x32xf32>
    %c0_85 = arith.constant 0 : index
    %c1_86 = arith.constant 1 : index
    %c0_87 = arith.constant 0 : index
    %c0_88 = arith.constant 0 : index
    %130 = vector.load %arg8[%c0_85, %c1_86, %c0_87, %c0_88] : memref<2x2x1x32xf32, #tpu.memory_space<vmem>>, vector<1x1x1x32xf32>
    %131 = vector.shape_cast %130 : vector<1x1x1x32xf32> to vector<1x32xf32>
    %132 = vector.broadcast %131 : vector<1x32xf32> to vector<16x32xf32>
    %133 = arith.mulf %132, %125 : vector<16x32xf32>
    %cst_89 = arith.constant 9.99999974E-6 : f32
    %134 = vector.broadcast %cst_89 : f32 to vector<1x32xf32>
    %135 = arith.addf %129, %134 : vector<1x32xf32>
    %136 = math.rsqrt %135 : vector<1x32xf32>
    %137 = vector.broadcast %136 : vector<1x32xf32> to vector<16x32xf32>
    %138 = arith.mulf %133, %137 : vector<16x32xf32>
    %c0_90 = arith.constant 0 : index
    %c1_91 = arith.constant 1 : index
    %c0_92 = arith.constant 0 : index
    %c0_93 = arith.constant 0 : index
    %139 = vector.load %arg9[%c0_90, %c1_91, %c0_92, %c0_93] : memref<2x2x1x32xf32, #tpu.memory_space<vmem>>, vector<1x1x1x32xf32>
    %140 = vector.shape_cast %139 : vector<1x1x1x32xf32> to vector<1x32xf32>
    %141 = vector.broadcast %140 : vector<1x32xf32> to vector<16x32xf32>
    %142 = arith.addf %138, %141 : vector<16x32xf32>
    %143 = arith.truncf %83 : vector<16x32xf32> to vector<16x32xbf16>
    %144 = arith.truncf %142 : vector<16x32xf32> to vector<16x32xbf16>
    %c0_94 = arith.constant 0 : index
    %c0_95 = arith.constant 0 : index
    %c0_96 = arith.constant 0 : index
    %145 = vector.load %arg15[%c0_94, %c0_95, %c0_96] : memref<2x16x128xbf16, #tpu.memory_space<vmem>>, vector<1x16x32xbf16>
    %146 = vector.shape_cast %145 : vector<1x16x32xbf16> to vector<16x32xbf16>
    %147 = vector.shape_cast %143 : vector<16x32xbf16> to vector<1x16x32xbf16>
    tpu.vector_store %arg15[%c0_94, %c0_95, %c0_96], %147 {strides = array<i32>} : memref<2x16x128xbf16, #tpu.memory_space<vmem>>, vector<1x16x32xbf16>,
    %c1_97 = arith.constant 1 : index
    %c0_98 = arith.constant 0 : index
    %c0_99 = arith.constant 0 : index
    %148 = vector.load %arg15[%c1_97, %c0_98, %c0_99] : memref<2x16x128xbf16, #tpu.memory_space<vmem>>, vector<1x16x32xbf16>
    %149 = vector.shape_cast %148 : vector<1x16x32xbf16> to vector<16x32xbf16>
    %150 = vector.shape_cast %144 : vector<16x32xbf16> to vector<1x16x32xbf16>
    tpu.vector_store %arg15[%c1_97, %c0_98, %c0_99], %150 {strides = array<i32>} : memref<2x16x128xbf16, #tpu.memory_space<vmem>>, vector<1x16x32xbf16>,
    %c0_100 = arith.constant 0 : index
    %c0_101 = arith.constant 0 : index
    %c0_102 = arith.constant 0 : index
    %151 = vector.load %arg4[%c0_100, %c0_101, %c0_102] : memref<2x16x16xbf16, #tpu.memory_space<vmem>>, vector<1x16x16xbf16>
    %152 = vector.shape_cast %151 : vector<1x16x16xbf16> to vector<16x16xbf16>
    %cst_103 = arith.constant dense<0.000000e+00> : vector<16x32xf32>
    %153 = tpu.matmul %152, %144, %cst_103 {dimension_numbers = #tpu.dot_dimension_numbers<[1], [0], [0], [1], [0, 0, 1, 1], [], []>} : vector<16x16xbf16>, vector<16x32xbf16>, vector<16x32xf32> -> vector<16x32xf32>
    %154 = arith.truncf %153 : vector<16x32xf32> to vector<16x32xbf16>
    %c0_104 = arith.constant 0 : index
    %c0_105 = arith.constant 0 : index
    %c64_106 = arith.constant 64 : index
    %155 = vector.load %arg15[%c0_104, %c0_105, %c64_106] : memref<2x16x128xbf16, #tpu.memory_space<vmem>>, vector<1x16x32xbf16>
    %156 = vector.shape_cast %155 : vector<1x16x32xbf16> to vector<16x32xbf16>
    %157 = vector.shape_cast %154 : vector<16x32xbf16> to vector<1x16x32xbf16>
    tpu.vector_store %arg15[%c0_104, %c0_105, %c64_106], %157 {strides = array<i32>} : memref<2x16x128xbf16, #tpu.memory_space<vmem>>, vector<1x16x32xbf16>,
    %c0_107 = arith.constant 0 : index
    %c0_108 = arith.constant 0 : index
    %c96_109 = arith.constant 96 : index
    %158 = vector.load %arg15[%c0_107, %c0_108, %c96_109] : memref<2x16x128xbf16, #tpu.memory_space<vmem>>, vector<1x16x32xbf16>
    %159 = vector.shape_cast %158 : vector<1x16x32xbf16> to vector<16x32xbf16>
    %160 = vector.shape_cast %143 : vector<16x32xbf16> to vector<1x16x32xbf16>
    tpu.vector_store %arg15[%c0_107, %c0_108, %c96_109], %160 {strides = array<i32>} : memref<2x16x128xbf16, #tpu.memory_space<vmem>>, vector<1x16x32xbf16>,
    %c0_110 = arith.constant 0 : index
    %c0_111 = arith.constant 0 : index
    %c0_112 = arith.constant 0 : index
    %161 = vector.load %arg15[%c0_110, %c0_111, %c0_112] : memref<2x16x128xbf16, #tpu.memory_space<vmem>>, vector<1x16x128xbf16>
    %162 = vector.shape_cast %161 : vector<1x16x128xbf16> to vector<16x128xbf16>
    %c1_113 = arith.constant 1 : index
    %c0_114 = arith.constant 0 : index
    %c0_115 = arith.constant 0 : index
    %c0_116 = arith.constant 0 : index
    %163 = vector.load %arg6[%c1_113, %c0_114, %c0_115, %c0_116] : memref<2x2x128x128xbf16, #tpu.memory_space<vmem>>, vector<1x1x128x128xbf16>
    %164 = vector.shape_cast %163 : vector<1x1x128x128xbf16> to vector<128x128xbf16>
    %cst_117 = arith.constant dense<0.000000e+00> : vector<16x128xf32>
    %165 = tpu.matmul %162, %164, %cst_117 {dimension_numbers = #tpu.dot_dimension_numbers<[1], [0], [0], [1], [0, 0, 1, 1], [], []>} : vector<16x128xbf16>, vector<128x128xbf16>, vector<16x128xf32> -> vector<16x128xf32>
    %c1_118 = arith.constant 1 : index
    %c0_119 = arith.constant 0 : index
    %c0_120 = arith.constant 0 : index
    %c0_121 = arith.constant 0 : index
    %166 = vector.load %arg7[%c1_118, %c0_119, %c0_120, %c0_121] : memref<2x2x1x128xf32, #tpu.memory_space<vmem>>, vector<1x1x1x128xf32>
    %167 = vector.shape_cast %166 : vector<1x1x1x128xf32> to vector<1x128xf32>
    %168 = vector.broadcast %167 : vector<1x128xf32> to vector<16x128xf32>
    %169 = arith.addf %165, %168 : vector<16x128xf32>
    %170 = arith.negf %169 : vector<16x128xf32>
    %171 = math.exp %170 : vector<16x128xf32>
    %cst_122 = arith.constant 1.000000e+00 : f32
    %172 = vector.broadcast %cst_122 : f32 to vector<16x128xf32>
    %173 = arith.addf %172, %171 : vector<16x128xf32>
    %174 = arith.divf %172, %173 : vector<16x128xf32>
    %175 = vector.extract_strided_slice %174 {offsets = [0, 0], sizes = [16, 32], strides = [1, 1]} : vector<16x128xf32> to vector<16x32xf32>
    %176 = vector.extract_strided_slice %174 {offsets = [0, 32], sizes = [16, 32], strides = [1, 1]} : vector<16x128xf32> to vector<16x32xf32>
    %177 = vector.extract_strided_slice %174 {offsets = [0, 96], sizes = [16, 32], strides = [1, 1]} : vector<16x128xf32> to vector<16x32xf32>
    %178 = vector.extract_strided_slice %169 {offsets = [0, 64], sizes = [16, 32], strides = [1, 1]} : vector<16x128xf32> to vector<16x32xf32>
    %179 = math.tanh %178 : vector<16x32xf32>
    %180 = arith.mulf %176, %56 : vector<16x32xf32>
    %181 = arith.mulf %175, %179 : vector<16x32xf32>
    %182 = arith.addf %180, %181 : vector<16x32xf32>
    %183 = math.tanh %182 : vector<16x32xf32>
    %184 = arith.mulf %177, %183 : vector<16x32xf32>
    %cst_123 = arith.constant dense<0.000000e+00> : vector<1x32xf32>
    %185 = tpu.matmul %4, %184, %cst_123 {dimension_numbers = #tpu.dot_dimension_numbers<[1], [0], [0], [1], [0, 0, 1, 1], [], []>} : vector<1x16xf32>, vector<16x32xf32>, vector<1x32xf32> -> vector<1x32xf32>
    %cst_124 = arith.constant 0.0833333358 : f32
    %186 = vector.broadcast %cst_124 : f32 to vector<1x32xf32>
    %187 = arith.mulf %185, %186 : vector<1x32xf32>
    %c1_125 = arith.constant 1 : index
    %c0_126 = arith.constant 0 : index
    %c0_127 = arith.constant 0 : index
    %c0_128 = arith.constant 0 : index
    %188 = vector.load %arg10[%c1_125, %c0_126, %c0_127, %c0_128] : memref<2x2x1x32xf32, #tpu.memory_space<vmem>>, vector<1x1x1x32xf32>
    %189 = vector.shape_cast %188 : vector<1x1x1x32xf32> to vector<1x32xf32>
    %190 = arith.mulf %187, %189 : vector<1x32xf32>
    %191 = vector.broadcast %190 : vector<1x32xf32> to vector<16x32xf32>
    %192 = arith.subf %184, %191 : vector<16x32xf32>
    %193 = arith.mulf %192, %192 : vector<16x32xf32>
    %cst_129 = arith.constant dense<0.000000e+00> : vector<1x32xf32>
    %194 = tpu.matmul %4, %193, %cst_129 {dimension_numbers = #tpu.dot_dimension_numbers<[1], [0], [0], [1], [0, 0, 1, 1], [], []>} : vector<1x16xf32>, vector<16x32xf32>, vector<1x32xf32> -> vector<1x32xf32>
    %cst_130 = arith.constant 0.0833333358 : f32
    %195 = vector.broadcast %cst_130 : f32 to vector<1x32xf32>
    %196 = arith.mulf %194, %195 : vector<1x32xf32>
    %c1_131 = arith.constant 1 : index
    %c0_132 = arith.constant 0 : index
    %c0_133 = arith.constant 0 : index
    %c0_134 = arith.constant 0 : index
    %197 = vector.load %arg8[%c1_131, %c0_132, %c0_133, %c0_134] : memref<2x2x1x32xf32, #tpu.memory_space<vmem>>, vector<1x1x1x32xf32>
    %198 = vector.shape_cast %197 : vector<1x1x1x32xf32> to vector<1x32xf32>
    %199 = vector.broadcast %198 : vector<1x32xf32> to vector<16x32xf32>
    %200 = arith.mulf %199, %192 : vector<16x32xf32>
    %cst_135 = arith.constant 9.99999974E-6 : f32
    %201 = vector.broadcast %cst_135 : f32 to vector<1x32xf32>
    %202 = arith.addf %196, %201 : vector<1x32xf32>
    %203 = math.rsqrt %202 : vector<1x32xf32>
    %204 = vector.broadcast %203 : vector<1x32xf32> to vector<16x32xf32>
    %205 = arith.mulf %200, %204 : vector<16x32xf32>
    %c1_136 = arith.constant 1 : index
    %c0_137 = arith.constant 0 : index
    %c0_138 = arith.constant 0 : index
    %c0_139 = arith.constant 0 : index
    %206 = vector.load %arg9[%c1_136, %c0_137, %c0_138, %c0_139] : memref<2x2x1x32xf32, #tpu.memory_space<vmem>>, vector<1x1x1x32xf32>
    %207 = vector.shape_cast %206 : vector<1x1x1x32xf32> to vector<1x32xf32>
    %208 = vector.broadcast %207 : vector<1x32xf32> to vector<16x32xf32>
    %209 = arith.addf %205, %208 : vector<16x32xf32>
    %c1_140 = arith.constant 1 : index
    %c0_141 = arith.constant 0 : index
    %c0_142 = arith.constant 0 : index
    %210 = vector.load %arg4[%c1_140, %c0_141, %c0_142] : memref<2x16x16xbf16, #tpu.memory_space<vmem>>, vector<1x16x16xbf16>
    %211 = vector.shape_cast %210 : vector<1x16x16xbf16> to vector<16x16xbf16>
    %cst_143 = arith.constant dense<0.000000e+00> : vector<16x32xf32>
    %212 = tpu.matmul %211, %143, %cst_143 {dimension_numbers = #tpu.dot_dimension_numbers<[1], [0], [0], [1], [0, 0, 1, 1], [], []>} : vector<16x16xbf16>, vector<16x32xbf16>, vector<16x32xf32> -> vector<16x32xf32>
    %213 = arith.truncf %212 : vector<16x32xf32> to vector<16x32xbf16>
    %c1_144 = arith.constant 1 : index
    %c0_145 = arith.constant 0 : index
    %c64_146 = arith.constant 64 : index
    %214 = vector.load %arg15[%c1_144, %c0_145, %c64_146] : memref<2x16x128xbf16, #tpu.memory_space<vmem>>, vector<1x16x32xbf16>
    %215 = vector.shape_cast %214 : vector<1x16x32xbf16> to vector<16x32xbf16>
    %216 = vector.shape_cast %213 : vector<16x32xbf16> to vector<1x16x32xbf16>
    tpu.vector_store %arg15[%c1_144, %c0_145, %c64_146], %216 {strides = array<i32>} : memref<2x16x128xbf16, #tpu.memory_space<vmem>>, vector<1x16x32xbf16>,
    %c1_147 = arith.constant 1 : index
    %c0_148 = arith.constant 0 : index
    %c96_149 = arith.constant 96 : index
    %217 = vector.load %arg15[%c1_147, %c0_148, %c96_149] : memref<2x16x128xbf16, #tpu.memory_space<vmem>>, vector<1x16x32xbf16>
    %218 = vector.shape_cast %217 : vector<1x16x32xbf16> to vector<16x32xbf16>
    %219 = vector.shape_cast %144 : vector<16x32xbf16> to vector<1x16x32xbf16>
    tpu.vector_store %arg15[%c1_147, %c0_148, %c96_149], %219 {strides = array<i32>} : memref<2x16x128xbf16, #tpu.memory_space<vmem>>, vector<1x16x32xbf16>,
    %c1_150 = arith.constant 1 : index
    %c0_151 = arith.constant 0 : index
    %c0_152 = arith.constant 0 : index
    %220 = vector.load %arg15[%c1_150, %c0_151, %c0_152] : memref<2x16x128xbf16, #tpu.memory_space<vmem>>, vector<1x16x128xbf16>
    %221 = vector.shape_cast %220 : vector<1x16x128xbf16> to vector<16x128xbf16>
    %c1_153 = arith.constant 1 : index
    %c1_154 = arith.constant 1 : index
    %c0_155 = arith.constant 0 : index
    %c0_156 = arith.constant 0 : index
    %222 = vector.load %arg6[%c1_153, %c1_154, %c0_155, %c0_156] : memref<2x2x128x128xbf16, #tpu.memory_space<vmem>>, vector<1x1x128x128xbf16>
    %223 = vector.shape_cast %222 : vector<1x1x128x128xbf16> to vector<128x128xbf16>
    %cst_157 = arith.constant dense<0.000000e+00> : vector<16x128xf32>
    %224 = tpu.matmul %221, %223, %cst_157 {dimension_numbers = #tpu.dot_dimension_numbers<[1], [0], [0], [1], [0, 0, 1, 1], [], []>} : vector<16x128xbf16>, vector<128x128xbf16>, vector<16x128xf32> -> vector<16x128xf32>
    %c1_158 = arith.constant 1 : index
    %c1_159 = arith.constant 1 : index
    %c0_160 = arith.constant 0 : index
    %c0_161 = arith.constant 0 : index
    %225 = vector.load %arg7[%c1_158, %c1_159, %c0_160, %c0_161] : memref<2x2x1x128xf32, #tpu.memory_space<vmem>>, vector<1x1x1x128xf32>
    %226 = vector.shape_cast %225 : vector<1x1x1x128xf32> to vector<1x128xf32>
    %227 = vector.broadcast %226 : vector<1x128xf32> to vector<16x128xf32>
    %228 = arith.addf %224, %227 : vector<16x128xf32>
    %229 = arith.negf %228 : vector<16x128xf32>
    %230 = math.exp %229 : vector<16x128xf32>
    %cst_162 = arith.constant 1.000000e+00 : f32
    %231 = vector.broadcast %cst_162 : f32 to vector<16x128xf32>
    %232 = arith.addf %231, %230 : vector<16x128xf32>
    %233 = arith.divf %231, %232 : vector<16x128xf32>
    %234 = vector.extract_strided_slice %233 {offsets = [0, 0], sizes = [16, 32], strides = [1, 1]} : vector<16x128xf32> to vector<16x32xf32>
    %235 = vector.extract_strided_slice %233 {offsets = [0, 32], sizes = [16, 32], strides = [1, 1]} : vector<16x128xf32> to vector<16x32xf32>
    %236 = vector.extract_strided_slice %233 {offsets = [0, 96], sizes = [16, 32], strides = [1, 1]} : vector<16x128xf32> to vector<16x32xf32>
    %237 = vector.extract_strided_slice %228 {offsets = [0, 64], sizes = [16, 32], strides = [1, 1]} : vector<16x128xf32> to vector<16x32xf32>
    %238 = math.tanh %237 : vector<16x32xf32>
    %239 = arith.mulf %235, %115 : vector<16x32xf32>
    %240 = arith.mulf %234, %238 : vector<16x32xf32>
    %241 = arith.addf %239, %240 : vector<16x32xf32>
    %242 = math.tanh %241 : vector<16x32xf32>
    %243 = arith.mulf %236, %242 : vector<16x32xf32>
    %cst_163 = arith.constant dense<0.000000e+00> : vector<1x32xf32>
    %244 = tpu.matmul %8, %243, %cst_163 {dimension_numbers = #tpu.dot_dimension_numbers<[1], [0], [0], [1], [0, 0, 1, 1], [], []>} : vector<1x16xf32>, vector<16x32xf32>, vector<1x32xf32> -> vector<1x32xf32>
    %cst_164 = arith.constant 1.000000e-01 : f32
    %245 = vector.broadcast %cst_164 : f32 to vector<1x32xf32>
    %246 = arith.mulf %244, %245 : vector<1x32xf32>
    %c1_165 = arith.constant 1 : index
    %c1_166 = arith.constant 1 : index
    %c0_167 = arith.constant 0 : index
    %c0_168 = arith.constant 0 : index
    %247 = vector.load %arg10[%c1_165, %c1_166, %c0_167, %c0_168] : memref<2x2x1x32xf32, #tpu.memory_space<vmem>>, vector<1x1x1x32xf32>
    %248 = vector.shape_cast %247 : vector<1x1x1x32xf32> to vector<1x32xf32>
    %249 = arith.mulf %246, %248 : vector<1x32xf32>
    %250 = vector.broadcast %249 : vector<1x32xf32> to vector<16x32xf32>
    %251 = arith.subf %243, %250 : vector<16x32xf32>
    %252 = arith.mulf %251, %251 : vector<16x32xf32>
    %cst_169 = arith.constant dense<0.000000e+00> : vector<1x32xf32>
    %253 = tpu.matmul %8, %252, %cst_169 {dimension_numbers = #tpu.dot_dimension_numbers<[1], [0], [0], [1], [0, 0, 1, 1], [], []>} : vector<1x16xf32>, vector<16x32xf32>, vector<1x32xf32> -> vector<1x32xf32>
    %cst_170 = arith.constant 1.000000e-01 : f32
    %254 = vector.broadcast %cst_170 : f32 to vector<1x32xf32>
    %255 = arith.mulf %253, %254 : vector<1x32xf32>
    %c1_171 = arith.constant 1 : index
    %c1_172 = arith.constant 1 : index
    %c0_173 = arith.constant 0 : index
    %c0_174 = arith.constant 0 : index
    %256 = vector.load %arg8[%c1_171, %c1_172, %c0_173, %c0_174] : memref<2x2x1x32xf32, #tpu.memory_space<vmem>>, vector<1x1x1x32xf32>
    %257 = vector.shape_cast %256 : vector<1x1x1x32xf32> to vector<1x32xf32>
    %258 = vector.broadcast %257 : vector<1x32xf32> to vector<16x32xf32>
    %259 = arith.mulf %258, %251 : vector<16x32xf32>
    %cst_175 = arith.constant 9.99999974E-6 : f32
    %260 = vector.broadcast %cst_175 : f32 to vector<1x32xf32>
    %261 = arith.addf %255, %260 : vector<1x32xf32>
    %262 = math.rsqrt %261 : vector<1x32xf32>
    %263 = vector.broadcast %262 : vector<1x32xf32> to vector<16x32xf32>
    %264 = arith.mulf %259, %263 : vector<16x32xf32>
    %c1_176 = arith.constant 1 : index
    %c1_177 = arith.constant 1 : index
    %c0_178 = arith.constant 0 : index
    %c0_179 = arith.constant 0 : index
    %265 = vector.load %arg9[%c1_176, %c1_177, %c0_178, %c0_179] : memref<2x2x1x32xf32, #tpu.memory_space<vmem>>, vector<1x1x1x32xf32>
    %266 = vector.shape_cast %265 : vector<1x1x1x32xf32> to vector<1x32xf32>
    %267 = vector.broadcast %266 : vector<1x32xf32> to vector<16x32xf32>
    %268 = arith.addf %264, %267 : vector<16x32xf32>
    %269 = arith.truncf %209 : vector<16x32xf32> to vector<16x32xbf16>
    %c0_180 = arith.constant 0 : index
    %c0_181 = arith.constant 0 : index
    %270 = vector.load %arg11[%c0_180, %c0_181] : memref<32x32xbf16, #tpu.memory_space<vmem>>, vector<32x32xbf16>
    %cst_182 = arith.constant dense<0.000000e+00> : vector<16x32xf32>
    %271 = tpu.matmul %269, %270, %cst_182 {dimension_numbers = #tpu.dot_dimension_numbers<[1], [0], [0], [1], [0, 0, 1, 1], [], []>} : vector<16x32xbf16>, vector<32x32xbf16>, vector<16x32xf32> -> vector<16x32xf32>
    %c0_183 = arith.constant 0 : index
    %c0_184 = arith.constant 0 : index
    %272 = vector.load %arg12[%c0_183, %c0_184] : memref<1x32xf32, #tpu.memory_space<vmem>>, vector<1x32xf32>
    %273 = vector.broadcast %272 : vector<1x32xf32> to vector<16x32xf32>
    %274 = arith.addf %271, %273 : vector<16x32xf32>
    %275 = arith.addf %209, %274 : vector<16x32xf32>
    %c0_185 = arith.constant 0 : index
    %c0_186 = arith.constant 0 : index
    %276 = vector.load %arg13[%c0_185, %c0_186] : memref<16x128xf32, #tpu.memory_space<vmem>>, vector<16x32xf32>
    tpu.vector_store %arg13[%c0_185, %c0_186], %275 {strides = array<i32>} : memref<16x128xf32, #tpu.memory_space<vmem>>, vector<16x32xf32>,
    %c0_187 = arith.constant 0 : index
    %c32_188 = arith.constant 32 : index
    %277 = vector.load %arg13[%c0_187, %c32_188] : memref<16x128xf32, #tpu.memory_space<vmem>>, vector<16x32xf32>
    tpu.vector_store %arg13[%c0_187, %c32_188], %268 {strides = array<i32>} : memref<16x128xf32, #tpu.memory_space<vmem>>, vector<16x32xf32>,
    %c0_189 = arith.constant 0 : index
    %c64_190 = arith.constant 64 : index
    %278 = vector.load %arg13[%c0_189, %c64_190] : memref<16x128xf32, #tpu.memory_space<vmem>>, vector<16x32xf32>
    tpu.vector_store %arg13[%c0_189, %c64_190], %182 {strides = array<i32>} : memref<16x128xf32, #tpu.memory_space<vmem>>, vector<16x32xf32>,
    %c0_191 = arith.constant 0 : index
    %c96_192 = arith.constant 96 : index
    %279 = vector.load %arg13[%c0_191, %c96_192] : memref<16x128xf32, #tpu.memory_space<vmem>>, vector<16x32xf32>
    tpu.vector_store %arg13[%c0_191, %c96_192], %241 {strides = array<i32>} : memref<16x128xf32, #tpu.memory_space<vmem>>, vector<16x32xf32>,
    %c0_193 = arith.constant 0 : index
    %c0_194 = arith.constant 0 : index
    %280 = vector.load %arg16[%c0_193, %c0_194] : memref<16x32xf32, #tpu.memory_space<vmem>>, vector<16x32xf32>
    tpu.vector_store %arg16[%c0_193, %c0_194], %275 {strides = array<i32>} : memref<16x32xf32, #tpu.memory_space<vmem>>, vector<16x32xf32>,
    %c0_195 = arith.constant 0 : index
    %c0_196 = arith.constant 0 : index
    %281 = vector.load %arg17[%c0_195, %c0_196] : memref<16x32xf32, #tpu.memory_space<vmem>>, vector<16x32xf32>
    tpu.vector_store %arg17[%c0_195, %c0_196], %268 {strides = array<i32>} : memref<16x32xf32, #tpu.memory_space<vmem>>, vector<16x32xf32>,
    %cst_197 = arith.constant 0.000000e+00 : f32
    %282 = vector.broadcast %cst_197 : f32 to vector<16x32xf32>
    %c0_198 = arith.constant 0 : index
    %c0_199 = arith.constant 0 : index
    %283 = vector.load %arg18[%c0_198, %c0_199] : memref<16x32xf32, #tpu.memory_space<vmem>>, vector<16x32xf32>
    tpu.vector_store %arg18[%c0_198, %c0_199], %282 {strides = array<i32>} : memref<16x32xf32, #tpu.memory_space<vmem>>, vector<16x32xf32>,
    %cst_200 = arith.constant 0.000000e+00 : f32
    %284 = vector.broadcast %cst_200 : f32 to vector<16x32xf32>
    %c0_201 = arith.constant 0 : index
    %c0_202 = arith.constant 0 : index
    %285 = vector.load %arg19[%c0_201, %c0_202] : memref<16x32xf32, #tpu.memory_space<vmem>>, vector<16x32xf32>
    tpu.vector_store %arg19[%c0_201, %c0_202], %284 {strides = array<i32>} : memref<16x32xf32, #tpu.memory_space<vmem>>, vector<16x32xf32>,
    %c0_203 = arith.constant 0 : index
    %286 = memref.load %arg1[%c0_203] : memref<12xi32, #tpu.memory_space<smem>>
    %c0_204 = arith.constant 0 : index
    %287 = memref.load %arg2[%c0_204] : memref<12xi32, #tpu.memory_space<smem>>
    %288 = arith.index_cast %286 : i32 to index
    %c0_205 = arith.constant 0 : index
    %289 = vector.load %arg16[%288, %c0_205] : memref<16x32xf32, #tpu.memory_space<vmem>>, vector<1x32xf32>
    %c0_206 = arith.constant 0 : index
    %c0_207 = arith.constant 0 : index
    %290 = vector.load %arg18[%c0_206, %c0_207] : memref<16x32xf32, #tpu.memory_space<vmem>>, vector<1x32xf32>
    tpu.vector_store %arg18[%c0_206, %c0_207], %289 {strides = array<i32>} : memref<16x32xf32, #tpu.memory_space<vmem>>, vector<1x32xf32>,
    %291 = arith.index_cast %287 : i32 to index
    %c0_208 = arith.constant 0 : index
    %292 = vector.load %arg17[%291, %c0_208] : memref<16x32xf32, #tpu.memory_space<vmem>>, vector<1x32xf32>
    %c0_209 = arith.constant 0 : index
    %c0_210 = arith.constant 0 : index
    %293 = vector.load %arg19[%c0_209, %c0_210] : memref<16x32xf32, #tpu.memory_space<vmem>>, vector<1x32xf32>
    tpu.vector_store %arg19[%c0_209, %c0_210], %292 {strides = array<i32>} : memref<16x32xf32, #tpu.memory_space<vmem>>, vector<1x32xf32>,
    %c1_211 = arith.constant 1 : index
    %294 = memref.load %arg1[%c1_211] : memref<12xi32, #tpu.memory_space<smem>>
    %c1_212 = arith.constant 1 : index
    %295 = memref.load %arg2[%c1_212] : memref<12xi32, #tpu.memory_space<smem>>
    %296 = arith.index_cast %294 : i32 to index
    %c0_213 = arith.constant 0 : index
    %297 = vector.load %arg16[%296, %c0_213] : memref<16x32xf32, #tpu.memory_space<vmem>>, vector<1x32xf32>
    %c1_214 = arith.constant 1 : index
    %c0_215 = arith.constant 0 : index
    %298 = vector.load %arg18[%c1_214, %c0_215] : memref<16x32xf32, #tpu.memory_space<vmem>>, vector<1x32xf32>
    tpu.vector_store %arg18[%c1_214, %c0_215], %297 {strides = array<i32>} : memref<16x32xf32, #tpu.memory_space<vmem>>, vector<1x32xf32>,
    %299 = arith.index_cast %295 : i32 to index
    %c0_216 = arith.constant 0 : index
    %300 = vector.load %arg17[%299, %c0_216] : memref<16x32xf32, #tpu.memory_space<vmem>>, vector<1x32xf32>
    %c1_217 = arith.constant 1 : index
    %c0_218 = arith.constant 0 : index
    %301 = vector.load %arg19[%c1_217, %c0_218] : memref<16x32xf32, #tpu.memory_space<vmem>>, vector<1x32xf32>
    tpu.vector_store %arg19[%c1_217, %c0_218], %300 {strides = array<i32>} : memref<16x32xf32, #tpu.memory_space<vmem>>, vector<1x32xf32>,
    %c2 = arith.constant 2 : index
    %302 = memref.load %arg1[%c2] : memref<12xi32, #tpu.memory_space<smem>>
    %c2_219 = arith.constant 2 : index
    %303 = memref.load %arg2[%c2_219] : memref<12xi32, #tpu.memory_space<smem>>
    %304 = arith.index_cast %302 : i32 to index
    %c0_220 = arith.constant 0 : index
    %305 = vector.load %arg16[%304, %c0_220] : memref<16x32xf32, #tpu.memory_space<vmem>>, vector<1x32xf32>
    %c2_221 = arith.constant 2 : index
    %c0_222 = arith.constant 0 : index
    %306 = vector.load %arg18[%c2_221, %c0_222] : memref<16x32xf32, #tpu.memory_space<vmem>>, vector<1x32xf32>
    tpu.vector_store %arg18[%c2_221, %c0_222], %305 {strides = array<i32>} : memref<16x32xf32, #tpu.memory_space<vmem>>, vector<1x32xf32>,
    %307 = arith.index_cast %303 : i32 to index
    %c0_223 = arith.constant 0 : index
    %308 = vector.load %arg17[%307, %c0_223] : memref<16x32xf32, #tpu.memory_space<vmem>>, vector<1x32xf32>
    %c2_224 = arith.constant 2 : index
    %c0_225 = arith.constant 0 : index
    %309 = vector.load %arg19[%c2_224, %c0_225] : memref<16x32xf32, #tpu.memory_space<vmem>>, vector<1x32xf32>
    tpu.vector_store %arg19[%c2_224, %c0_225], %308 {strides = array<i32>} : memref<16x32xf32, #tpu.memory_space<vmem>>, vector<1x32xf32>,
    %c3 = arith.constant 3 : index
    %310 = memref.load %arg1[%c3] : memref<12xi32, #tpu.memory_space<smem>>
    %c3_226 = arith.constant 3 : index
    %311 = memref.load %arg2[%c3_226] : memref<12xi32, #tpu.memory_space<smem>>
    %312 = arith.index_cast %310 : i32 to index
    %c0_227 = arith.constant 0 : index
    %313 = vector.load %arg16[%312, %c0_227] : memref<16x32xf32, #tpu.memory_space<vmem>>, vector<1x32xf32>
    %c3_228 = arith.constant 3 : index
    %c0_229 = arith.constant 0 : index
    %314 = vector.load %arg18[%c3_228, %c0_229] : memref<16x32xf32, #tpu.memory_space<vmem>>, vector<1x32xf32>
    tpu.vector_store %arg18[%c3_228, %c0_229], %313 {strides = array<i32>} : memref<16x32xf32, #tpu.memory_space<vmem>>, vector<1x32xf32>,
    %315 = arith.index_cast %311 : i32 to index
    %c0_230 = arith.constant 0 : index
    %316 = vector.load %arg17[%315, %c0_230] : memref<16x32xf32, #tpu.memory_space<vmem>>, vector<1x32xf32>
    %c3_231 = arith.constant 3 : index
    %c0_232 = arith.constant 0 : index
    %317 = vector.load %arg19[%c3_231, %c0_232] : memref<16x32xf32, #tpu.memory_space<vmem>>, vector<1x32xf32>
    tpu.vector_store %arg19[%c3_231, %c0_232], %316 {strides = array<i32>} : memref<16x32xf32, #tpu.memory_space<vmem>>, vector<1x32xf32>,
    %c4 = arith.constant 4 : index
    %318 = memref.load %arg1[%c4] : memref<12xi32, #tpu.memory_space<smem>>
    %c4_233 = arith.constant 4 : index
    %319 = memref.load %arg2[%c4_233] : memref<12xi32, #tpu.memory_space<smem>>
    %320 = arith.index_cast %318 : i32 to index
    %c0_234 = arith.constant 0 : index
    %321 = vector.load %arg16[%320, %c0_234] : memref<16x32xf32, #tpu.memory_space<vmem>>, vector<1x32xf32>
    %c4_235 = arith.constant 4 : index
    %c0_236 = arith.constant 0 : index
    %322 = vector.load %arg18[%c4_235, %c0_236] : memref<16x32xf32, #tpu.memory_space<vmem>>, vector<1x32xf32>
    tpu.vector_store %arg18[%c4_235, %c0_236], %321 {strides = array<i32>} : memref<16x32xf32, #tpu.memory_space<vmem>>, vector<1x32xf32>,
    %323 = arith.index_cast %319 : i32 to index
    %c0_237 = arith.constant 0 : index
    %324 = vector.load %arg17[%323, %c0_237] : memref<16x32xf32, #tpu.memory_space<vmem>>, vector<1x32xf32>
    %c4_238 = arith.constant 4 : index
    %c0_239 = arith.constant 0 : index
    %325 = vector.load %arg19[%c4_238, %c0_239] : memref<16x32xf32, #tpu.memory_space<vmem>>, vector<1x32xf32>
    tpu.vector_store %arg19[%c4_238, %c0_239], %324 {strides = array<i32>} : memref<16x32xf32, #tpu.memory_space<vmem>>, vector<1x32xf32>,
    %c5 = arith.constant 5 : index
    %326 = memref.load %arg1[%c5] : memref<12xi32, #tpu.memory_space<smem>>
    %c5_240 = arith.constant 5 : index
    %327 = memref.load %arg2[%c5_240] : memref<12xi32, #tpu.memory_space<smem>>
    %328 = arith.index_cast %326 : i32 to index
    %c0_241 = arith.constant 0 : index
    %329 = vector.load %arg16[%328, %c0_241] : memref<16x32xf32, #tpu.memory_space<vmem>>, vector<1x32xf32>
    %c5_242 = arith.constant 5 : index
    %c0_243 = arith.constant 0 : index
    %330 = vector.load %arg18[%c5_242, %c0_243] : memref<16x32xf32, #tpu.memory_space<vmem>>, vector<1x32xf32>
    tpu.vector_store %arg18[%c5_242, %c0_243], %329 {strides = array<i32>} : memref<16x32xf32, #tpu.memory_space<vmem>>, vector<1x32xf32>,
    %331 = arith.index_cast %327 : i32 to index
    %c0_244 = arith.constant 0 : index
    %332 = vector.load %arg17[%331, %c0_244] : memref<16x32xf32, #tpu.memory_space<vmem>>, vector<1x32xf32>
    %c5_245 = arith.constant 5 : index
    %c0_246 = arith.constant 0 : index
    %333 = vector.load %arg19[%c5_245, %c0_246] : memref<16x32xf32, #tpu.memory_space<vmem>>, vector<1x32xf32>
    tpu.vector_store %arg19[%c5_245, %c0_246], %332 {strides = array<i32>} : memref<16x32xf32, #tpu.memory_space<vmem>>, vector<1x32xf32>,
    %c6 = arith.constant 6 : index
    %334 = memref.load %arg1[%c6] : memref<12xi32, #tpu.memory_space<smem>>
    %c6_247 = arith.constant 6 : index
    %335 = memref.load %arg2[%c6_247] : memref<12xi32, #tpu.memory_space<smem>>
    %336 = arith.index_cast %334 : i32 to index
    %c0_248 = arith.constant 0 : index
    %337 = vector.load %arg16[%336, %c0_248] : memref<16x32xf32, #tpu.memory_space<vmem>>, vector<1x32xf32>
    %c6_249 = arith.constant 6 : index
    %c0_250 = arith.constant 0 : index
    %338 = vector.load %arg18[%c6_249, %c0_250] : memref<16x32xf32, #tpu.memory_space<vmem>>, vector<1x32xf32>
    tpu.vector_store %arg18[%c6_249, %c0_250], %337 {strides = array<i32>} : memref<16x32xf32, #tpu.memory_space<vmem>>, vector<1x32xf32>,
    %339 = arith.index_cast %335 : i32 to index
    %c0_251 = arith.constant 0 : index
    %340 = vector.load %arg17[%339, %c0_251] : memref<16x32xf32, #tpu.memory_space<vmem>>, vector<1x32xf32>
    %c6_252 = arith.constant 6 : index
    %c0_253 = arith.constant 0 : index
    %341 = vector.load %arg19[%c6_252, %c0_253] : memref<16x32xf32, #tpu.memory_space<vmem>>, vector<1x32xf32>
    tpu.vector_store %arg19[%c6_252, %c0_253], %340 {strides = array<i32>} : memref<16x32xf32, #tpu.memory_space<vmem>>, vector<1x32xf32>,
    %c7 = arith.constant 7 : index
    %342 = memref.load %arg1[%c7] : memref<12xi32, #tpu.memory_space<smem>>
    %c7_254 = arith.constant 7 : index
    %343 = memref.load %arg2[%c7_254] : memref<12xi32, #tpu.memory_space<smem>>
    %344 = arith.index_cast %342 : i32 to index
    %c0_255 = arith.constant 0 : index
    %345 = vector.load %arg16[%344, %c0_255] : memref<16x32xf32, #tpu.memory_space<vmem>>, vector<1x32xf32>
    %c7_256 = arith.constant 7 : index
    %c0_257 = arith.constant 0 : index
    %346 = vector.load %arg18[%c7_256, %c0_257] : memref<16x32xf32, #tpu.memory_space<vmem>>, vector<1x32xf32>
    tpu.vector_store %arg18[%c7_256, %c0_257], %345 {strides = array<i32>} : memref<16x32xf32, #tpu.memory_space<vmem>>, vector<1x32xf32>,
    %347 = arith.index_cast %343 : i32 to index
    %c0_258 = arith.constant 0 : index
    %348 = vector.load %arg17[%347, %c0_258] : memref<16x32xf32, #tpu.memory_space<vmem>>, vector<1x32xf32>
    %c7_259 = arith.constant 7 : index
    %c0_260 = arith.constant 0 : index
    %349 = vector.load %arg19[%c7_259, %c0_260] : memref<16x32xf32, #tpu.memory_space<vmem>>, vector<1x32xf32>
    tpu.vector_store %arg19[%c7_259, %c0_260], %348 {strides = array<i32>} : memref<16x32xf32, #tpu.memory_space<vmem>>, vector<1x32xf32>,
    %c8 = arith.constant 8 : index
    %350 = memref.load %arg1[%c8] : memref<12xi32, #tpu.memory_space<smem>>
    %c8_261 = arith.constant 8 : index
    %351 = memref.load %arg2[%c8_261] : memref<12xi32, #tpu.memory_space<smem>>
    %352 = arith.index_cast %350 : i32 to index
    %c0_262 = arith.constant 0 : index
    %353 = vector.load %arg16[%352, %c0_262] : memref<16x32xf32, #tpu.memory_space<vmem>>, vector<1x32xf32>
    %c8_263 = arith.constant 8 : index
    %c0_264 = arith.constant 0 : index
    %354 = vector.load %arg18[%c8_263, %c0_264] : memref<16x32xf32, #tpu.memory_space<vmem>>, vector<1x32xf32>
    tpu.vector_store %arg18[%c8_263, %c0_264], %353 {strides = array<i32>} : memref<16x32xf32, #tpu.memory_space<vmem>>, vector<1x32xf32>,
    %355 = arith.index_cast %351 : i32 to index
    %c0_265 = arith.constant 0 : index
    %356 = vector.load %arg17[%355, %c0_265] : memref<16x32xf32, #tpu.memory_space<vmem>>, vector<1x32xf32>
    %c8_266 = arith.constant 8 : index
    %c0_267 = arith.constant 0 : index
    %357 = vector.load %arg19[%c8_266, %c0_267] : memref<16x32xf32, #tpu.memory_space<vmem>>, vector<1x32xf32>
    tpu.vector_store %arg19[%c8_266, %c0_267], %356 {strides = array<i32>} : memref<16x32xf32, #tpu.memory_space<vmem>>, vector<1x32xf32>,
    %c9 = arith.constant 9 : index
    %358 = memref.load %arg1[%c9] : memref<12xi32, #tpu.memory_space<smem>>
    %c9_268 = arith.constant 9 : index
    %359 = memref.load %arg2[%c9_268] : memref<12xi32, #tpu.memory_space<smem>>
    %360 = arith.index_cast %358 : i32 to index
    %c0_269 = arith.constant 0 : index
    %361 = vector.load %arg16[%360, %c0_269] : memref<16x32xf32, #tpu.memory_space<vmem>>, vector<1x32xf32>
    %c9_270 = arith.constant 9 : index
    %c0_271 = arith.constant 0 : index
    %362 = vector.load %arg18[%c9_270, %c0_271] : memref<16x32xf32, #tpu.memory_space<vmem>>, vector<1x32xf32>
    tpu.vector_store %arg18[%c9_270, %c0_271], %361 {strides = array<i32>} : memref<16x32xf32, #tpu.memory_space<vmem>>, vector<1x32xf32>,
    %363 = arith.index_cast %359 : i32 to index
    %c0_272 = arith.constant 0 : index
    %364 = vector.load %arg17[%363, %c0_272] : memref<16x32xf32, #tpu.memory_space<vmem>>, vector<1x32xf32>
    %c9_273 = arith.constant 9 : index
    %c0_274 = arith.constant 0 : index
    %365 = vector.load %arg19[%c9_273, %c0_274] : memref<16x32xf32, #tpu.memory_space<vmem>>, vector<1x32xf32>
    tpu.vector_store %arg19[%c9_273, %c0_274], %364 {strides = array<i32>} : memref<16x32xf32, #tpu.memory_space<vmem>>, vector<1x32xf32>,
    %c10 = arith.constant 10 : index
    %366 = memref.load %arg1[%c10] : memref<12xi32, #tpu.memory_space<smem>>
    %c10_275 = arith.constant 10 : index
    %367 = memref.load %arg2[%c10_275] : memref<12xi32, #tpu.memory_space<smem>>
    %368 = arith.index_cast %366 : i32 to index
    %c0_276 = arith.constant 0 : index
    %369 = vector.load %arg16[%368, %c0_276] : memref<16x32xf32, #tpu.memory_space<vmem>>, vector<1x32xf32>
    %c10_277 = arith.constant 10 : index
    %c0_278 = arith.constant 0 : index
    %370 = vector.load %arg18[%c10_277, %c0_278] : memref<16x32xf32, #tpu.memory_space<vmem>>, vector<1x32xf32>
    tpu.vector_store %arg18[%c10_277, %c0_278], %369 {strides = array<i32>} : memref<16x32xf32, #tpu.memory_space<vmem>>, vector<1x32xf32>,
    %371 = arith.index_cast %367 : i32 to index
    %c0_279 = arith.constant 0 : index
    %372 = vector.load %arg17[%371, %c0_279] : memref<16x32xf32, #tpu.memory_space<vmem>>, vector<1x32xf32>
    %c10_280 = arith.constant 10 : index
    %c0_281 = arith.constant 0 : index
    %373 = vector.load %arg19[%c10_280, %c0_281] : memref<16x32xf32, #tpu.memory_space<vmem>>, vector<1x32xf32>
    tpu.vector_store %arg19[%c10_280, %c0_281], %372 {strides = array<i32>} : memref<16x32xf32, #tpu.memory_space<vmem>>, vector<1x32xf32>,
    %c11 = arith.constant 11 : index
    %374 = memref.load %arg1[%c11] : memref<12xi32, #tpu.memory_space<smem>>
    %c11_282 = arith.constant 11 : index
    %375 = memref.load %arg2[%c11_282] : memref<12xi32, #tpu.memory_space<smem>>
    %376 = arith.index_cast %374 : i32 to index
    %c0_283 = arith.constant 0 : index
    %377 = vector.load %arg16[%376, %c0_283] : memref<16x32xf32, #tpu.memory_space<vmem>>, vector<1x32xf32>
    %c11_284 = arith.constant 11 : index
    %c0_285 = arith.constant 0 : index
    %378 = vector.load %arg18[%c11_284, %c0_285] : memref<16x32xf32, #tpu.memory_space<vmem>>, vector<1x32xf32>
    tpu.vector_store %arg18[%c11_284, %c0_285], %377 {strides = array<i32>} : memref<16x32xf32, #tpu.memory_space<vmem>>, vector<1x32xf32>,
    %379 = arith.index_cast %375 : i32 to index
    %c0_286 = arith.constant 0 : index
    %380 = vector.load %arg17[%379, %c0_286] : memref<16x32xf32, #tpu.memory_space<vmem>>, vector<1x32xf32>
    %c11_287 = arith.constant 11 : index
    %c0_288 = arith.constant 0 : index
    %381 = vector.load %arg19[%c11_287, %c0_288] : memref<16x32xf32, #tpu.memory_space<vmem>>, vector<1x32xf32>
    tpu.vector_store %arg19[%c11_287, %c0_288], %380 {strides = array<i32>} : memref<16x32xf32, #tpu.memory_space<vmem>>, vector<1x32xf32>,
    %cst_289 = arith.constant 1.000000e+00 : f32
    %382 = vector.broadcast %cst_289 : f32 to vector<32x1xf32>
    %c0_290 = arith.constant 0 : index
    %c0_291 = arith.constant 0 : index
    %383 = vector.load %arg18[%c0_290, %c0_291] : memref<16x32xf32, #tpu.memory_space<vmem>>, vector<16x32xf32>
    %c0_292 = arith.constant 0 : index
    %c0_293 = arith.constant 0 : index
    %384 = vector.load %arg19[%c0_292, %c0_293] : memref<16x32xf32, #tpu.memory_space<vmem>>, vector<16x32xf32>
    %385 = arith.mulf %383, %384 : vector<16x32xf32>
    %cst_294 = arith.constant dense<0.000000e+00> : vector<16x1xf32>
    %386 = tpu.matmul %385, %382, %cst_294 {dimension_numbers = #tpu.dot_dimension_numbers<[1], [0], [0], [1], [0, 0, 1, 1], [], []>} : vector<16x32xf32>, vector<32x1xf32>, vector<16x1xf32> -> vector<16x1xf32>
    %c0_295 = arith.constant 0 : index
    %c0_296 = arith.constant 0 : index
    %387 = vector.load %arg14[%c0_295, %c0_296] : memref<16x1xf32, #tpu.memory_space<vmem>>, vector<16x1xf32>
    tpu.vector_store %arg14[%c0_295, %c0_296], %386 {strides = array<i32>} : memref<16x1xf32, #tpu.memory_space<vmem>>, vector<16x1xf32>,
    return
  }
  func.func @transform_0(%arg0: i32, %arg1: memref<12xi32, #tpu.memory_space<smem>>, %arg2: memref<12xi32, #tpu.memory_space<smem>>) -> (i32, i32, i32) {
    %c0_i32 = arith.constant 0 : i32
    %c0_i32_0 = arith.constant 0 : i32
    %c0_i32_1 = arith.constant 0 : i32
    %c0_i32_2 = arith.constant 0 : i32
    return %c0_i32, %c0_i32_0, %c0_i32_1 : i32, i32, i32
  }
  func.func @transform_1(%arg0: i32, %arg1: memref<12xi32, #tpu.memory_space<smem>>, %arg2: memref<12xi32, #tpu.memory_space<smem>>) -> (i32, i32, i32) {
    %c0_i32 = arith.constant 0 : i32
    %c0_i32_0 = arith.constant 0 : i32
    %c0_i32_1 = arith.constant 0 : i32
    %c0_i32_2 = arith.constant 0 : i32
    return %c0_i32, %c0_i32_0, %c0_i32_1 : i32, i32, i32
  }
  func.func @transform_2(%arg0: i32, %arg1: memref<12xi32, #tpu.memory_space<smem>>, %arg2: memref<12xi32, #tpu.memory_space<smem>>) -> (i32, i32) {
    %c0_i32 = arith.constant 0 : i32
    %c0_i32_0 = arith.constant 0 : i32
    %c0_i32_1 = arith.constant 0 : i32
    return %c0_i32, %c0_i32_0 : i32, i32
  }
  func.func @transform_3(%arg0: i32, %arg1: memref<12xi32, #tpu.memory_space<smem>>, %arg2: memref<12xi32, #tpu.memory_space<smem>>) -> (i32, i32, i32, i32) {
    %c0_i32 = arith.constant 0 : i32
    %c0_i32_0 = arith.constant 0 : i32
    %c0_i32_1 = arith.constant 0 : i32
    %c0_i32_2 = arith.constant 0 : i32
    %c0_i32_3 = arith.constant 0 : i32
    return %c0_i32, %c0_i32_0, %c0_i32_1, %c0_i32_2 : i32, i32, i32, i32
  }
  func.func @transform_4(%arg0: i32, %arg1: memref<12xi32, #tpu.memory_space<smem>>, %arg2: memref<12xi32, #tpu.memory_space<smem>>) -> (i32, i32, i32, i32) {
    %c0_i32 = arith.constant 0 : i32
    %c0_i32_0 = arith.constant 0 : i32
    %c0_i32_1 = arith.constant 0 : i32
    %c0_i32_2 = arith.constant 0 : i32
    %c0_i32_3 = arith.constant 0 : i32
    return %c0_i32, %c0_i32_0, %c0_i32_1, %c0_i32_2 : i32, i32, i32, i32
  }
  func.func @transform_5(%arg0: i32, %arg1: memref<12xi32, #tpu.memory_space<smem>>, %arg2: memref<12xi32, #tpu.memory_space<smem>>) -> (i32, i32, i32, i32) {
    %c0_i32 = arith.constant 0 : i32
    %c0_i32_0 = arith.constant 0 : i32
    %c0_i32_1 = arith.constant 0 : i32
    %c0_i32_2 = arith.constant 0 : i32
    %c0_i32_3 = arith.constant 0 : i32
    return %c0_i32, %c0_i32_0, %c0_i32_1, %c0_i32_2 : i32, i32, i32, i32
  }
  func.func @transform_6(%arg0: i32, %arg1: memref<12xi32, #tpu.memory_space<smem>>, %arg2: memref<12xi32, #tpu.memory_space<smem>>) -> (i32, i32, i32, i32) {
    %c0_i32 = arith.constant 0 : i32
    %c0_i32_0 = arith.constant 0 : i32
    %c0_i32_1 = arith.constant 0 : i32
    %c0_i32_2 = arith.constant 0 : i32
    %c0_i32_3 = arith.constant 0 : i32
    return %c0_i32, %c0_i32_0, %c0_i32_1, %c0_i32_2 : i32, i32, i32, i32
  }
  func.func @transform_7(%arg0: i32, %arg1: memref<12xi32, #tpu.memory_space<smem>>, %arg2: memref<12xi32, #tpu.memory_space<smem>>) -> (i32, i32, i32, i32) {
    %c0_i32 = arith.constant 0 : i32
    %c0_i32_0 = arith.constant 0 : i32
    %c0_i32_1 = arith.constant 0 : i32
    %c0_i32_2 = arith.constant 0 : i32
    %c0_i32_3 = arith.constant 0 : i32
    return %c0_i32, %c0_i32_0, %c0_i32_1, %c0_i32_2 : i32, i32, i32, i32
  }
  func.func @transform_8(%arg0: i32, %arg1: memref<12xi32, #tpu.memory_space<smem>>, %arg2: memref<12xi32, #tpu.memory_space<smem>>) -> (i32, i32) {
    %c0_i32 = arith.constant 0 : i32
    %c0_i32_0 = arith.constant 0 : i32
    %c0_i32_1 = arith.constant 0 : i32
    return %c0_i32, %c0_i32_0 : i32, i32
  }
  func.func @transform_9(%arg0: i32, %arg1: memref<12xi32, #tpu.memory_space<smem>>, %arg2: memref<12xi32, #tpu.memory_space<smem>>) -> (i32, i32) {
    %c0_i32 = arith.constant 0 : i32
    %c0_i32_0 = arith.constant 0 : i32
    %c0_i32_1 = arith.constant 0 : i32
    return %c0_i32, %c0_i32_0 : i32, i32
  }
  func.func @transform_10(%arg0: i32, %arg1: memref<12xi32, #tpu.memory_space<smem>>, %arg2: memref<12xi32, #tpu.memory_space<smem>>) -> (i32, i32) {
    %c0_i32 = arith.constant 0 : i32
    %c0_i32_0 = arith.constant 0 : i32
    %c0_i32_1 = arith.constant 0 : i32
    return %c0_i32, %c0_i32_0 : i32, i32
  }
  func.func @transform_11(%arg0: i32, %arg1: memref<12xi32, #tpu.memory_space<smem>>, %arg2: memref<12xi32, #tpu.memory_space<smem>>) -> (i32, i32) {
    %c0_i32 = arith.constant 0 : i32
    %c0_i32_0 = arith.constant 0 : i32
    %c0_i32_1 = arith.constant 0 : i32
    return %c0_i32, %c0_i32_0 : i32, i32
  }
}

</mosaic_0001>

<llo_original>
// kernel: tgn_forward.1
$region0: #{tgn_forward.1}
  #allocation0 [shape = 'u32[]', space=smem, size = 0x4, offset = 0x4, fixed_abs, tag = 'smem constant byte address 0x4 - core index']
  #allocation1 [shape = 'u32[144,128]{1,0:T(1,128)}', space=vmem, size = 0x12000, scoped, tag = 'internal scratch']
  #allocation2 [shape = 'bf16[2,16,128]{2,1,0:T(16,128)(2,1)}', space=vmem, size = 0x2000, scoped, tag = 'scratch operand']
  #allocation3 [shape = 'f32[16,32]{1,0:T(8,128)}', space=vmem, size = 0x2000, scoped, tag = 'scratch operand']
  #allocation4 [shape = 'f32[16,32]{1,0:T(8,128)}', space=vmem, size = 0x2000, scoped, tag = 'scratch operand']
  #allocation5 [shape = 'f32[16,32]{1,0:T(8,128)}', space=vmem, size = 0x2000, scoped, tag = 'scratch operand']
  #allocation6 [shape = 'f32[16,32]{1,0:T(8,128)}', space=vmem, size = 0x2000, scoped, tag = 'scratch operand']
  #allocation7 [shape = 's32[1]{0}', space=sflag, size = 0x4, scoped, tag = 'scoped memory for tgn_forward.1']
  #allocation8 [shape = 'u8[512]{0}', space=smem, size = 0x200, scoped, tag = 'prefetched SMEM operand 0']
  #allocation9 [shape = 'u8[512]{0}', space=smem, size = 0x200, scoped, tag = 'prefetched SMEM operand 1']
  %s0 = inlined_call_operand.vmem [shape: s32[12], index: 0, kind: input, shape index: {}]
  %s1 = inlined_call_operand.vmem [shape: s32[12], index: 1, kind: input, shape index: {}]
  %s2 = inlined_call_operand.vmem [shape: bf16[2,16,64], index: 2, kind: input, shape index: {}]
  %s3 = inlined_call_operand.vmem [shape: bf16[2,16,16], index: 3, kind: input, shape index: {}]
  %s4 = inlined_call_operand.vmem [shape: f32[16,128], index: 4, kind: input, shape index: {}]
  %s5 = inlined_call_operand.vmem [shape: bf16[2,2,128,128], index: 5, kind: input, shape index: {}]
  %s6 = inlined_call_operand.vmem [shape: f32[2,2,1,128], index: 6, kind: input, shape index: {}]
  %s7 = inlined_call_operand.vmem [shape: f32[2,2,1,32], index: 7, kind: input, shape index: {}]
  %s8 = inlined_call_operand.vmem [shape: f32[2,2,1,32], index: 8, kind: input, shape index: {}]
  %s9 = inlined_call_operand.vmem [shape: f32[2,2,1,32], index: 9, kind: input, shape index: {}]
  %s10 = inlined_call_operand.vmem [shape: bf16[32,32], index: 10, kind: input, shape index: {}]
  %s11 = inlined_call_operand.vmem [shape: f32[1,32], index: 11, kind: input, shape index: {}]
  %s12 = inlined_call_operand.vmem [shape: f32[16,128], index: 12, kind: output, shape index: {0}]
  %s13 = inlined_call_operand.vmem [shape: f32[16,1], index: 13, kind: output, shape index: {1}]
  %14 = xla_tuple %s12, %s13
  %s15 = sld [smem:[#allocation0]]
  $region58: #{tgn_forward.1} parent=0
    _
  %s17 = ssub.s32 1, %s15
  %s18 = scalar_select 0, %s17, %s15
  %s19 = sshll.u32 %s0, 4
  %s20 = int_to_ptr.vmem [resolvable:$true] %s19
  %22 = dma.vmem_to_smem %s20, 16, [#allocation8], [#allocation7]
  %s23 = sshll.u32 %s1, 4
  %s24 = int_to_ptr.vmem [resolvable:$true] %s23
  %26 = dma.vmem_to_smem %s24, 16, [#allocation9], [#allocation7]
  %27 = dma.done [#allocation7], 32
  %28 = sfence
  // Predicated region
  $region2: #{tgn_forward.1} parent=0 // pred_check
    _
  $region3: #{tgn_forward.1} parent=0 // pred_check_branch
    %30 = sbr.rel (0) target = $region5
  $region4: #{tgn_forward.1} parent=0 // pred_region
    _
  $region5: #{tgn_forward.1} parent=0 // pred_fallthru
    _
  // Predicated region
  $region6: #{tgn_forward.1} parent=0 // pred_check
    _
  $region7: #{tgn_forward.1} parent=0 // pred_check_branch
    %32 = sbr.rel (0) target = $region9
  $region8: #{tgn_forward.1} parent=0 // pred_region
    _
  $region9: #{tgn_forward.1} parent=0 // pred_fallthru
    _
  // Predicated region
  $region10: #{tgn_forward.1} parent=0 // pred_check
    _
  $region11: #{tgn_forward.1} parent=0 // pred_check_branch
    %34 = sbr.rel (0) target = $region13
  $region12: #{tgn_forward.1} parent=0 // pred_region
    _
  $region13: #{tgn_forward.1} parent=0 // pred_fallthru
    _
  // Predicated region
  $region14: #{tgn_forward.1} parent=0 // pred_check
    _
  $region15: #{tgn_forward.1} parent=0 // pred_check_branch
    %36 = sbr.rel (0) target = $region17
  $region16: #{tgn_forward.1} parent=0 // pred_region
    _
  $region17: #{tgn_forward.1} parent=0 // pred_fallthru
    _
  // Predicated region
  $region18: #{tgn_forward.1} parent=0 // pred_check
    _
  $region19: #{tgn_forward.1} parent=0 // pred_check_branch
    %38 = sbr.rel (0) target = $region21
  $region20: #{tgn_forward.1} parent=0 // pred_region
    _
  $region21: #{tgn_forward.1} parent=0 // pred_fallthru
    _
  // Predicated region
  $region22: #{tgn_forward.1} parent=0 // pred_check
    _
  $region23: #{tgn_forward.1} parent=0 // pred_check_branch
    %40 = sbr.rel (0) target = $region25
  $region24: #{tgn_forward.1} parent=0 // pred_region
    _
  $region25: #{tgn_forward.1} parent=0 // pred_fallthru
    _
  // Predicated region
  $region26: #{tgn_forward.1} parent=0 // pred_check
    _
  $region27: #{tgn_forward.1} parent=0 // pred_check_branch
    %42 = sbr.rel (0) target = $region29
  $region28: #{tgn_forward.1} parent=0 // pred_region
    _
  $region29: #{tgn_forward.1} parent=0 // pred_fallthru
    _
  // Predicated region
  $region30: #{tgn_forward.1} parent=0 // pred_check
    _
  $region31: #{tgn_forward.1} parent=0 // pred_check_branch
    %44 = sbr.rel (0) target = $region33
  $region32: #{tgn_forward.1} parent=0 // pred_region
    _
  $region33: #{tgn_forward.1} parent=0 // pred_fallthru
    _
  // Predicated region
  $region34: #{tgn_forward.1} parent=0 // pred_check
    _
  $region35: #{tgn_forward.1} parent=0 // pred_check_branch
    %46 = sbr.rel (0) target = $region37
  $region36: #{tgn_forward.1} parent=0 // pred_region
    _
  $region37: #{tgn_forward.1} parent=0 // pred_fallthru
    _
  // Predicated region
  $region38: #{tgn_forward.1} parent=0 // pred_check
    _
  $region39: #{tgn_forward.1} parent=0 // pred_check_branch
    %48 = sbr.rel (0) target = $region41
  $region40: #{tgn_forward.1} parent=0 // pred_region
    _
  $region41: #{tgn_forward.1} parent=0 // pred_fallthru
    _
  %v50 = vlaneseq
  %v51 = vand.u32 %v50, 127
  %vm52 = vcmp.lt.s32.totalorder %v51, 12
  %v53 = vsel %vm52, 1, 0
  %v54 = vcvt.s32.f32 %v53
  %vm55 = vcmp.lt.s32.totalorder %v51, 10
  %v56 = vsel %vm55, 1, 0
  %v57 = vcvt.s32.f32 %v56
  %v58 = vld [vmem:[%s4] sm:$0xff]
  %v59 = vld [vmem:[%s4 + $0x8] sm:$0xff]
  %v60 = vld [vmem:[%s2] sm:$0xf]
  %v61 = vld [vmem:[%s2 + $0x4] sm:$0xf]
  %v64 = vunpack.c.l.b16 %v60
  %v65 = vunpack.c.l.b16 %v61
  %v66 = vpack.c.b16 %v65, %v64
  %vm68 = vcmask 523264
  %69 = vst.msk [vmem:[#allocation2] sm:$0xff] %vm68, %v66
  %s70 = scalar_lea.vmem %s2, 8
  %v71 = vld [vmem:[%s70] sm:$0xf]
  %v72 = vld [vmem:[%s70 + $0x4] sm:$0xf]
  %v75 = vunpack.c.l.b16 %v71
  %v76 = vunpack.c.l.b16 %v72
  %v77 = vpack.c.b16 %v76, %v75
  %s79 = scalar_lea.vmem [#allocation2], 8
  %80 = vst.msk [vmem:[%s79] sm:$0xff] %vm68, %v77
  %v81 = vpack.c.bf16 %v59, %v58
  %v82 = vld [vmem:[%s3] sm:$0xf]
  %v83 = vld [vmem:[%s3 + $0x4] sm:$0xf]
  %v86 = vunpack.c.l.b16 %v82
  %v87 = vunpack.c.l.b16 %v83
  %v88 = vpack.c.b16 %v87, %v86
  %90 = vrot.lane.b32.xlu0 %v81, 96
  %v91 = vpop.permute.xlu0 %90
  %vm93 = vcmask 130048
  %v95 = vsel %vm93, %v88, 0
  %97 = vmatprep.subr.bf16.mxu0 0
  %98 = vmatpush1.bf16.msra.mxu0 %v91
  %99 = vmatprep.subr.bf16.mxu0 0
  %100 = vmatpush1.bf16.msra.mxu0 0
  %101 = vmatprep.subr.bf16.mxu0 0
  %102 = vmatpush1.bf16.msra.mxu0 0
  %103 = vmatprep.subr.bf16.mxu0 0
  %104 = vmatpush1.bf16.msra.mxu0 0
  %105 = vmatprep.subr.bf16.mxu0 0
  %106 = vmatpush1.bf16.msra.mxu0 0
  %107 = vmatprep.subr.bf16.mxu0 0
  %108 = vmatpush1.bf16.msra.mxu0 0
  %109 = vmatprep.subr.bf16.mxu0 0
  %110 = vmatpush1.bf16.msra.mxu0 0
  %111 = vmatprep.subr.bf16.mxu0 0
  %112 = vmatpush1.bf16.msra.mxu0 0
  %113 = vmatprep.subr.bf16.mxu0 0
  %114 = vmatpush1.bf16.msra.mxu0 0
  %115 = vmatprep.subr.bf16.mxu0 0
  %116 = vmatpush1.bf16.msra.mxu0 0
  %117 = vmatprep.subr.bf16.mxu0 0
  %118 = vmatpush1.bf16.msra.mxu0 0
  %119 = vmatprep.subr.bf16.mxu0 0
  %120 = vmatpush1.bf16.msra.mxu0 0
  %121 = vmatprep.subr.bf16.mxu0 0
  %122 = vmatpush1.bf16.msra.mxu0 0
  %123 = vmatprep.subr.bf16.mxu0 0
  %124 = vmatpush1.bf16.msra.mxu0 0
  %125 = vmatprep.subr.bf16.mxu0 0
  %126 = vmatpush1.bf16.msra.mxu0 0
  %127 = vmatprep.subr.bf16.mxu0 0
  %128 = vmatpush1.bf16.msra.mxu0 0
  %129 = vmatprep.mubr.bf16.mxu0 0
  %130 = vmatmul.mubr.bf16.gmra.mrb[0].mxu0 %v95
  %v131 = vpop.f32.mrb[0].mxu0
  %v132 = vadd.f32 0.0, %v131
  %v133 = vpop.f32.mrb[0].mxu0
  %v134 = vpop.f32.mrb[0].mxu0
  %v135 = vadd.f32 0.0, %v134
  %v136 = vpop.f32.mrb[0].mxu0
  %137 = vdwg.mxu0
  %v138 = vpack.c.bf16 %v135, %v132
  %140 = vrot.lane.b32.xlu0 %v138, 64
  %v141 = vpop.permute.xlu0 %140
  %vm143 = vcmask 785920
  %144 = vst.msk [vmem:[#allocation2] sm:$0xff] %vm143, %v141
  %vm145 = vcmask 1048320
  %146 = vst.msk [vmem:[#allocation2] sm:$0xff] %vm145, %v91
  %v147 = vld [vmem:[#allocation2] sm:$0xff]
  %v148 = vld [vmem:[%s5] sm:$0xf]
  %v149 = vld [vmem:[%s5 + $0x4] sm:$0xf]
  %v150 = vld [vmem:[%s5 + $0x8] sm:$0xf]
  %v151 = vld [vmem:[%s5 + $0xc] sm:$0xf]
  %v152 = vld [vmem:[%s5 + $0x10] sm:$0xf]
  %v153 = vld [vmem:[%s5 + $0x14] sm:$0xf]
  %v154 = vld [vmem:[%s5 + $0x18] sm:$0xf]
  %v155 = vld [vmem:[%s5 + $0x1c] sm:$0xf]
  %v156 = vld [vmem:[%s5 + $0x20] sm:$0xf]
  %v157 = vld [vmem:[%s5 + $0x24] sm:$0xf]
  %v158 = vld [vmem:[%s5 + $0x28] sm:$0xf]
  %v159 = vld [vmem:[%s5 + $0x2c] sm:$0xf]
  %v160 = vld [vmem:[%s5 + $0x30] sm:$0xf]
  %v161 = vld [vmem:[%s5 + $0x34] sm:$0xf]
  %v162 = vld [vmem:[%s5 + $0x38] sm:$0xf]
  %v163 = vld [vmem:[%s5 + $0x3c] sm:$0xf]
  %v164 = vld [vmem:[%s6] sm:$0x1]
  %v166 = vlaneseq
  %v167 = vshrl.u32 %v166, 7
  %v168 = vsub.s32 0, %v167
  %v169 = vrot.slane %v164, %v168
  %v187 = vunpack.c.l.b16 %v148
  %v188 = vunpack.c.l.b16 %v149
  %v189 = vunpack.c.l.b16 %v150
  %v190 = vunpack.c.l.b16 %v151
  %v191 = vunpack.c.l.b16 %v152
  %v192 = vunpack.c.l.b16 %v153
  %v193 = vunpack.c.l.b16 %v154
  %v194 = vunpack.c.l.b16 %v155
  %v195 = vunpack.c.l.b16 %v156
  %v196 = vunpack.c.l.b16 %v157
  %v197 = vunpack.c.l.b16 %v158
  %v198 = vunpack.c.l.b16 %v159
  %v199 = vunpack.c.l.b16 %v160
  %v200 = vunpack.c.l.b16 %v161
  %v201 = vunpack.c.l.b16 %v162
  %v202 = vunpack.c.l.b16 %v163
  %v203 = vpack.c.b16 %v188, %v187
  %v204 = vpack.c.b16 %v190, %v189
  %v205 = vpack.c.b16 %v192, %v191
  %v206 = vpack.c.b16 %v194, %v193
  %v207 = vpack.c.b16 %v196, %v195
  %v208 = vpack.c.b16 %v198, %v197
  %v209 = vpack.c.b16 %v200, %v199
  %v210 = vpack.c.b16 %v202, %v201
  %219 = vmatprep.subr.bf16.mxu0 0
  %220 = vmatpush1.bf16.msra.mxu0 %v203
  %221 = vmatprep.subr.bf16.mxu0 0
  %222 = vmatpush1.bf16.msra.mxu0 %v204
  %223 = vmatprep.subr.bf16.mxu0 0
  %224 = vmatpush1.bf16.msra.mxu0 %v205
  %225 = vmatprep.subr.bf16.mxu0 0
  %226 = vmatpush1.bf16.msra.mxu0 %v206
  %227 = vmatprep.subr.bf16.mxu0 0
  %228 = vmatpush1.bf16.msra.mxu0 %v207
  %229 = vmatprep.subr.bf16.mxu0 0
  %230 = vmatpush1.bf16.msra.mxu0 %v208
  %231 = vmatprep.subr.bf16.mxu0 0
  %232 = vmatpush1.bf16.msra.mxu0 %v209
  %233 = vmatprep.subr.bf16.mxu0 0
  %234 = vmatpush1.bf16.msra.mxu0 %v210
  %235 = vmatprep.subr.bf16.mxu0 0
  %236 = vmatpush1.bf16.msra.mxu0 0
  %237 = vmatprep.subr.bf16.mxu0 0
  %238 = vmatpush1.bf16.msra.mxu0 0
  %239 = vmatprep.subr.bf16.mxu0 0
  %240 = vmatpush1.bf16.msra.mxu0 0
  %241 = vmatprep.subr.bf16.mxu0 0
  %242 = vmatpush1.bf16.msra.mxu0 0
  %243 = vmatprep.subr.bf16.mxu0 0
  %244 = vmatpush1.bf16.msra.mxu0 0
  %245 = vmatprep.subr.bf16.mxu0 0
  %246 = vmatpush1.bf16.msra.mxu0 0
  %247 = vmatprep.subr.bf16.mxu0 0
  %248 = vmatpush1.bf16.msra.mxu0 0
  %249 = vmatprep.subr.bf16.mxu0 0
  %250 = vmatpush1.bf16.msra.mxu0 0
  %251 = vmatprep.mubr.bf16.mxu0 0
  %252 = vmatmul.mubr.bf16.gmra.mrb[0].mxu0 %v147
  %v253 = vpop.f32.mrb[0].mxu0
  %v254 = vadd.f32 %v169, %v253
  %v255 = vpop.f32.mrb[0].mxu0
  %v256 = vpop.f32.mrb[0].mxu0
  %v257 = vadd.f32 %v169, %v256
  %v258 = vpop.f32.mrb[0].mxu0
  %259 = vdwg.mxu0
  %v260 = vxor.u32 %v254, 2147483648
  %v261 = vxor.u32 %v257, 2147483648
  %v262 = vmul.f32 %v260, 1.442695
  %v263 = vpow.pop %v262
  %v264 = vmul.f32 %v261, 1.442695
  %v265 = vpow.pop %v264
  %v266 = vadd.f32 %v263, 1.0
  %v267 = vadd.f32 %v265, 1.0
  %v268 = vrcp.pop %v266
  %v269 = vmul.f32 1.0, %v268
  %v270 = vrcp.pop %v267
  %v271 = vmul.f32 1.0, %v270
  %v272 = vtanh.pop %v254
  %v273 = vtanh.pop %v257
  %276 = vrot.lane.b32.xlu0 %v58, 96
  %v277 = vpop.permute.xlu0 %276
  %278 = vrot.lane.b32.xlu0 %v59, 96
  %v279 = vpop.permute.xlu0 %278
  %v282 = vmul.f32 %v269, %v277
  %v283 = vmul.f32 %v271, %v279
  %286 = vrot.lane.b32.xlu0 %v272, 64
  %v287 = vpop.permute.xlu0 %286
  %288 = vrot.lane.b32.xlu0 %v273, 64
  %v289 = vpop.permute.xlu0 %288
  %v292 = vmul.f32 %v269, %v287
  %v293 = vmul.f32 %v271, %v289
  %296 = vrot.lane.b32.xlu0 %v292, 32
  %v297 = vpop.permute.xlu0 %296
  %298 = vrot.lane.b32.xlu0 %v293, 32
  %v299 = vpop.permute.xlu0 %298
  %v302 = vadd.f32 %v282, %v297
  %v303 = vadd.f32 %v283, %v299
  %v304 = vtanh.pop %v302
  %v305 = vtanh.pop %v303
  %308 = vrot.lane.b32.xlu0 %v304, 64
  %v309 = vpop.permute.xlu0 %308
  %310 = vrot.lane.b32.xlu0 %v305, 64
  %v311 = vpop.permute.xlu0 %310
  %v314 = vmul.f32 %v269, %v309
  %v315 = vmul.f32 %v271, %v311
  %318 = vrot.lane.b32.xlu0 %v314, 32
  %v319 = vpop.permute.xlu0 %318
  %320 = vrot.lane.b32.xlu0 %v315, 32
  %v321 = vpop.permute.xlu0 %320
  %v325 = vsel %vm93, %v54, 0
  %327 = vmatprep.subr.mxu0 0.0
  %328 = vmatpush1.msra.mxu0 %v319
  %329 = vmatprep.subr.mxu0 0.0
  %330 = vmatpush1.msra.mxu0 %v321
  %331 = vmatprep.subr.mxu0 0.0
  %332 = vmatpush1.msra.mxu0 0.0
  %333 = vmatprep.subr.mxu0 0.0
  %334 = vmatpush1.msra.mxu0 0.0
  %335 = vmatprep.subr.mxu0 0.0
  %336 = vmatpush1.msra.mxu0 0.0
  %337 = vmatprep.subr.mxu0 0.0
  %338 = vmatpush1.msra.mxu0 0.0
  %339 = vmatprep.subr.mxu0 0.0
  %340 = vmatpush1.msra.mxu0 0.0
  %341 = vmatprep.subr.mxu0 0.0
  %342 = vmatpush1.msra.mxu0 0.0
  %343 = vmatprep.subr.mxu0 0.0
  %344 = vmatpush1.msra.mxu0 0.0
  %345 = vmatprep.subr.mxu0 0.0
  %346 = vmatpush1.msra.mxu0 0.0
  %347 = vmatprep.subr.mxu0 0.0
  %348 = vmatpush1.msra.mxu0 0.0
  %349 = vmatprep.subr.mxu0 0.0
  %350 = vmatpush1.msra.mxu0 0.0
  %351 = vmatprep.subr.mxu0 0.0
  %352 = vmatpush1.msra.mxu0 0.0
  %353 = vmatprep.subr.mxu0 0.0
  %354 = vmatpush1.msra.mxu0 0.0
  %355 = vmatprep.subr.mxu0 0.0
  %356 = vmatpush1.msra.mxu0 0.0
  %357 = vmatprep.subr.mxu0 0.0
  %358 = vmatpush1.msra.mxu0 0.0
  %359 = vmatprep.subr.mxu0 0.0
  %360 = vmatpush1.msra.mxu0 0.0
  %361 = vmatprep.subr.mxu0 0.0
  %362 = vmatpush1.msra.mxu0 0.0
  %363 = vmatprep.subr.mxu0 0.0
  %364 = vmatpush1.msra.mxu0 0.0
  %365 = vmatprep.subr.mxu0 0.0
  %366 = vmatpush1.msra.mxu0 0.0
  %367 = vmatprep.subr.mxu0 0.0
  %368 = vmatpush1.msra.mxu0 0.0
  %369 = vmatprep.subr.mxu0 0.0
  %370 = vmatpush1.msra.mxu0 0.0
  %371 = vmatprep.subr.mxu0 0.0
  %372 = vmatpush1.msra.mxu0 0.0
  %373 = vmatprep.subr.mxu0 0.0
  %374 = vmatpush1.msra.mxu0 0.0
  %375 = vmatprep.subr.mxu0 0.0
  %376 = vmatpush1.msra.mxu0 0.0
  %377 = vmatprep.subr.mxu0 0.0
  %378 = vmatpush1.msra.mxu0 0.0
  %379 = vmatprep.subr.mxu0 0.0
  %380 = vmatpush1.msra.mxu0 0.0
  %381 = vmatprep.subr.mxu0 0.0
  %382 = vmatpush1.msra.mxu0 0.0
  %383 = vmatprep.subr.mxu0 0.0
  %384 = vmatpush1.msra.mxu0 0.0
  %385 = vmatprep.subr.mxu0 0.0
  %386 = vmatpush1.msra.mxu0 0.0
  %387 = vmatprep.subr.mxu0 0.0
  %388 = vmatpush1.msra.mxu0 0.0
  %389 = vmatprep.subr.mxu0 0.0
  %390 = vmatpush1.msra.mxu0 0.0
  %391 = vmatprep.mubr.f32.mxu0 0.0
  %392 = vmatmul.mubr.f32.gmra.mrb[0].mxu0 %v325
  %v393 = vpop.f32.mrb[0].mxu0
  %v394 = vadd.f32 0.0, %v393
  %v395 = vpop.f32.mrb[0].mxu0
  %396 = vdwg.mxu0
  %v397 = vmul.f32 %v394, 0.083333336
  %v398 = vld [vmem:[%s9] sm:$0x1]
  %v399 = vmul.f32 %v397, %v398
  %v400 = vlaneseq
  %v401 = vshrl.u32 %v400, 7
  %v402 = vsub.s32 0, %v401
  %v403 = vrot.slane %v399, %v402
  %405 = vrot.lane.b32.xlu0 %v403, 96
  %v406 = vpop.permute.xlu0 %405
  %v408 = vsub.f32 %v314, %v406
  %v409 = vsub.f32 %v315, %v406
  %v410 = vmul.f32 %v408, %v408
  %v411 = vmul.f32 %v409, %v409
  %414 = vrot.lane.b32.xlu0 %v410, 32
  %v415 = vpop.permute.xlu0 %414
  %416 = vrot.lane.b32.xlu0 %v411, 32
  %v417 = vpop.permute.xlu0 %416
  %420 = vmatprep.subr.mxu0 0.0
  %421 = vmatpush1.msra.mxu0 %v415
  %422 = vmatprep.subr.mxu0 0.0
  %423 = vmatpush1.msra.mxu0 %v417
  %424 = vmatprep.subr.mxu0 0.0
  %425 = vmatpush1.msra.mxu0 0.0
  %426 = vmatprep.subr.mxu0 0.0
  %427 = vmatpush1.msra.mxu0 0.0
  %428 = vmatprep.subr.mxu0 0.0
  %429 = vmatpush1.msra.mxu0 0.0
  %430 = vmatprep.subr.mxu0 0.0
  %431 = vmatpush1.msra.mxu0 0.0
  %432 = vmatprep.subr.mxu0 0.0
  %433 = vmatpush1.msra.mxu0 0.0
  %434 = vmatprep.subr.mxu0 0.0
  %435 = vmatpush1.msra.mxu0 0.0
  %436 = vmatprep.subr.mxu0 0.0
  %437 = vmatpush1.msra.mxu0 0.0
  %438 = vmatprep.subr.mxu0 0.0
  %439 = vmatpush1.msra.mxu0 0.0
  %440 = vmatprep.subr.mxu0 0.0
  %441 = vmatpush1.msra.mxu0 0.0
  %442 = vmatprep.subr.mxu0 0.0
  %443 = vmatpush1.msra.mxu0 0.0
  %444 = vmatprep.subr.mxu0 0.0
  %445 = vmatpush1.msra.mxu0 0.0
  %446 = vmatprep.subr.mxu0 0.0
  %447 = vmatpush1.msra.mxu0 0.0
  %448 = vmatprep.subr.mxu0 0.0
  %449 = vmatpush1.msra.mxu0 0.0
  %450 = vmatprep.subr.mxu0 0.0
  %451 = vmatpush1.msra.mxu0 0.0
  %452 = vmatprep.subr.mxu0 0.0
  %453 = vmatpush1.msra.mxu0 0.0
  %454 = vmatprep.subr.mxu0 0.0
  %455 = vmatpush1.msra.mxu0 0.0
  %456 = vmatprep.subr.mxu0 0.0
  %457 = vmatpush1.msra.mxu0 0.0
  %458 = vmatprep.subr.mxu0 0.0
  %459 = vmatpush1.msra.mxu0 0.0
  %460 = vmatprep.subr.mxu0 0.0
  %461 = vmatpush1.msra.mxu0 0.0
  %462 = vmatprep.subr.mxu0 0.0
  %463 = vmatpush1.msra.mxu0 0.0
  %464 = vmatprep.subr.mxu0 0.0
  %465 = vmatpush1.msra.mxu0 0.0
  %466 = vmatprep.subr.mxu0 0.0
  %467 = vmatpush1.msra.mxu0 0.0
  %468 = vmatprep.subr.mxu0 0.0
  %469 = vmatpush1.msra.mxu0 0.0
  %470 = vmatprep.subr.mxu0 0.0
  %471 = vmatpush1.msra.mxu0 0.0
  %472 = vmatprep.subr.mxu0 0.0
  %473 = vmatpush1.msra.mxu0 0.0
  %474 = vmatprep.subr.mxu0 0.0
  %475 = vmatpush1.msra.mxu0 0.0
  %476 = vmatprep.subr.mxu0 0.0
  %477 = vmatpush1.msra.mxu0 0.0
  %478 = vmatprep.subr.mxu0 0.0
  %479 = vmatpush1.msra.mxu0 0.0
  %480 = vmatprep.subr.mxu0 0.0
  %481 = vmatpush1.msra.mxu0 0.0
  %482 = vmatprep.subr.mxu0 0.0
  %483 = vmatpush1.msra.mxu0 0.0
  %484 = vmatprep.mubr.f32.mxu0 0.0
  %485 = vmatmul.mubr.f32.gmra.mrb[0].mxu0 %v325
  %v486 = vpop.f32.mrb[0].mxu0
  %v487 = vadd.f32 0.0, %v486
  %v488 = vpop.f32.mrb[0].mxu0
  %489 = vdwg.mxu0
  %v490 = vmul.f32 %v487, 0.083333336
  %v491 = vld [vmem:[%s7] sm:$0x1]
  %v493 = vlaneseq
  %v494 = vshrl.u32 %v493, 7
  %v495 = vsub.s32 0, %v494
  %v496 = vrot.slane %v491, %v495
  %500 = vrot.lane.b32.xlu0 %v408, 32
  %v501 = vpop.permute.xlu0 %500
  %502 = vrot.lane.b32.xlu0 %v409, 32
  %v503 = vpop.permute.xlu0 %502
  %v506 = vmul.f32 %v496, %v501
  %v507 = vmul.f32 %v496, %v503
  %v508 = vadd.f32 %v490, 1e-05
  %v509 = vrsqrt.pop %v508
  %v510 = vlaneseq
  %v511 = vshrl.u32 %v510, 7
  %v512 = vsub.s32 0, %v511
  %v513 = vrot.slane %v509, %v512
  %v514 = vmul.f32 %v506, %v513
  %v515 = vmul.f32 %v507, %v513
  %v516 = vld [vmem:[%s8] sm:$0x1]
  %v518 = vlaneseq
  %v519 = vshrl.u32 %v518, 7
  %v520 = vsub.s32 0, %v519
  %v521 = vrot.slane %v516, %v520
  %v523 = vadd.f32 %v514, %v521
  %v524 = vadd.f32 %v515, %v521
  %s525 = scalar_lea.vmem %s3, 8
  %v526 = vld [vmem:[%s525] sm:$0xf]
  %v527 = vld [vmem:[%s525 + $0x4] sm:$0xf]
  %v530 = vunpack.c.l.b16 %v526
  %v531 = vunpack.c.l.b16 %v527
  %v532 = vpack.c.b16 %v531, %v530
  %v534 = vsel %vm93, %v532, 0
  %536 = vmatprep.subr.bf16.mxu0 0
  %537 = vmatpush1.bf16.msra.mxu0 %v81
  %538 = vmatprep.subr.bf16.mxu0 0
  %539 = vmatpush1.bf16.msra.mxu0 0
  %540 = vmatprep.subr.bf16.mxu0 0
  %541 = vmatpush1.bf16.msra.mxu0 0
  %542 = vmatprep.subr.bf16.mxu0 0
  %543 = vmatpush1.bf16.msra.mxu0 0
  %544 = vmatprep.subr.bf16.mxu0 0
  %545 = vmatpush1.bf16.msra.mxu0 0
  %546 = vmatprep.subr.bf16.mxu0 0
  %547 = vmatpush1.bf16.msra.mxu0 0
  %548 = vmatprep.subr.bf16.mxu0 0
  %549 = vmatpush1.bf16.msra.mxu0 0
  %550 = vmatprep.subr.bf16.mxu0 0
  %551 = vmatpush1.bf16.msra.mxu0 0
  %552 = vmatprep.subr.bf16.mxu0 0
  %553 = vmatpush1.bf16.msra.mxu0 0
  %554 = vmatprep.subr.bf16.mxu0 0
  %555 = vmatpush1.bf16.msra.mxu0 0
  %556 = vmatprep.subr.bf16.mxu0 0
  %557 = vmatpush1.bf16.msra.mxu0 0
  %558 = vmatprep.subr.bf16.mxu0 0
  %559 = vmatpush1.bf16.msra.mxu0 0
  %560 = vmatprep.subr.bf16.mxu0 0
  %561 = vmatpush1.bf16.msra.mxu0 0
  %562 = vmatprep.subr.bf16.mxu0 0
  %563 = vmatpush1.bf16.msra.mxu0 0
  %564 = vmatprep.subr.bf16.mxu0 0
  %565 = vmatpush1.bf16.msra.mxu0 0
  %566 = vmatprep.subr.bf16.mxu0 0
  %567 = vmatpush1.bf16.msra.mxu0 0
  %568 = vmatprep.mubr.bf16.mxu0 0
  %569 = vmatmul.mubr.bf16.gmra.mrb[0].mxu0 %v534
  %v570 = vpop.f32.mrb[0].mxu0
  %v571 = vadd.f32 0.0, %v570
  %v572 = vpop.f32.mrb[0].mxu0
  %v573 = vpop.f32.mrb[0].mxu0
  %v574 = vadd.f32 0.0, %v573
  %v575 = vpop.f32.mrb[0].mxu0
  %576 = vdwg.mxu0
  %v577 = vpack.c.bf16 %v574, %v571
  %579 = vrot.lane.b32.xlu0 %v577, 64
  %v580 = vpop.permute.xlu0 %579
  %582 = vst.msk [vmem:[%s79] sm:$0xff] %vm143, %v580
  %583 = vrot.lane.b32.xlu0 %v81, 64
  %v584 = vpop.permute.xlu0 %583
  %586 = vst.msk [vmem:[%s79] sm:$0xff] %vm145, %v584
  %v587 = vld [vmem:[%s79] sm:$0xff]
  %s588 = scalar_lea.vmem %s5, 64
  %v589 = vld [vmem:[%s588] sm:$0xf]
  %v590 = vld [vmem:[%s588 + $0x4] sm:$0xf]
  %v591 = vld [vmem:[%s588 + $0x8] sm:$0xf]
  %v592 = vld [vmem:[%s588 + $0xc] sm:$0xf]
  %v593 = vld [vmem:[%s588 + $0x10] sm:$0xf]
  %v594 = vld [vmem:[%s588 + $0x14] sm:$0xf]
  %v595 = vld [vmem:[%s588 + $0x18] sm:$0xf]
  %v596 = vld [vmem:[%s588 + $0x1c] sm:$0xf]
  %v597 = vld [vmem:[%s588 + $0x20] sm:$0xf]
  %v598 = vld [vmem:[%s588 + $0x24] sm:$0xf]
  %v599 = vld [vmem:[%s588 + $0x28] sm:$0xf]
  %v600 = vld [vmem:[%s588 + $0x2c] sm:$0xf]
  %v601 = vld [vmem:[%s588 + $0x30] sm:$0xf]
  %v602 = vld [vmem:[%s588 + $0x34] sm:$0xf]
  %v603 = vld [vmem:[%s588 + $0x38] sm:$0xf]
  %v604 = vld [vmem:[%s588 + $0x3c] sm:$0xf]
  %s605 = scalar_lea.vmem %s6, 1
  %v606 = vld [vmem:[%s605] sm:$0x1]
  %v608 = vlaneseq
  %v609 = vshrl.u32 %v608, 7
  %v610 = vsub.s32 0, %v609
  %v611 = vrot.slane %v606, %v610
  %v629 = vunpack.c.l.b16 %v589
  %v630 = vunpack.c.l.b16 %v590
  %v631 = vunpack.c.l.b16 %v591
  %v632 = vunpack.c.l.b16 %v592
  %v633 = vunpack.c.l.b16 %v593
  %v634 = vunpack.c.l.b16 %v594
  %v635 = vunpack.c.l.b16 %v595
  %v636 = vunpack.c.l.b16 %v596
  %v637 = vunpack.c.l.b16 %v597
  %v638 = vunpack.c.l.b16 %v598
  %v639 = vunpack.c.l.b16 %v599
  %v640 = vunpack.c.l.b16 %v600
  %v641 = vunpack.c.l.b16 %v601
  %v642 = vunpack.c.l.b16 %v602
  %v643 = vunpack.c.l.b16 %v603
  %v644 = vunpack.c.l.b16 %v604
  %v645 = vpack.c.b16 %v630, %v629
  %v646 = vpack.c.b16 %v632, %v631
  %v647 = vpack.c.b16 %v634, %v633
  %v648 = vpack.c.b16 %v636, %v635
  %v649 = vpack.c.b16 %v638, %v637
  %v650 = vpack.c.b16 %v640, %v639
  %v651 = vpack.c.b16 %v642, %v641
  %v652 = vpack.c.b16 %v644, %v643
  %661 = vmatprep.subr.bf16.mxu0 0
  %662 = vmatpush1.bf16.msra.mxu0 %v645
  %663 = vmatprep.subr.bf16.mxu0 0
  %664 = vmatpush1.bf16.msra.mxu0 %v646
  %665 = vmatprep.subr.bf16.mxu0 0
  %666 = vmatpush1.bf16.msra.mxu0 %v647
  %667 = vmatprep.subr.bf16.mxu0 0
  %668 = vmatpush1.bf16.msra.mxu0 %v648
  %669 = vmatprep.subr.bf16.mxu0 0
  %670 = vmatpush1.bf16.msra.mxu0 %v649
  %671 = vmatprep.subr.bf16.mxu0 0
  %672 = vmatpush1.bf16.msra.mxu0 %v650
  %673 = vmatprep.subr.bf16.mxu0 0
  %674 = vmatpush1.bf16.msra.mxu0 %v651
  %675 = vmatprep.subr.bf16.mxu0 0
  %676 = vmatpush1.bf16.msra.mxu0 %v652
  %677 = vmatprep.subr.bf16.mxu0 0
  %678 = vmatpush1.bf16.msra.mxu0 0
  %679 = vmatprep.subr.bf16.mxu0 0
  %680 = vmatpush1.bf16.msra.mxu0 0
  %681 = vmatprep.subr.bf16.mxu0 0
  %682 = vmatpush1.bf16.msra.mxu0 0
  %683 = vmatprep.subr.bf16.mxu0 0
  %684 = vmatpush1.bf16.msra.mxu0 0
  %685 = vmatprep.subr.bf16.mxu0 0
  %686 = vmatpush1.bf16.msra.mxu0 0
  %687 = vmatprep.subr.bf16.mxu0 0
  %688 = vmatpush1.bf16.msra.mxu0 0
  %689 = vmatprep.subr.bf16.mxu0 0
  %690 = vmatpush1.bf16.msra.mxu0 0
  %691 = vmatprep.subr.bf16.mxu0 0
  %692 = vmatpush1.bf16.msra.mxu0 0
  %693 = vmatprep.mubr.bf16.mxu0 0
  %694 = vmatmul.mubr.bf16.gmra.mrb[0].mxu0 %v587
  %v695 = vpop.f32.mrb[0].mxu0
  %v696 = vadd.f32 %v611, %v695
  %v697 = vpop.f32.mrb[0].mxu0
  %v698 = vpop.f32.mrb[0].mxu0
  %v699 = vadd.f32 %v611, %v698
  %v700 = vpop.f32.mrb[0].mxu0
  %701 = vdwg.mxu0
  %v702 = vxor.u32 %v696, 2147483648
  %v703 = vxor.u32 %v699, 2147483648
  %v704 = vmul.f32 %v702, 1.442695
  %v705 = vpow.pop %v704
  %v706 = vmul.f32 %v703, 1.442695
  %v707 = vpow.pop %v706
  %v708 = vadd.f32 %v705, 1.0
  %v709 = vadd.f32 %v707, 1.0
  %v710 = vrcp.pop %v708
  %v711 = vmul.f32 1.0, %v710
  %v712 = vrcp.pop %v709
  %v713 = vmul.f32 1.0, %v712
  %v714 = vtanh.pop %v696
  %v715 = vtanh.pop %v699
  %716 = vrot.lane.b32.xlu0 %v58, 64
  %v717 = vpop.permute.xlu0 %716
  %718 = vrot.lane.b32.xlu0 %v59, 64
  %v719 = vpop.permute.xlu0 %718
  %v722 = vmul.f32 %v711, %v717
  %v723 = vmul.f32 %v713, %v719
  %726 = vrot.lane.b32.xlu0 %v714, 64
  %v727 = vpop.permute.xlu0 %726
  %728 = vrot.lane.b32.xlu0 %v715, 64
  %v729 = vpop.permute.xlu0 %728
  %v732 = vmul.f32 %v711, %v727
  %v733 = vmul.f32 %v713, %v729
  %736 = vrot.lane.b32.xlu0 %v732, 32
  %v737 = vpop.permute.xlu0 %736
  %738 = vrot.lane.b32.xlu0 %v733, 32
  %v739 = vpop.permute.xlu0 %738
  %v742 = vadd.f32 %v722, %v737
  %v743 = vadd.f32 %v723, %v739
  %v744 = vtanh.pop %v742
  %v745 = vtanh.pop %v743
  %748 = vrot.lane.b32.xlu0 %v744, 64
  %v749 = vpop.permute.xlu0 %748
  %750 = vrot.lane.b32.xlu0 %v745, 64
  %v751 = vpop.permute.xlu0 %750
  %v754 = vmul.f32 %v711, %v749
  %v755 = vmul.f32 %v713, %v751
  %758 = vrot.lane.b32.xlu0 %v754, 32
  %v759 = vpop.permute.xlu0 %758
  %760 = vrot.lane.b32.xlu0 %v755, 32
  %v761 = vpop.permute.xlu0 %760
  %v765 = vsel %vm93, %v57, 0
  %767 = vmatprep.subr.mxu0 0.0
  %768 = vmatpush1.msra.mxu0 %v759
  %769 = vmatprep.subr.mxu0 0.0
  %770 = vmatpush1.msra.mxu0 %v761
  %771 = vmatprep.subr.mxu0 0.0
  %772 = vmatpush1.msra.mxu0 0.0
  %773 = vmatprep.subr.mxu0 0.0
  %774 = vmatpush1.msra.mxu0 0.0
  %775 = vmatprep.subr.mxu0 0.0
  %776 = vmatpush1.msra.mxu0 0.0
  %777 = vmatprep.subr.mxu0 0.0
  %778 = vmatpush1.msra.mxu0 0.0
  %779 = vmatprep.subr.mxu0 0.0
  %780 = vmatpush1.msra.mxu0 0.0
  %781 = vmatprep.subr.mxu0 0.0
  %782 = vmatpush1.msra.mxu0 0.0
  %783 = vmatprep.subr.mxu0 0.0
  %784 = vmatpush1.msra.mxu0 0.0
  %785 = vmatprep.subr.mxu0 0.0
  %786 = vmatpush1.msra.mxu0 0.0
  %787 = vmatprep.subr.mxu0 0.0
  %788 = vmatpush1.msra.mxu0 0.0
  %789 = vmatprep.subr.mxu0 0.0
  %790 = vmatpush1.msra.mxu0 0.0
  %791 = vmatprep.subr.mxu0 0.0
  %792 = vmatpush1.msra.mxu0 0.0
  %793 = vmatprep.subr.mxu0 0.0
  %794 = vmatpush1.msra.mxu0 0.0
  %795 = vmatprep.subr.mxu0 0.0
  %796 = vmatpush1.msra.mxu0 0.0
  %797 = vmatprep.subr.mxu0 0.0
  %798 = vmatpush1.msra.mxu0 0.0
  %799 = vmatprep.subr.mxu0 0.0
  %800 = vmatpush1.msra.mxu0 0.0
  %801 = vmatprep.subr.mxu0 0.0
  %802 = vmatpush1.msra.mxu0 0.0
  %803 = vmatprep.subr.mxu0 0.0
  %804 = vmatpush1.msra.mxu0 0.0
  %805 = vmatprep.subr.mxu0 0.0
  %806 = vmatpush1.msra.mxu0 0.0
  %807 = vmatprep.subr.mxu0 0.0
  %808 = vmatpush1.msra.mxu0 0.0
  %809 = vmatprep.subr.mxu0 0.0
  %810 = vmatpush1.msra.mxu0 0.0
  %811 = vmatprep.subr.mxu0 0.0
  %812 = vmatpush1.msra.mxu0 0.0
  %813 = vmatprep.subr.mxu0 0.0
  %814 = vmatpush1.msra.mxu0 0.0
  %815 = vmatprep.subr.mxu0 0.0
  %816 = vmatpush1.msra.mxu0 0.0
  %817 = vmatprep.subr.mxu0 0.0
  %818 = vmatpush1.msra.mxu0 0.0
  %819 = vmatprep.subr.mxu0 0.0
  %820 = vmatpush1.msra.mxu0 0.0
  %821 = vmatprep.subr.mxu0 0.0
  %822 = vmatpush1.msra.mxu0 0.0
  %823 = vmatprep.subr.mxu0 0.0
  %824 = vmatpush1.msra.mxu0 0.0
  %825 = vmatprep.subr.mxu0 0.0
  %826 = vmatpush1.msra.mxu0 0.0
  %827 = vmatprep.subr.mxu0 0.0
  %828 = vmatpush1.msra.mxu0 0.0
  %829 = vmatprep.subr.mxu0 0.0
  %830 = vmatpush1.msra.mxu0 0.0
  %831 = vmatprep.mubr.f32.mxu0 0.0
  %832 = vmatmul.mubr.f32.gmra.mrb[0].mxu0 %v765
  %v833 = vpop.f32.mrb[0].mxu0
  %v834 = vadd.f32 0.0, %v833
  %v835 = vpop.f32.mrb[0].mxu0
  %836 = vdwg.mxu0
  %v837 = vmul.f32 %v834, 0.1
  %s838 = scalar_lea.vmem %s9, 1
  %v839 = vld [vmem:[%s838] sm:$0x1]
  %v840 = vmul.f32 %v837, %v839
  %v841 = vlaneseq
  %v842 = vshrl.u32 %v841, 7
  %v843 = vsub.s32 0, %v842
  %v844 = vrot.slane %v840, %v843
  %846 = vrot.lane.b32.xlu0 %v844, 96
  %v847 = vpop.permute.xlu0 %846
  %v849 = vsub.f32 %v754, %v847
  %v850 = vsub.f32 %v755, %v847
  %v851 = vmul.f32 %v849, %v849
  %v852 = vmul.f32 %v850, %v850
  %855 = vrot.lane.b32.xlu0 %v851, 32
  %v856 = vpop.permute.xlu0 %855
  %857 = vrot.lane.b32.xlu0 %v852, 32
  %v858 = vpop.permute.xlu0 %857
  %861 = vmatprep.subr.mxu0 0.0
  %862 = vmatpush1.msra.mxu0 %v856
  %863 = vmatprep.subr.mxu0 0.0
  %864 = vmatpush1.msra.mxu0 %v858
  %865 = vmatprep.subr.mxu0 0.0
  %866 = vmatpush1.msra.mxu0 0.0
  %867 = vmatprep.subr.mxu0 0.0
  %868 = vmatpush1.msra.mxu0 0.0
  %869 = vmatprep.subr.mxu0 0.0
  %870 = vmatpush1.msra.mxu0 0.0
  %871 = vmatprep.subr.mxu0 0.0
  %872 = vmatpush1.msra.mxu0 0.0
  %873 = vmatprep.subr.mxu0 0.0
  %874 = vmatpush1.msra.mxu0 0.0
  %875 = vmatprep.subr.mxu0 0.0
  %876 = vmatpush1.msra.mxu0 0.0
  %877 = vmatprep.subr.mxu0 0.0
  %878 = vmatpush1.msra.mxu0 0.0
  %879 = vmatprep.subr.mxu0 0.0
  %880 = vmatpush1.msra.mxu0 0.0
  %881 = vmatprep.subr.mxu0 0.0
  %882 = vmatpush1.msra.mxu0 0.0
  %883 = vmatprep.subr.mxu0 0.0
  %884 = vmatpush1.msra.mxu0 0.0
  %885 = vmatprep.subr.mxu0 0.0
  %886 = vmatpush1.msra.mxu0 0.0
  %887 = vmatprep.subr.mxu0 0.0
  %888 = vmatpush1.msra.mxu0 0.0
  %889 = vmatprep.subr.mxu0 0.0
  %890 = vmatpush1.msra.mxu0 0.0
  %891 = vmatprep.subr.mxu0 0.0
  %892 = vmatpush1.msra.mxu0 0.0
  %893 = vmatprep.subr.mxu0 0.0
  %894 = vmatpush1.msra.mxu0 0.0
  %895 = vmatprep.subr.mxu0 0.0
  %896 = vmatpush1.msra.mxu0 0.0
  %897 = vmatprep.subr.mxu0 0.0
  %898 = vmatpush1.msra.mxu0 0.0
  %899 = vmatprep.subr.mxu0 0.0
  %900 = vmatpush1.msra.mxu0 0.0
  %901 = vmatprep.subr.mxu0 0.0
  %902 = vmatpush1.msra.mxu0 0.0
  %903 = vmatprep.subr.mxu0 0.0
  %904 = vmatpush1.msra.mxu0 0.0
  %905 = vmatprep.subr.mxu0 0.0
  %906 = vmatpush1.msra.mxu0 0.0
  %907 = vmatprep.subr.mxu0 0.0
  %908 = vmatpush1.msra.mxu0 0.0
  %909 = vmatprep.subr.mxu0 0.0
  %910 = vmatpush1.msra.mxu0 0.0
  %911 = vmatprep.subr.mxu0 0.0
  %912 = vmatpush1.msra.mxu0 0.0
  %913 = vmatprep.subr.mxu0 0.0
  %914 = vmatpush1.msra.mxu0 0.0
  %915 = vmatprep.subr.mxu0 0.0
  %916 = vmatpush1.msra.mxu0 0.0
  %917 = vmatprep.subr.mxu0 0.0
  %918 = vmatpush1.msra.mxu0 0.0
  %919 = vmatprep.subr.mxu0 0.0
  %920 = vmatpush1.msra.mxu0 0.0
  %921 = vmatprep.subr.mxu0 0.0
  %922 = vmatpush1.msra.mxu0 0.0
  %923 = vmatprep.subr.mxu0 0.0
  %924 = vmatpush1.msra.mxu0 0.0
  %925 = vmatprep.mubr.f32.mxu0 0.0
  %926 = vmatmul.mubr.f32.gmra.mrb[0].mxu0 %v765
  %v927 = vpop.f32.mrb[0].mxu0
  %v928 = vadd.f32 0.0, %v927
  %v929 = vpop.f32.mrb[0].mxu0
  %930 = vdwg.mxu0
  %v931 = vmul.f32 %v928, 0.1
  %s932 = scalar_lea.vmem %s7, 1
  %v933 = vld [vmem:[%s932] sm:$0x1]
  %v935 = vlaneseq
  %v936 = vshrl.u32 %v935, 7
  %v937 = vsub.s32 0, %v936
  %v938 = vrot.slane %v933, %v937
  %942 = vrot.lane.b32.xlu0 %v849, 32
  %v943 = vpop.permute.xlu0 %942
  %944 = vrot.lane.b32.xlu0 %v850, 32
  %v945 = vpop.permute.xlu0 %944
  %v948 = vmul.f32 %v938, %v943
  %v949 = vmul.f32 %v938, %v945
  %v950 = vadd.f32 %v931, 1e-05
  %v951 = vrsqrt.pop %v950
  %v952 = vlaneseq
  %v953 = vshrl.u32 %v952, 7
  %v954 = vsub.s32 0, %v953
  %v955 = vrot.slane %v951, %v954
  %v956 = vmul.f32 %v948, %v955
  %v957 = vmul.f32 %v949, %v955
  %s958 = scalar_lea.vmem %s8, 1
  %v959 = vld [vmem:[%s958] sm:$0x1]
  %v961 = vlaneseq
  %v962 = vshrl.u32 %v961, 7
  %v963 = vsub.s32 0, %v962
  %v964 = vrot.slane %v959, %v963
  %v966 = vadd.f32 %v956, %v964
  %v967 = vadd.f32 %v957, %v964
  %v968 = vpack.c.bf16 %v524, %v523
  %v969 = vpack.c.bf16 %v967, %v966
  %vm970 = vcmask 261120
  %971 = vst.msk [vmem:[#allocation2] sm:$0xff] %vm970, %v968
  %972 = vst.msk [vmem:[%s79] sm:$0xff] %vm970, %v969
  %v973 = vld [vmem:[%s3] sm:$0xf]
  %v974 = vld [vmem:[%s3 + $0x4] sm:$0xf]
  %v977 = vunpack.c.l.b16 %v973
  %v978 = vunpack.c.l.b16 %v974
  %v979 = vpack.c.b16 %v978, %v977
  %v981 = vsel %vm93, %v979, 0
  %983 = vmatprep.subr.bf16.mxu0 0
  %984 = vmatpush1.bf16.msra.mxu0 %v969
  %985 = vmatprep.subr.bf16.mxu0 0
  %986 = vmatpush1.bf16.msra.mxu0 0
  %987 = vmatprep.subr.bf16.mxu0 0
  %988 = vmatpush1.bf16.msra.mxu0 0
  %989 = vmatprep.subr.bf16.mxu0 0
  %990 = vmatpush1.bf16.msra.mxu0 0
  %991 = vmatprep.subr.bf16.mxu0 0
  %992 = vmatpush1.bf16.msra.mxu0 0
  %993 = vmatprep.subr.bf16.mxu0 0
  %994 = vmatpush1.bf16.msra.mxu0 0
  %995 = vmatprep.subr.bf16.mxu0 0
  %996 = vmatpush1.bf16.msra.mxu0 0
  %997 = vmatprep.subr.bf16.mxu0 0
  %998 = vmatpush1.bf16.msra.mxu0 0
  %999 = vmatprep.subr.bf16.mxu0 0
  %1000 = vmatpush1.bf16.msra.mxu0 0
  %1001 = vmatprep.subr.bf16.mxu0 0
  %1002 = vmatpush1.bf16.msra.mxu0 0
  %1003 = vmatprep.subr.bf16.mxu0 0
  %1004 = vmatpush1.bf16.msra.mxu0 0
  %1005 = vmatprep.subr.bf16.mxu0 0
  %1006 = vmatpush1.bf16.msra.mxu0 0
  %1007 = vmatprep.subr.bf16.mxu0 0
  %1008 = vmatpush1.bf16.msra.mxu0 0
  %1009 = vmatprep.subr.bf16.mxu0 0
  %1010 = vmatpush1.bf16.msra.mxu0 0
  %1011 = vmatprep.subr.bf16.mxu0 0
  %1012 = vmatpush1.bf16.msra.mxu0 0
  %1013 = vmatprep.subr.bf16.mxu0 0
  %1014 = vmatpush1.bf16.msra.mxu0 0
  %1015 = vmatprep.mubr.bf16.mxu0 0
  %1016 = vmatmul.mubr.bf16.gmra.mrb[0].mxu0 %v981
  %v1017 = vpop.f32.mrb[0].mxu0
  %v1018 = vadd.f32 0.0, %v1017
  %v1019 = vpop.f32.mrb[0].mxu0
  %v1020 = vpop.f32.mrb[0].mxu0
  %v1021 = vadd.f32 0.0, %v1020
  %v1022 = vpop.f32.mrb[0].mxu0
  %1023 = vdwg.mxu0
  %v1024 = vpack.c.bf16 %v1021, %v1018
  %1026 = vrot.lane.b32.xlu0 %v1024, 64
  %v1027 = vpop.permute.xlu0 %1026
  %1029 = vst.msk [vmem:[#allocation2] sm:$0xff] %vm143, %v1027
  %1031 = vrot.lane.b32.xlu0 %v968, 96
  %v1032 = vpop.permute.xlu0 %1031
  %1034 = vst.msk [vmem:[#allocation2] sm:$0xff] %vm145, %v1032
  %v1035 = vld [vmem:[#allocation2] sm:$0xff]
  %s1036 = scalar_lea.vmem %s5, 128
  %v1037 = vld [vmem:[%s1036] sm:$0xf]
  %v1038 = vld [vmem:[%s1036 + $0x4] sm:$0xf]
  %v1039 = vld [vmem:[%s1036 + $0x8] sm:$0xf]
  %v1040 = vld [vmem:[%s1036 + $0xc] sm:$0xf]
  %v1041 = vld [vmem:[%s1036 + $0x10] sm:$0xf]
  %v1042 = vld [vmem:[%s1036 + $0x14] sm:$0xf]
  %v1043 = vld [vmem:[%s1036 + $0x18] sm:$0xf]
  %v1044 = vld [vmem:[%s1036 + $0x1c] sm:$0xf]
  %v1045 = vld [vmem:[%s1036 + $0x20] sm:$0xf]
  %v1046 = vld [vmem:[%s1036 + $0x24] sm:$0xf]
  %v1047 = vld [vmem:[%s1036 + $0x28] sm:$0xf]
  %v1048 = vld [vmem:[%s1036 + $0x2c] sm:$0xf]
  %v1049 = vld [vmem:[%s1036 + $0x30] sm:$0xf]
  %v1050 = vld [vmem:[%s1036 + $0x34] sm:$0xf]
  %v1051 = vld [vmem:[%s1036 + $0x38] sm:$0xf]
  %v1052 = vld [vmem:[%s1036 + $0x3c] sm:$0xf]
  %s1053 = scalar_lea.vmem %s6, 2
  %v1054 = vld [vmem:[%s1053] sm:$0x1]
  %v1056 = vlaneseq
  %v1057 = vshrl.u32 %v1056, 7
  %v1058 = vsub.s32 0, %v1057
  %v1059 = vrot.slane %v1054, %v1058
  %v1077 = vunpack.c.l.b16 %v1037
  %v1078 = vunpack.c.l.b16 %v1038
  %v1079 = vunpack.c.l.b16 %v1039
  %v1080 = vunpack.c.l.b16 %v1040
  %v1081 = vunpack.c.l.b16 %v1041
  %v1082 = vunpack.c.l.b16 %v1042
  %v1083 = vunpack.c.l.b16 %v1043
  %v1084 = vunpack.c.l.b16 %v1044
  %v1085 = vunpack.c.l.b16 %v1045
  %v1086 = vunpack.c.l.b16 %v1046
  %v1087 = vunpack.c.l.b16 %v1047
  %v1088 = vunpack.c.l.b16 %v1048
  %v1089 = vunpack.c.l.b16 %v1049
  %v1090 = vunpack.c.l.b16 %v1050
  %v1091 = vunpack.c.l.b16 %v1051
  %v1092 = vunpack.c.l.b16 %v1052
  %v1093 = vpack.c.b16 %v1078, %v1077
  %v1094 = vpack.c.b16 %v1080, %v1079
  %v1095 = vpack.c.b16 %v1082, %v1081
  %v1096 = vpack.c.b16 %v1084, %v1083
  %v1097 = vpack.c.b16 %v1086, %v1085
  %v1098 = vpack.c.b16 %v1088, %v1087
  %v1099 = vpack.c.b16 %v1090, %v1089
  %v1100 = vpack.c.b16 %v1092, %v1091
  %1109 = vmatprep.subr.bf16.mxu0 0
  %1110 = vmatpush1.bf16.msra.mxu0 %v1093
  %1111 = vmatprep.subr.bf16.mxu0 0
  %1112 = vmatpush1.bf16.msra.mxu0 %v1094
  %1113 = vmatprep.subr.bf16.mxu0 0
  %1114 = vmatpush1.bf16.msra.mxu0 %v1095
  %1115 = vmatprep.subr.bf16.mxu0 0
  %1116 = vmatpush1.bf16.msra.mxu0 %v1096
  %1117 = vmatprep.subr.bf16.mxu0 0
  %1118 = vmatpush1.bf16.msra.mxu0 %v1097
  %1119 = vmatprep.subr.bf16.mxu0 0
  %1120 = vmatpush1.bf16.msra.mxu0 %v1098
  %1121 = vmatprep.subr.bf16.mxu0 0
  %1122 = vmatpush1.bf16.msra.mxu0 %v1099
  %1123 = vmatprep.subr.bf16.mxu0 0
  %1124 = vmatpush1.bf16.msra.mxu0 %v1100
  %1125 = vmatprep.subr.bf16.mxu0 0
  %1126 = vmatpush1.bf16.msra.mxu0 0
  %1127 = vmatprep.subr.bf16.mxu0 0
  %1128 = vmatpush1.bf16.msra.mxu0 0
  %1129 = vmatprep.subr.bf16.mxu0 0
  %1130 = vmatpush1.bf16.msra.mxu0 0
  %1131 = vmatprep.subr.bf16.mxu0 0
  %1132 = vmatpush1.bf16.msra.mxu0 0
  %1133 = vmatprep.subr.bf16.mxu0 0
  %1134 = vmatpush1.bf16.msra.mxu0 0
  %1135 = vmatprep.subr.bf16.mxu0 0
  %1136 = vmatpush1.bf16.msra.mxu0 0
  %1137 = vmatprep.subr.bf16.mxu0 0
  %1138 = vmatpush1.bf16.msra.mxu0 0
  %1139 = vmatprep.subr.bf16.mxu0 0
  %1140 = vmatpush1.bf16.msra.mxu0 0
  %1141 = vmatprep.mubr.bf16.mxu0 0
  %1142 = vmatmul.mubr.bf16.gmra.mrb[0].mxu0 %v1035
  %v1143 = vpop.f32.mrb[0].mxu0
  %v1144 = vadd.f32 %v1059, %v1143
  %v1145 = vpop.f32.mrb[0].mxu0
  %v1146 = vpop.f32.mrb[0].mxu0
  %v1147 = vadd.f32 %v1059, %v1146
  %v1148 = vpop.f32.mrb[0].mxu0
  %1149 = vdwg.mxu0
  %v1150 = vxor.u32 %v1144, 2147483648
  %v1151 = vxor.u32 %v1147, 2147483648
  %v1152 = vmul.f32 %v1150, 1.442695
  %v1153 = vpow.pop %v1152
  %v1154 = vmul.f32 %v1151, 1.442695
  %v1155 = vpow.pop %v1154
  %v1156 = vadd.f32 %v1153, 1.0
  %v1157 = vadd.f32 %v1155, 1.0
  %v1158 = vrcp.pop %v1156
  %v1159 = vmul.f32 1.0, %v1158
  %v1160 = vrcp.pop %v1157
  %v1161 = vmul.f32 1.0, %v1160
  %v1162 = vtanh.pop %v1144
  %v1163 = vtanh.pop %v1147
  %v1164 = vmul.f32 %v1159, %v302
  %v1165 = vmul.f32 %v1161, %v303
  %1168 = vrot.lane.b32.xlu0 %v1162, 64
  %v1169 = vpop.permute.xlu0 %1168
  %1170 = vrot.lane.b32.xlu0 %v1163, 64
  %v1171 = vpop.permute.xlu0 %1170
  %v1174 = vmul.f32 %v1159, %v1169
  %v1175 = vmul.f32 %v1161, %v1171
  %1178 = vrot.lane.b32.xlu0 %v1174, 32
  %v1179 = vpop.permute.xlu0 %1178
  %1180 = vrot.lane.b32.xlu0 %v1175, 32
  %v1181 = vpop.permute.xlu0 %1180
  %v1184 = vadd.f32 %v1164, %v1179
  %v1185 = vadd.f32 %v1165, %v1181
  %v1186 = vtanh.pop %v1184
  %v1187 = vtanh.pop %v1185
  %1190 = vrot.lane.b32.xlu0 %v1186, 64
  %v1191 = vpop.permute.xlu0 %1190
  %1192 = vrot.lane.b32.xlu0 %v1187, 64
  %v1193 = vpop.permute.xlu0 %1192
  %v1196 = vmul.f32 %v1159, %v1191
  %v1197 = vmul.f32 %v1161, %v1193
  %1200 = vrot.lane.b32.xlu0 %v1196, 32
  %v1201 = vpop.permute.xlu0 %1200
  %1202 = vrot.lane.b32.xlu0 %v1197, 32
  %v1203 = vpop.permute.xlu0 %1202
  %1206 = vmatprep.subr.mxu0 0.0
  %1207 = vmatpush1.msra.mxu0 %v1201
  %1208 = vmatprep.subr.mxu0 0.0
  %1209 = vmatpush1.msra.mxu0 %v1203
  %1210 = vmatprep.subr.mxu0 0.0
  %1211 = vmatpush1.msra.mxu0 0.0
  %1212 = vmatprep.subr.mxu0 0.0
  %1213 = vmatpush1.msra.mxu0 0.0
  %1214 = vmatprep.subr.mxu0 0.0
  %1215 = vmatpush1.msra.mxu0 0.0
  %1216 = vmatprep.subr.mxu0 0.0
  %1217 = vmatpush1.msra.mxu0 0.0
  %1218 = vmatprep.subr.mxu0 0.0
  %1219 = vmatpush1.msra.mxu0 0.0
  %1220 = vmatprep.subr.mxu0 0.0
  %1221 = vmatpush1.msra.mxu0 0.0
  %1222 = vmatprep.subr.mxu0 0.0
  %1223 = vmatpush1.msra.mxu0 0.0
  %1224 = vmatprep.subr.mxu0 0.0
  %1225 = vmatpush1.msra.mxu0 0.0
  %1226 = vmatprep.subr.mxu0 0.0
  %1227 = vmatpush1.msra.mxu0 0.0
  %1228 = vmatprep.subr.mxu0 0.0
  %1229 = vmatpush1.msra.mxu0 0.0
  %1230 = vmatprep.subr.mxu0 0.0
  %1231 = vmatpush1.msra.mxu0 0.0
  %1232 = vmatprep.subr.mxu0 0.0
  %1233 = vmatpush1.msra.mxu0 0.0
  %1234 = vmatprep.subr.mxu0 0.0
  %1235 = vmatpush1.msra.mxu0 0.0
  %1236 = vmatprep.subr.mxu0 0.0
  %1237 = vmatpush1.msra.mxu0 0.0
  %1238 = vmatprep.subr.mxu0 0.0
  %1239 = vmatpush1.msra.mxu0 0.0
  %1240 = vmatprep.subr.mxu0 0.0
  %1241 = vmatpush1.msra.mxu0 0.0
  %1242 = vmatprep.subr.mxu0 0.0
  %1243 = vmatpush1.msra.mxu0 0.0
  %1244 = vmatprep.subr.mxu0 0.0
  %1245 = vmatpush1.msra.mxu0 0.0
  %1246 = vmatprep.subr.mxu0 0.0
  %1247 = vmatpush1.msra.mxu0 0.0
  %1248 = vmatprep.subr.mxu0 0.0
  %1249 = vmatpush1.msra.mxu0 0.0
  %1250 = vmatprep.subr.mxu0 0.0
  %1251 = vmatpush1.msra.mxu0 0.0
  %1252 = vmatprep.subr.mxu0 0.0
  %1253 = vmatpush1.msra.mxu0 0.0
  %1254 = vmatprep.subr.mxu0 0.0
  %1255 = vmatpush1.msra.mxu0 0.0
  %1256 = vmatprep.subr.mxu0 0.0
  %1257 = vmatpush1.msra.mxu0 0.0
  %1258 = vmatprep.subr.mxu0 0.0
  %1259 = vmatpush1.msra.mxu0 0.0
  %1260 = vmatprep.subr.mxu0 0.0
  %1261 = vmatpush1.msra.mxu0 0.0
  %1262 = vmatprep.subr.mxu0 0.0
  %1263 = vmatpush1.msra.mxu0 0.0
  %1264 = vmatprep.subr.mxu0 0.0
  %1265 = vmatpush1.msra.mxu0 0.0
  %1266 = vmatprep.subr.mxu0 0.0
  %1267 = vmatpush1.msra.mxu0 0.0
  %1268 = vmatprep.subr.mxu0 0.0
  %1269 = vmatpush1.msra.mxu0 0.0
  %1270 = vmatprep.mubr.f32.mxu0 0.0
  %1271 = vmatmul.mubr.f32.gmra.mrb[0].mxu0 %v325
  %v1272 = vpop.f32.mrb[0].mxu0
  %v1273 = vadd.f32 0.0, %v1272
  %v1274 = vpop.f32.mrb[0].mxu0
  %1275 = vdwg.mxu0
  %v1276 = vmul.f32 %v1273, 0.083333336
  %s1277 = scalar_lea.vmem %s9, 2
  %v1278 = vld [vmem:[%s1277] sm:$0x1]
  %v1279 = vmul.f32 %v1276, %v1278
  %v1280 = vlaneseq
  %v1281 = vshrl.u32 %v1280, 7
  %v1282 = vsub.s32 0, %v1281
  %v1283 = vrot.slane %v1279, %v1282
  %1285 = vrot.lane.b32.xlu0 %v1283, 96
  %v1286 = vpop.permute.xlu0 %1285
  %v1288 = vsub.f32 %v1196, %v1286
  %v1289 = vsub.f32 %v1197, %v1286
  %v1290 = vmul.f32 %v1288, %v1288
  %v1291 = vmul.f32 %v1289, %v1289
  %1294 = vrot.lane.b32.xlu0 %v1290, 32
  %v1295 = vpop.permute.xlu0 %1294
  %1296 = vrot.lane.b32.xlu0 %v1291, 32
  %v1297 = vpop.permute.xlu0 %1296
  %1300 = vmatprep.subr.mxu0 0.0
  %1301 = vmatpush1.msra.mxu0 %v1295
  %1302 = vmatprep.subr.mxu0 0.0
  %1303 = vmatpush1.msra.mxu0 %v1297
  %1304 = vmatprep.subr.mxu0 0.0
  %1305 = vmatpush1.msra.mxu0 0.0
  %1306 = vmatprep.subr.mxu0 0.0
  %1307 = vmatpush1.msra.mxu0 0.0
  %1308 = vmatprep.subr.mxu0 0.0
  %1309 = vmatpush1.msra.mxu0 0.0
  %1310 = vmatprep.subr.mxu0 0.0
  %1311 = vmatpush1.msra.mxu0 0.0
  %1312 = vmatprep.subr.mxu0 0.0
  %1313 = vmatpush1.msra.mxu0 0.0
  %1314 = vmatprep.subr.mxu0 0.0
  %1315 = vmatpush1.msra.mxu0 0.0
  %1316 = vmatprep.subr.mxu0 0.0
  %1317 = vmatpush1.msra.mxu0 0.0
  %1318 = vmatprep.subr.mxu0 0.0
  %1319 = vmatpush1.msra.mxu0 0.0
  %1320 = vmatprep.subr.mxu0 0.0
  %1321 = vmatpush1.msra.mxu0 0.0
  %1322 = vmatprep.subr.mxu0 0.0
  %1323 = vmatpush1.msra.mxu0 0.0
  %1324 = vmatprep.subr.mxu0 0.0
  %1325 = vmatpush1.msra.mxu0 0.0
  %1326 = vmatprep.subr.mxu0 0.0
  %1327 = vmatpush1.msra.mxu0 0.0
  %1328 = vmatprep.subr.mxu0 0.0
  %1329 = vmatpush1.msra.mxu0 0.0
  %1330 = vmatprep.subr.mxu0 0.0
  %1331 = vmatpush1.msra.mxu0 0.0
  %1332 = vmatprep.subr.mxu0 0.0
  %1333 = vmatpush1.msra.mxu0 0.0
  %1334 = vmatprep.subr.mxu0 0.0
  %1335 = vmatpush1.msra.mxu0 0.0
  %1336 = vmatprep.subr.mxu0 0.0
  %1337 = vmatpush1.msra.mxu0 0.0
  %1338 = vmatprep.subr.mxu0 0.0
  %1339 = vmatpush1.msra.mxu0 0.0
  %1340 = vmatprep.subr.mxu0 0.0
  %1341 = vmatpush1.msra.mxu0 0.0
  %1342 = vmatprep.subr.mxu0 0.0
  %1343 = vmatpush1.msra.mxu0 0.0
  %1344 = vmatprep.subr.mxu0 0.0
  %1345 = vmatpush1.msra.mxu0 0.0
  %1346 = vmatprep.subr.mxu0 0.0
  %1347 = vmatpush1.msra.mxu0 0.0
  %1348 = vmatprep.subr.mxu0 0.0
  %1349 = vmatpush1.msra.mxu0 0.0
  %1350 = vmatprep.subr.mxu0 0.0
  %1351 = vmatpush1.msra.mxu0 0.0
  %1352 = vmatprep.subr.mxu0 0.0
  %1353 = vmatpush1.msra.mxu0 0.0
  %1354 = vmatprep.subr.mxu0 0.0
  %1355 = vmatpush1.msra.mxu0 0.0
  %1356 = vmatprep.subr.mxu0 0.0
  %1357 = vmatpush1.msra.mxu0 0.0
  %1358 = vmatprep.subr.mxu0 0.0
  %1359 = vmatpush1.msra.mxu0 0.0
  %1360 = vmatprep.subr.mxu0 0.0
  %1361 = vmatpush1.msra.mxu0 0.0
  %1362 = vmatprep.subr.mxu0 0.0
  %1363 = vmatpush1.msra.mxu0 0.0
  %1364 = vmatprep.mubr.f32.mxu0 0.0
  %1365 = vmatmul.mubr.f32.gmra.mrb[0].mxu0 %v325
  %v1366 = vpop.f32.mrb[0].mxu0
  %v1367 = vadd.f32 0.0, %v1366
  %v1368 = vpop.f32.mrb[0].mxu0
  %1369 = vdwg.mxu0
  %v1370 = vmul.f32 %v1367, 0.083333336
  %s1371 = scalar_lea.vmem %s7, 2
  %v1372 = vld [vmem:[%s1371] sm:$0x1]
  %v1374 = vlaneseq
  %v1375 = vshrl.u32 %v1374, 7
  %v1376 = vsub.s32 0, %v1375
  %v1377 = vrot.slane %v1372, %v1376
  %1381 = vrot.lane.b32.xlu0 %v1288, 32
  %v1382 = vpop.permute.xlu0 %1381
  %1383 = vrot.lane.b32.xlu0 %v1289, 32
  %v1384 = vpop.permute.xlu0 %1383
  %v1387 = vmul.f32 %v1377, %v1382
  %v1388 = vmul.f32 %v1377, %v1384
  %v1389 = vadd.f32 %v1370, 1e-05
  %v1390 = vrsqrt.pop %v1389
  %v1391 = vlaneseq
  %v1392 = vshrl.u32 %v1391, 7
  %v1393 = vsub.s32 0, %v1392
  %v1394 = vrot.slane %v1390, %v1393
  %v1395 = vmul.f32 %v1387, %v1394
  %v1396 = vmul.f32 %v1388, %v1394
  %s1397 = scalar_lea.vmem %s8, 2
  %v1398 = vld [vmem:[%s1397] sm:$0x1]
  %v1400 = vlaneseq
  %v1401 = vshrl.u32 %v1400, 7
  %v1402 = vsub.s32 0, %v1401
  %v1403 = vrot.slane %v1398, %v1402
  %v1405 = vadd.f32 %v1395, %v1403
  %v1406 = vadd.f32 %v1396, %v1403
  %v1407 = vld [vmem:[%s525] sm:$0xf]
  %v1408 = vld [vmem:[%s525 + $0x4] sm:$0xf]
  %v1411 = vunpack.c.l.b16 %v1407
  %v1412 = vunpack.c.l.b16 %v1408
  %v1413 = vpack.c.b16 %v1412, %v1411
  %v1415 = vsel %vm93, %v1413, 0
  %1417 = vmatprep.subr.bf16.mxu0 0
  %1418 = vmatpush1.bf16.msra.mxu0 %v968
  %1419 = vmatprep.subr.bf16.mxu0 0
  %1420 = vmatpush1.bf16.msra.mxu0 0
  %1421 = vmatprep.subr.bf16.mxu0 0
  %1422 = vmatpush1.bf16.msra.mxu0 0
  %1423 = vmatprep.subr.bf16.mxu0 0
  %1424 = vmatpush1.bf16.msra.mxu0 0
  %1425 = vmatprep.subr.bf16.mxu0 0
  %1426 = vmatpush1.bf16.msra.mxu0 0
  %1427 = vmatprep.subr.bf16.mxu0 0
  %1428 = vmatpush1.bf16.msra.mxu0 0
  %1429 = vmatprep.subr.bf16.mxu0 0
  %1430 = vmatpush1.bf16.msra.mxu0 0
  %1431 = vmatprep.subr.bf16.mxu0 0
  %1432 = vmatpush1.bf16.msra.mxu0 0
  %1433 = vmatprep.subr.bf16.mxu0 0
  %1434 = vmatpush1.bf16.msra.mxu0 0
  %1435 = vmatprep.subr.bf16.mxu0 0
  %1436 = vmatpush1.bf16.msra.mxu0 0
  %1437 = vmatprep.subr.bf16.mxu0 0
  %1438 = vmatpush1.bf16.msra.mxu0 0
  %1439 = vmatprep.subr.bf16.mxu0 0
  %1440 = vmatpush1.bf16.msra.mxu0 0
  %1441 = vmatprep.subr.bf16.mxu0 0
  %1442 = vmatpush1.bf16.msra.mxu0 0
  %1443 = vmatprep.subr.bf16.mxu0 0
  %1444 = vmatpush1.bf16.msra.mxu0 0
  %1445 = vmatprep.subr.bf16.mxu0 0
  %1446 = vmatpush1.bf16.msra.mxu0 0
  %1447 = vmatprep.subr.bf16.mxu0 0
  %1448 = vmatpush1.bf16.msra.mxu0 0
  %1449 = vmatprep.mubr.bf16.mxu0 0
  %1450 = vmatmul.mubr.bf16.gmra.mrb[0].mxu0 %v1415
  %v1451 = vpop.f32.mrb[0].mxu0
  %v1452 = vadd.f32 0.0, %v1451
  %v1453 = vpop.f32.mrb[0].mxu0
  %v1454 = vpop.f32.mrb[0].mxu0
  %v1455 = vadd.f32 0.0, %v1454
  %v1456 = vpop.f32.mrb[0].mxu0
  %1457 = vdwg.mxu0
  %v1458 = vpack.c.bf16 %v1455, %v1452
  %1460 = vrot.lane.b32.xlu0 %v1458, 64
  %v1461 = vpop.permute.xlu0 %1460
  %1463 = vst.msk [vmem:[%s79] sm:$0xff] %vm143, %v1461
  %1465 = vrot.lane.b32.xlu0 %v969, 96
  %v1466 = vpop.permute.xlu0 %1465
  %1468 = vst.msk [vmem:[%s79] sm:$0xff] %vm145, %v1466
  %v1469 = vld [vmem:[%s79] sm:$0xff]
  %s1470 = scalar_lea.vmem %s5, 192
  %v1471 = vld [vmem:[%s1470] sm:$0xf]
  %v1472 = vld [vmem:[%s1470 + $0x4] sm:$0xf]
  %v1473 = vld [vmem:[%s1470 + $0x8] sm:$0xf]
  %v1474 = vld [vmem:[%s1470 + $0xc] sm:$0xf]
  %v1475 = vld [vmem:[%s1470 + $0x10] sm:$0xf]
  %v1476 = vld [vmem:[%s1470 + $0x14] sm:$0xf]
  %v1477 = vld [vmem:[%s1470 + $0x18] sm:$0xf]
  %v1478 = vld [vmem:[%s1470 + $0x1c] sm:$0xf]
  %v1479 = vld [vmem:[%s1470 + $0x20] sm:$0xf]
  %v1480 = vld [vmem:[%s1470 + $0x24] sm:$0xf]
  %v1481 = vld [vmem:[%s1470 + $0x28] sm:$0xf]
  %v1482 = vld [vmem:[%s1470 + $0x2c] sm:$0xf]
  %v1483 = vld [vmem:[%s1470 + $0x30] sm:$0xf]
  %v1484 = vld [vmem:[%s1470 + $0x34] sm:$0xf]
  %v1485 = vld [vmem:[%s1470 + $0x38] sm:$0xf]
  %v1486 = vld [vmem:[%s1470 + $0x3c] sm:$0xf]
  %s1487 = scalar_lea.vmem %s6, 3
  %v1488 = vld [vmem:[%s1487] sm:$0x1]
  %v1490 = vlaneseq
  %v1491 = vshrl.u32 %v1490, 7
  %v1492 = vsub.s32 0, %v1491
  %v1493 = vrot.slane %v1488, %v1492
  %v1511 = vunpack.c.l.b16 %v1471
  %v1512 = vunpack.c.l.b16 %v1472
  %v1513 = vunpack.c.l.b16 %v1473
  %v1514 = vunpack.c.l.b16 %v1474
  %v1515 = vunpack.c.l.b16 %v1475
  %v1516 = vunpack.c.l.b16 %v1476
  %v1517 = vunpack.c.l.b16 %v1477
  %v1518 = vunpack.c.l.b16 %v1478
  %v1519 = vunpack.c.l.b16 %v1479
  %v1520 = vunpack.c.l.b16 %v1480
  %v1521 = vunpack.c.l.b16 %v1481
  %v1522 = vunpack.c.l.b16 %v1482
  %v1523 = vunpack.c.l.b16 %v1483
  %v1524 = vunpack.c.l.b16 %v1484
  %v1525 = vunpack.c.l.b16 %v1485
  %v1526 = vunpack.c.l.b16 %v1486
  %v1527 = vpack.c.b16 %v1512, %v1511
  %v1528 = vpack.c.b16 %v1514, %v1513
  %v1529 = vpack.c.b16 %v1516, %v1515
  %v1530 = vpack.c.b16 %v1518, %v1517
  %v1531 = vpack.c.b16 %v1520, %v1519
  %v1532 = vpack.c.b16 %v1522, %v1521
  %v1533 = vpack.c.b16 %v1524, %v1523
  %v1534 = vpack.c.b16 %v1526, %v1525
  %1543 = vmatprep.subr.bf16.mxu0 0
  %1544 = vmatpush1.bf16.msra.mxu0 %v1527
  %1545 = vmatprep.subr.bf16.mxu0 0
  %1546 = vmatpush1.bf16.msra.mxu0 %v1528
  %1547 = vmatprep.subr.bf16.mxu0 0
  %1548 = vmatpush1.bf16.msra.mxu0 %v1529
  %1549 = vmatprep.subr.bf16.mxu0 0
  %1550 = vmatpush1.bf16.msra.mxu0 %v1530
  %1551 = vmatprep.subr.bf16.mxu0 0
  %1552 = vmatpush1.bf16.msra.mxu0 %v1531
  %1553 = vmatprep.subr.bf16.mxu0 0
  %1554 = vmatpush1.bf16.msra.mxu0 %v1532
  %1555 = vmatprep.subr.bf16.mxu0 0
  %1556 = vmatpush1.bf16.msra.mxu0 %v1533
  %1557 = vmatprep.subr.bf16.mxu0 0
  %1558 = vmatpush1.bf16.msra.mxu0 %v1534
  %1559 = vmatprep.subr.bf16.mxu0 0
  %1560 = vmatpush1.bf16.msra.mxu0 0
  %1561 = vmatprep.subr.bf16.mxu0 0
  %1562 = vmatpush1.bf16.msra.mxu0 0
  %1563 = vmatprep.subr.bf16.mxu0 0
  %1564 = vmatpush1.bf16.msra.mxu0 0
  %1565 = vmatprep.subr.bf16.mxu0 0
  %1566 = vmatpush1.bf16.msra.mxu0 0
  %1567 = vmatprep.subr.bf16.mxu0 0
  %1568 = vmatpush1.bf16.msra.mxu0 0
  %1569 = vmatprep.subr.bf16.mxu0 0
  %1570 = vmatpush1.bf16.msra.mxu0 0
  %1571 = vmatprep.subr.bf16.mxu0 0
  %1572 = vmatpush1.bf16.msra.mxu0 0
  %1573 = vmatprep.subr.bf16.mxu0 0
  %1574 = vmatpush1.bf16.msra.mxu0 0
  %1575 = vmatprep.mubr.bf16.mxu0 0
  %1576 = vmatmul.mubr.bf16.gmra.mrb[0].mxu0 %v1469
  %v1577 = vpop.f32.mrb[0].mxu0
  %v1578 = vadd.f32 %v1493, %v1577
  %v1579 = vpop.f32.mrb[0].mxu0
  %v1580 = vpop.f32.mrb[0].mxu0
  %v1581 = vadd.f32 %v1493, %v1580
  %v1582 = vpop.f32.mrb[0].mxu0
  %1583 = vdwg.mxu0
  %v1584 = vxor.u32 %v1578, 2147483648
  %v1585 = vxor.u32 %v1581, 2147483648
  %v1586 = vmul.f32 %v1584, 1.442695
  %v1587 = vpow.pop %v1586
  %v1588 = vmul.f32 %v1585, 1.442695
  %v1589 = vpow.pop %v1588
  %v1590 = vadd.f32 %v1587, 1.0
  %v1591 = vadd.f32 %v1589, 1.0
  %v1592 = vrcp.pop %v1590
  %v1593 = vmul.f32 1.0, %v1592
  %v1594 = vrcp.pop %v1591
  %v1595 = vmul.f32 1.0, %v1594
  %v1596 = vtanh.pop %v1578
  %v1597 = vtanh.pop %v1581
  %v1598 = vmul.f32 %v1593, %v742
  %v1599 = vmul.f32 %v1595, %v743
  %1602 = vrot.lane.b32.xlu0 %v1596, 64
  %v1603 = vpop.permute.xlu0 %1602
  %1604 = vrot.lane.b32.xlu0 %v1597, 64
  %v1605 = vpop.permute.xlu0 %1604
  %v1608 = vmul.f32 %v1593, %v1603
  %v1609 = vmul.f32 %v1595, %v1605
  %1612 = vrot.lane.b32.xlu0 %v1608, 32
  %v1613 = vpop.permute.xlu0 %1612
  %1614 = vrot.lane.b32.xlu0 %v1609, 32
  %v1615 = vpop.permute.xlu0 %1614
  %v1618 = vadd.f32 %v1598, %v1613
  %v1619 = vadd.f32 %v1599, %v1615
  %v1620 = vtanh.pop %v1618
  %v1621 = vtanh.pop %v1619
  %1624 = vrot.lane.b32.xlu0 %v1620, 64
  %v1625 = vpop.permute.xlu0 %1624
  %1626 = vrot.lane.b32.xlu0 %v1621, 64
  %v1627 = vpop.permute.xlu0 %1626
  %v1630 = vmul.f32 %v1593, %v1625
  %v1631 = vmul.f32 %v1595, %v1627
  %1634 = vrot.lane.b32.xlu0 %v1630, 32
  %v1635 = vpop.permute.xlu0 %1634
  %1636 = vrot.lane.b32.xlu0 %v1631, 32
  %v1637 = vpop.permute.xlu0 %1636
  %1640 = vmatprep.subr.mxu0 0.0
  %1641 = vmatpush1.msra.mxu0 %v1635
  %1642 = vmatprep.subr.mxu0 0.0
  %1643 = vmatpush1.msra.mxu0 %v1637
  %1644 = vmatprep.subr.mxu0 0.0
  %1645 = vmatpush1.msra.mxu0 0.0
  %1646 = vmatprep.subr.mxu0 0.0
  %1647 = vmatpush1.msra.mxu0 0.0
  %1648 = vmatprep.subr.mxu0 0.0
  %1649 = vmatpush1.msra.mxu0 0.0
  %1650 = vmatprep.subr.mxu0 0.0
  %1651 = vmatpush1.msra.mxu0 0.0
  %1652 = vmatprep.subr.mxu0 0.0
  %1653 = vmatpush1.msra.mxu0 0.0
  %1654 = vmatprep.subr.mxu0 0.0
  %1655 = vmatpush1.msra.mxu0 0.0
  %1656 = vmatprep.subr.mxu0 0.0
  %1657 = vmatpush1.msra.mxu0 0.0
  %1658 = vmatprep.subr.mxu0 0.0
  %1659 = vmatpush1.msra.mxu0 0.0
  %1660 = vmatprep.subr.mxu0 0.0
  %1661 = vmatpush1.msra.mxu0 0.0
  %1662 = vmatprep.subr.mxu0 0.0
  %1663 = vmatpush1.msra.mxu0 0.0
  %1664 = vmatprep.subr.mxu0 0.0
  %1665 = vmatpush1.msra.mxu0 0.0
  %1666 = vmatprep.subr.mxu0 0.0
  %1667 = vmatpush1.msra.mxu0 0.0
  %1668 = vmatprep.subr.mxu0 0.0
  %1669 = vmatpush1.msra.mxu0 0.0
  %1670 = vmatprep.subr.mxu0 0.0
  %1671 = vmatpush1.msra.mxu0 0.0
  %1672 = vmatprep.subr.mxu0 0.0
  %1673 = vmatpush1.msra.mxu0 0.0
  %1674 = vmatprep.subr.mxu0 0.0
  %1675 = vmatpush1.msra.mxu0 0.0
  %1676 = vmatprep.subr.mxu0 0.0
  %1677 = vmatpush1.msra.mxu0 0.0
  %1678 = vmatprep.subr.mxu0 0.0
  %1679 = vmatpush1.msra.mxu0 0.0
  %1680 = vmatprep.subr.mxu0 0.0
  %1681 = vmatpush1.msra.mxu0 0.0
  %1682 = vmatprep.subr.mxu0 0.0
  %1683 = vmatpush1.msra.mxu0 0.0
  %1684 = vmatprep.subr.mxu0 0.0
  %1685 = vmatpush1.msra.mxu0 0.0
  %1686 = vmatprep.subr.mxu0 0.0
  %1687 = vmatpush1.msra.mxu0 0.0
  %1688 = vmatprep.subr.mxu0 0.0
  %1689 = vmatpush1.msra.mxu0 0.0
  %1690 = vmatprep.subr.mxu0 0.0
  %1691 = vmatpush1.msra.mxu0 0.0
  %1692 = vmatprep.subr.mxu0 0.0
  %1693 = vmatpush1.msra.mxu0 0.0
  %1694 = vmatprep.subr.mxu0 0.0
  %1695 = vmatpush1.msra.mxu0 0.0
  %1696 = vmatprep.subr.mxu0 0.0
  %1697 = vmatpush1.msra.mxu0 0.0
  %1698 = vmatprep.subr.mxu0 0.0
  %1699 = vmatpush1.msra.mxu0 0.0
  %1700 = vmatprep.subr.mxu0 0.0
  %1701 = vmatpush1.msra.mxu0 0.0
  %1702 = vmatprep.subr.mxu0 0.0
  %1703 = vmatpush1.msra.mxu0 0.0
  %1704 = vmatprep.mubr.f32.mxu0 0.0
  %1705 = vmatmul.mubr.f32.gmra.mrb[0].mxu0 %v765
  %v1706 = vpop.f32.mrb[0].mxu0
  %v1707 = vadd.f32 0.0, %v1706
  %v1708 = vpop.f32.mrb[0].mxu0
  %1709 = vdwg.mxu0
  %v1710 = vmul.f32 %v1707, 0.1
  %s1711 = scalar_lea.vmem %s9, 3
  %v1712 = vld [vmem:[%s1711] sm:$0x1]
  %v1713 = vmul.f32 %v1710, %v1712
  %v1714 = vlaneseq
  %v1715 = vshrl.u32 %v1714, 7
  %v1716 = vsub.s32 0, %v1715
  %v1717 = vrot.slane %v1713, %v1716
  %1719 = vrot.lane.b32.xlu0 %v1717, 96
  %v1720 = vpop.permute.xlu0 %1719
  %v1722 = vsub.f32 %v1630, %v1720
  %v1723 = vsub.f32 %v1631, %v1720
  %v1724 = vmul.f32 %v1722, %v1722
  %v1725 = vmul.f32 %v1723, %v1723
  %1728 = vrot.lane.b32.xlu0 %v1724, 32
  %v1729 = vpop.permute.xlu0 %1728
  %1730 = vrot.lane.b32.xlu0 %v1725, 32
  %v1731 = vpop.permute.xlu0 %1730
  %1734 = vmatprep.subr.mxu0 0.0
  %1735 = vmatpush1.msra.mxu0 %v1729
  %1736 = vmatprep.subr.mxu0 0.0
  %1737 = vmatpush1.msra.mxu0 %v1731
  %1738 = vmatprep.subr.mxu0 0.0
  %1739 = vmatpush1.msra.mxu0 0.0
  %1740 = vmatprep.subr.mxu0 0.0
  %1741 = vmatpush1.msra.mxu0 0.0
  %1742 = vmatprep.subr.mxu0 0.0
  %1743 = vmatpush1.msra.mxu0 0.0
  %1744 = vmatprep.subr.mxu0 0.0
  %1745 = vmatpush1.msra.mxu0 0.0
  %1746 = vmatprep.subr.mxu0 0.0
  %1747 = vmatpush1.msra.mxu0 0.0
  %1748 = vmatprep.subr.mxu0 0.0
  %1749 = vmatpush1.msra.mxu0 0.0
  %1750 = vmatprep.subr.mxu0 0.0
  %1751 = vmatpush1.msra.mxu0 0.0
  %1752 = vmatprep.subr.mxu0 0.0
  %1753 = vmatpush1.msra.mxu0 0.0
  %1754 = vmatprep.subr.mxu0 0.0
  %1755 = vmatpush1.msra.mxu0 0.0
  %1756 = vmatprep.subr.mxu0 0.0
  %1757 = vmatpush1.msra.mxu0 0.0
  %1758 = vmatprep.subr.mxu0 0.0
  %1759 = vmatpush1.msra.mxu0 0.0
  %1760 = vmatprep.subr.mxu0 0.0
  %1761 = vmatpush1.msra.mxu0 0.0
  %1762 = vmatprep.subr.mxu0 0.0
  %1763 = vmatpush1.msra.mxu0 0.0
  %1764 = vmatprep.subr.mxu0 0.0
  %1765 = vmatpush1.msra.mxu0 0.0
  %1766 = vmatprep.subr.mxu0 0.0
  %1767 = vmatpush1.msra.mxu0 0.0
  %1768 = vmatprep.subr.mxu0 0.0
  %1769 = vmatpush1.msra.mxu0 0.0
  %1770 = vmatprep.subr.mxu0 0.0
  %1771 = vmatpush1.msra.mxu0 0.0
  %1772 = vmatprep.subr.mxu0 0.0
  %1773 = vmatpush1.msra.mxu0 0.0
  %1774 = vmatprep.subr.mxu0 0.0
  %1775 = vmatpush1.msra.mxu0 0.0
  %1776 = vmatprep.subr.mxu0 0.0
  %1777 = vmatpush1.msra.mxu0 0.0
  %1778 = vmatprep.subr.mxu0 0.0
  %1779 = vmatpush1.msra.mxu0 0.0
  %1780 = vmatprep.subr.mxu0 0.0
  %1781 = vmatpush1.msra.mxu0 0.0
  %1782 = vmatprep.subr.mxu0 0.0
  %1783 = vmatpush1.msra.mxu0 0.0
  %1784 = vmatprep.subr.mxu0 0.0
  %1785 = vmatpush1.msra.mxu0 0.0
  %1786 = vmatprep.subr.mxu0 0.0
  %1787 = vmatpush1.msra.mxu0 0.0
  %1788 = vmatprep.subr.mxu0 0.0
  %1789 = vmatpush1.msra.mxu0 0.0
  %1790 = vmatprep.subr.mxu0 0.0
  %1791 = vmatpush1.msra.mxu0 0.0
  %1792 = vmatprep.subr.mxu0 0.0
  %1793 = vmatpush1.msra.mxu0 0.0
  %1794 = vmatprep.subr.mxu0 0.0
  %1795 = vmatpush1.msra.mxu0 0.0
  %1796 = vmatprep.subr.mxu0 0.0
  %1797 = vmatpush1.msra.mxu0 0.0
  %1798 = vmatprep.mubr.f32.mxu0 0.0
  %1799 = vmatmul.mubr.f32.gmra.mrb[0].mxu0 %v765
  %v1800 = vpop.f32.mrb[0].mxu0
  %v1801 = vadd.f32 0.0, %v1800
  %v1802 = vpop.f32.mrb[0].mxu0
  %1803 = vdwg.mxu0
  %v1804 = vmul.f32 %v1801, 0.1
  %s1805 = scalar_lea.vmem %s7, 3
  %v1806 = vld [vmem:[%s1805] sm:$0x1]
  %v1808 = vlaneseq
  %v1809 = vshrl.u32 %v1808, 7
  %v1810 = vsub.s32 0, %v1809
  %v1811 = vrot.slane %v1806, %v1810
  %1815 = vrot.lane.b32.xlu0 %v1722, 32
  %v1816 = vpop.permute.xlu0 %1815
  %1817 = vrot.lane.b32.xlu0 %v1723, 32
  %v1818 = vpop.permute.xlu0 %1817
  %v1821 = vmul.f32 %v1811, %v1816
  %v1822 = vmul.f32 %v1811, %v1818
  %v1823 = vadd.f32 %v1804, 1e-05
  %v1824 = vrsqrt.pop %v1823
  %v1825 = vlaneseq
  %v1826 = vshrl.u32 %v1825, 7
  %v1827 = vsub.s32 0, %v1826
  %v1828 = vrot.slane %v1824, %v1827
  %v1829 = vmul.f32 %v1821, %v1828
  %v1830 = vmul.f32 %v1822, %v1828
  %s1831 = scalar_lea.vmem %s8, 3
  %v1832 = vld [vmem:[%s1831] sm:$0x1]
  %v1834 = vlaneseq
  %v1835 = vshrl.u32 %v1834, 7
  %v1836 = vsub.s32 0, %v1835
  %v1837 = vrot.slane %v1832, %v1836
  %v1839 = vadd.f32 %v1829, %v1837
  %v1840 = vadd.f32 %v1830, %v1837
  %v1841 = vpack.c.bf16 %v1406, %v1405
  %v1842 = vld [vmem:[%s10] sm:$0xf]
  %v1843 = vld [vmem:[%s10 + $0x4] sm:$0xf]
  %v1844 = vld [vmem:[%s10 + $0x8] sm:$0xf]
  %v1845 = vld [vmem:[%s10 + $0xc] sm:$0xf]
  %v1846 = vld [vmem:[%s11] sm:$0x1]
  %v1848 = vlaneseq
  %v1849 = vshrl.u32 %v1848, 7
  %v1850 = vsub.s32 0, %v1849
  %v1851 = vrot.slane %v1846, %v1850
  %v1857 = vunpack.c.l.b16 %v1842
  %v1858 = vunpack.c.l.b16 %v1843
  %v1859 = vunpack.c.l.b16 %v1844
  %v1860 = vunpack.c.l.b16 %v1845
  %v1861 = vpack.c.b16 %v1858, %v1857
  %v1862 = vpack.c.b16 %v1860, %v1859
  %v1866 = vsel %vm970, %v1841, 0
  %1868 = vmatprep.subr.bf16.mxu0 0
  %1869 = vmatpush1.bf16.msra.mxu0 %v1861
  %1870 = vmatprep.subr.bf16.mxu0 0
  %1871 = vmatpush1.bf16.msra.mxu0 %v1862
  %1872 = vmatprep.subr.bf16.mxu0 0
  %1873 = vmatpush1.bf16.msra.mxu0 0
  %1874 = vmatprep.subr.bf16.mxu0 0
  %1875 = vmatpush1.bf16.msra.mxu0 0
  %1876 = vmatprep.subr.bf16.mxu0 0
  %1877 = vmatpush1.bf16.msra.mxu0 0
  %1878 = vmatprep.subr.bf16.mxu0 0
  %1879 = vmatpush1.bf16.msra.mxu0 0
  %1880 = vmatprep.subr.bf16.mxu0 0
  %1881 = vmatpush1.bf16.msra.mxu0 0
  %1882 = vmatprep.subr.bf16.mxu0 0
  %1883 = vmatpush1.bf16.msra.mxu0 0
  %1884 = vmatprep.subr.bf16.mxu0 0
  %1885 = vmatpush1.bf16.msra.mxu0 0
  %1886 = vmatprep.subr.bf16.mxu0 0
  %1887 = vmatpush1.bf16.msra.mxu0 0
  %1888 = vmatprep.subr.bf16.mxu0 0
  %1889 = vmatpush1.bf16.msra.mxu0 0
  %1890 = vmatprep.subr.bf16.mxu0 0
  %1891 = vmatpush1.bf16.msra.mxu0 0
  %1892 = vmatprep.subr.bf16.mxu0 0
  %1893 = vmatpush1.bf16.msra.mxu0 0
  %1894 = vmatprep.subr.bf16.mxu0 0
  %1895 = vmatpush1.bf16.msra.mxu0 0
  %1896 = vmatprep.subr.bf16.mxu0 0
  %1897 = vmatpush1.bf16.msra.mxu0 0
  %1898 = vmatprep.subr.bf16.mxu0 0
  %1899 = vmatpush1.bf16.msra.mxu0 0
  %1900 = vmatprep.mubr.bf16.mxu0 0
  %1901 = vmatmul.mubr.bf16.gmra.mrb[0].mxu0 %v1866
  %v1902 = vpop.f32.mrb[0].mxu0
  %v1903 = vadd.f32 %v1851, %v1902
  %v1904 = vpop.f32.mrb[0].mxu0
  %v1905 = vpop.f32.mrb[0].mxu0
  %v1906 = vadd.f32 %v1851, %v1905
  %v1907 = vpop.f32.mrb[0].mxu0
  %1908 = vdwg.mxu0
  %v1909 = vadd.f32 %v1405, %v1903
  %v1910 = vadd.f32 %v1406, %v1906
  %1911 = vst.msk [vmem:[%s12] sm:$0xff] %vm970, %v1909
  %1912 = vst.msk [vmem:[%s12 + $0x8] sm:$0xff] %vm970, %v1910
  %1915 = vrot.lane.b32.xlu0 %v1839, 32
  %v1916 = vpop.permute.xlu0 %1915
  %1917 = vrot.lane.b32.xlu0 %v1840, 32
  %v1918 = vpop.permute.xlu0 %1917
  %vm1921 = vcmask 523520
  %1922 = vst.msk [vmem:[%s12] sm:$0xff] %vm1921, %v1916
  %1923 = vst.msk [vmem:[%s12 + $0x8] sm:$0xff] %vm1921, %v1918
  %1926 = vrot.lane.b32.xlu0 %v1184, 32
  %v1927 = vpop.permute.xlu0 %1926
  %1928 = vrot.lane.b32.xlu0 %v1185, 32
  %v1929 = vpop.permute.xlu0 %1928
  %1932 = vst.msk [vmem:[%s12] sm:$0xff] %vm143, %v1927
  %1933 = vst.msk [vmem:[%s12 + $0x8] sm:$0xff] %vm143, %v1929
  %1936 = vrot.lane.b32.xlu0 %v1618, 64
  %v1937 = vpop.permute.xlu0 %1936
  %1938 = vrot.lane.b32.xlu0 %v1619, 64
  %v1939 = vpop.permute.xlu0 %1938
  %1942 = vst.msk [vmem:[%s12] sm:$0xff] %vm145, %v1937
  %1943 = vst.msk [vmem:[%s12 + $0x8] sm:$0xff] %vm145, %v1939
  %1944 = vst.msk [vmem:[#allocation3] sm:$0xff] %vm970, %v1909
  %1945 = vst.msk [vmem:[#allocation3 + $0x8] sm:$0xff] %vm970, %v1910
  %1946 = vst.msk [vmem:[#allocation4] sm:$0xff] %vm970, %v1839
  %1947 = vst.msk [vmem:[#allocation4 + $0x8] sm:$0xff] %vm970, %v1840
  %1948 = vst.msk [vmem:[#allocation5] sm:$0xff] %vm970, 0.0
  %1949 = vst.msk [vmem:[#allocation5 + $0x8] sm:$0xff] %vm970, 0.0
  %1950 = vst.msk [vmem:[#allocation6] sm:$0xff] %vm970, 0.0
  %1951 = vst.msk [vmem:[#allocation6 + $0x8] sm:$0xff] %vm970, 0.0
  %s1952 = sld [smem:[#allocation8]]
  %s1953 = sld [smem:[#allocation9]]
  %s1954 = scalar_lea.vmem [#allocation3], %s1952
  %v1955 = vld [vmem:[%s1954] sm:$0x1]
  %vm1956 = vcmask 253952
  %1957 = vst.msk [vmem:[#allocation5] sm:$0x1] %vm1956, %v1955
  %s1958 = scalar_lea.vmem [#allocation4], %s1953
  %v1959 = vld [vmem:[%s1958] sm:$0x1]
  %1960 = vst.msk [vmem:[#allocation6] sm:$0x1] %vm1956, %v1959
  %s1961 = sld [smem:[#allocation8 + $0x1]]
  %s1962 = sld [smem:[#allocation9 + $0x1]]
  %s1963 = scalar_lea.vmem [#allocation3], %s1961
  %v1964 = vld [vmem:[%s1963] sm:$0x1]
  %1965 = vst.msk [vmem:[#allocation5 + $0x1] sm:$0x1] %vm1956, %v1964
  %s1966 = scalar_lea.vmem [#allocation4], %s1962
  %v1967 = vld [vmem:[%s1966] sm:$0x1]
  %1968 = vst.msk [vmem:[#allocation6 + $0x1] sm:$0x1] %vm1956, %v1967
  %s1969 = sld [smem:[#allocation8 + $0x2]]
  %s1970 = sld [smem:[#allocation9 + $0x2]]
  %s1971 = scalar_lea.vmem [#allocation3], %s1969
  %v1972 = vld [vmem:[%s1971] sm:$0x1]
  %1973 = vst.msk [vmem:[#allocation5 + $0x2] sm:$0x1] %vm1956, %v1972
  %s1974 = scalar_lea.vmem [#allocation4], %s1970
  %v1975 = vld [vmem:[%s1974] sm:$0x1]
  %1976 = vst.msk [vmem:[#allocation6 + $0x2] sm:$0x1] %vm1956, %v1975
  %s1977 = sld [smem:[#allocation8 + $0x3]]
  %s1978 = sld [smem:[#allocation9 + $0x3]]
  %s1979 = scalar_lea.vmem [#allocation3], %s1977
  %v1980 = vld [vmem:[%s1979] sm:$0x1]
  %1981 = vst.msk [vmem:[#allocation5 + $0x3] sm:$0x1] %vm1956, %v1980
  %s1982 = scalar_lea.vmem [#allocation4], %s1978
  %v1983 = vld [vmem:[%s1982] sm:$0x1]
  %1984 = vst.msk [vmem:[#allocation6 + $0x3] sm:$0x1] %vm1956, %v1983
  %s1985 = sld [smem:[#allocation8 + $0x4]]
  %s1986 = sld [smem:[#allocation9 + $0x4]]
  %s1987 = scalar_lea.vmem [#allocation3], %s1985
  %v1988 = vld [vmem:[%s1987] sm:$0x1]
  %1989 = vst.msk [vmem:[#allocation5 + $0x4] sm:$0x1] %vm1956, %v1988
  %s1990 = scalar_lea.vmem [#allocation4], %s1986
  %v1991 = vld [vmem:[%s1990] sm:$0x1]
  %1992 = vst.msk [vmem:[#allocation6 + $0x4] sm:$0x1] %vm1956, %v1991
  %s1993 = sld [smem:[#allocation8 + $0x5]]
  %s1994 = sld [smem:[#allocation9 + $0x5]]
  %s1995 = scalar_lea.vmem [#allocation3], %s1993
  %v1996 = vld [vmem:[%s1995] sm:$0x1]
  %1997 = vst.msk [vmem:[#allocation5 + $0x5] sm:$0x1] %vm1956, %v1996
  %s1998 = scalar_lea.vmem [#allocation4], %s1994
  %v1999 = vld [vmem:[%s1998] sm:$0x1]
  %2000 = vst.msk [vmem:[#allocation6 + $0x5] sm:$0x1] %vm1956, %v1999
  %s2001 = sld [smem:[#allocation8 + $0x6]]
  %s2002 = sld [smem:[#allocation9 + $0x6]]
  %s2003 = scalar_lea.vmem [#allocation3], %s2001
  %v2004 = vld [vmem:[%s2003] sm:$0x1]
  %2005 = vst.msk [vmem:[#allocation5 + $0x6] sm:$0x1] %vm1956, %v2004
  %s2006 = scalar_lea.vmem [#allocation4], %s2002
  %v2007 = vld [vmem:[%s2006] sm:$0x1]
  %2008 = vst.msk [vmem:[#allocation6 + $0x6] sm:$0x1] %vm1956, %v2007
  %s2009 = sld [smem:[#allocation8 + $0x7]]
  %s2010 = sld [smem:[#allocation9 + $0x7]]
  %s2011 = scalar_lea.vmem [#allocation3], %s2009
  %v2012 = vld [vmem:[%s2011] sm:$0x1]
  %2013 = vst.msk [vmem:[#allocation5 + $0x7] sm:$0x1] %vm1956, %v2012
  %s2014 = scalar_lea.vmem [#allocation4], %s2010
  %v2015 = vld [vmem:[%s2014] sm:$0x1]
  %2016 = vst.msk [vmem:[#allocation6 + $0x7] sm:$0x1] %vm1956, %v2015
  %s2017 = sld [smem:[#allocation8 + $0x8]]
  %s2018 = sld [smem:[#allocation9 + $0x8]]
  %s2019 = scalar_lea.vmem [#allocation3], %s2017
  %v2020 = vld [vmem:[%s2019] sm:$0x1]
  %2021 = vst.msk [vmem:[#allocation5 + $0x8] sm:$0x1] %vm1956, %v2020
  %s2022 = scalar_lea.vmem [#allocation4], %s2018
  %v2023 = vld [vmem:[%s2022] sm:$0x1]
  %2024 = vst.msk [vmem:[#allocation6 + $0x8] sm:$0x1] %vm1956, %v2023
  %s2025 = sld [smem:[#allocation8 + $0x9]]
  %s2026 = sld [smem:[#allocation9 + $0x9]]
  %s2027 = scalar_lea.vmem [#allocation3], %s2025
  %v2028 = vld [vmem:[%s2027] sm:$0x1]
  %2029 = vst.msk [vmem:[#allocation5 + $0x9] sm:$0x1] %vm1956, %v2028
  %s2030 = scalar_lea.vmem [#allocation4], %s2026
  %v2031 = vld [vmem:[%s2030] sm:$0x1]
  %2032 = vst.msk [vmem:[#allocation6 + $0x9] sm:$0x1] %vm1956, %v2031
  %s2033 = sld [smem:[#allocation8 + $0xa]]
  %s2034 = sld [smem:[#allocation9 + $0xa]]
  %s2035 = scalar_lea.vmem [#allocation3], %s2033
  %v2036 = vld [vmem:[%s2035] sm:$0x1]
  %2037 = vst.msk [vmem:[#allocation5 + $0xa] sm:$0x1] %vm1956, %v2036
  %s2038 = scalar_lea.vmem [#allocation4], %s2034
  %v2039 = vld [vmem:[%s2038] sm:$0x1]
  %2040 = vst.msk [vmem:[#allocation6 + $0xa] sm:$0x1] %vm1956, %v2039
  %s2041 = sld [smem:[#allocation8 + $0xb]]
  %s2042 = sld [smem:[#allocation9 + $0xb]]
  %s2043 = scalar_lea.vmem [#allocation3], %s2041
  %v2044 = vld [vmem:[%s2043] sm:$0x1]
  %2045 = vst.msk [vmem:[#allocation5 + $0xb] sm:$0x1] %vm1956, %v2044
  %s2046 = scalar_lea.vmem [#allocation4], %s2042
  %v2047 = vld [vmem:[%s2046] sm:$0x1]
  %2048 = vst.msk [vmem:[#allocation6 + $0xb] sm:$0x1] %vm1956, %v2047
  %v2049 = vld [vmem:[#allocation5] sm:$0xff]
  %v2050 = vld [vmem:[#allocation5 + $0x8] sm:$0xff]
  %v2051 = vld [vmem:[#allocation6] sm:$0xff]
  %v2052 = vld [vmem:[#allocation6 + $0x8] sm:$0xff]
  %v2053 = vmul.f32 %v2049, %v2051
  %v2054 = vmul.f32 %v2050, %v2052
  %v2056 = vsel %vm970, %v2053, 0
  %v2059 = vsel %vm970, %v2054, 0
  %2061 = vmatprep.subr.mxu0 0.0
  %2062 = vmatpush1.msra.mxu0 1.0
  %2063 = vmatprep.subr.mxu0 0.0
  %2064 = vmatpush1.msra.mxu0 1.0
  %2065 = vmatprep.subr.mxu0 0.0
  %2066 = vmatpush1.msra.mxu0 1.0
  %2067 = vmatprep.subr.mxu0 0.0
  %2068 = vmatpush1.msra.mxu0 1.0
  %2069 = vmatprep.subr.mxu0 0.0
  %2070 = vmatpush1.msra.mxu0 0.0
  %2071 = vmatprep.subr.mxu0 0.0
  %2072 = vmatpush1.msra.mxu0 0.0
  %2073 = vmatprep.subr.mxu0 0.0
  %2074 = vmatpush1.msra.mxu0 0.0
  %2075 = vmatprep.subr.mxu0 0.0
  %2076 = vmatpush1.msra.mxu0 0.0
  %2077 = vmatprep.subr.mxu0 0.0
  %2078 = vmatpush1.msra.mxu0 0.0
  %2079 = vmatprep.subr.mxu0 0.0
  %2080 = vmatpush1.msra.mxu0 0.0
  %2081 = vmatprep.subr.mxu0 0.0
  %2082 = vmatpush1.msra.mxu0 0.0
  %2083 = vmatprep.subr.mxu0 0.0
  %2084 = vmatpush1.msra.mxu0 0.0
  %2085 = vmatprep.subr.mxu0 0.0
  %2086 = vmatpush1.msra.mxu0 0.0
  %2087 = vmatprep.subr.mxu0 0.0
  %2088 = vmatpush1.msra.mxu0 0.0
  %2089 = vmatprep.subr.mxu0 0.0
  %2090 = vmatpush1.msra.mxu0 0.0
  %2091 = vmatprep.subr.mxu0 0.0
  %2092 = vmatpush1.msra.mxu0 0.0
  %2093 = vmatprep.subr.mxu0 0.0
  %2094 = vmatpush1.msra.mxu0 0.0
  %2095 = vmatprep.subr.mxu0 0.0
  %2096 = vmatpush1.msra.mxu0 0.0
  %2097 = vmatprep.subr.mxu0 0.0
  %2098 = vmatpush1.msra.mxu0 0.0
  %2099 = vmatprep.subr.mxu0 0.0
  %2100 = vmatpush1.msra.mxu0 0.0
  %2101 = vmatprep.subr.mxu0 0.0
  %2102 = vmatpush1.msra.mxu0 0.0
  %2103 = vmatprep.subr.mxu0 0.0
  %2104 = vmatpush1.msra.mxu0 0.0
  %2105 = vmatprep.subr.mxu0 0.0
  %2106 = vmatpush1.msra.mxu0 0.0
  %2107 = vmatprep.subr.mxu0 0.0
  %2108 = vmatpush1.msra.mxu0 0.0
  %2109 = vmatprep.subr.mxu0 0.0
  %2110 = vmatpush1.msra.mxu0 0.0
  %2111 = vmatprep.subr.mxu0 0.0
  %2112 = vmatpush1.msra.mxu0 0.0
  %2113 = vmatprep.subr.mxu0 0.0
  %2114 = vmatpush1.msra.mxu0 0.0
  %2115 = vmatprep.subr.mxu0 0.0
  %2116 = vmatpush1.msra.mxu0 0.0
  %2117 = vmatprep.subr.mxu0 0.0
  %2118 = vmatpush1.msra.mxu0 0.0
  %2119 = vmatprep.subr.mxu0 0.0
  %2120 = vmatpush1.msra.mxu0 0.0
  %2121 = vmatprep.subr.mxu0 0.0
  %2122 = vmatpush1.msra.mxu0 0.0
  %2123 = vmatprep.subr.mxu0 0.0
  %2124 = vmatpush1.msra.mxu0 0.0
  %2125 = vmatprep.mubr.f32.mxu0 0.0
  %2126 = vmatmul.mubr.f32.gmra.mrb[0].mxu0 %v2056
  %v2127 = vpop.f32.mrb[0].mxu0
  %v2128 = vadd.f32 0.0, %v2127
  %v2129 = vpop.f32.mrb[0].mxu0
  %2130 = vmatprep.mubr.f32.mxu0 0.0
  %2131 = vmatmul.mubr.f32.gmra.mrb[0].mxu0 %v2059
  %v2132 = vpop.f32.mrb[0].mxu0
  %v2133 = vadd.f32 0.0, %v2132
  %v2134 = vpop.f32.mrb[0].mxu0
  %2135 = vdwg.mxu0
  %vm2136 = vcmask 7168
  %2137 = vst.msk [vmem:[%s13] sm:$0xff] %vm2136, %v2128
  %2138 = vst.msk [vmem:[%s13 + $0x8] sm:$0xff] %vm2136, %v2133
  // Predicated region
  $region42: #{tgn_forward.1} parent=0 // pred_check
    _
  $region43: #{tgn_forward.1} parent=0 // pred_check_branch
    %2140 = sbr.rel (0) target = $region45
  $region44: #{tgn_forward.1} parent=0 // pred_region
    _
  $region45: #{tgn_forward.1} parent=0 // pred_fallthru
    _
  // Predicated region
  $region46: #{tgn_forward.1} parent=0 // pred_check
    _
  $region47: #{tgn_forward.1} parent=0 // pred_check_branch
    %2142 = sbr.rel (0) target = $region49
  $region48: #{tgn_forward.1} parent=0 // pred_region
    _
  $region49: #{tgn_forward.1} parent=0 // pred_fallthru
    _
  // Predicated region
  $region50: #{tgn_forward.1} parent=0 // pred_check
    _
  $region51: #{tgn_forward.1} parent=0 // pred_check_branch
    %2144 = sbr.rel (0) target = $region53
  $region52: #{tgn_forward.1} parent=0 // pred_region
    _
  $region53: #{tgn_forward.1} parent=0 // pred_fallthru
    _
  // Predicated region
  $region54: #{tgn_forward.1} parent=0 // pred_check
    _
  $region55: #{tgn_forward.1} parent=0 // pred_check_branch
    %2146 = sbr.rel (0) target = $region57
  $region56: #{tgn_forward.1} parent=0 // pred_region
    _
  $region57: #{tgn_forward.1} parent=0 // pred_fallthru
    _

</llo_original>
